<compile_context>
chip_gen: v7x
topology: tpu7x:2x2x1
jax: 0.10.0
libtpu: 0.0.40
codegen_flags: <defaults>
</compile_context>

<pallas_src>
import jax
import jax.numpy as jnp
from jax.experimental import pallas as pl
from jax.experimental.pallas import tpu as pltpu

K1 = 5    # conv kernel size (both layers)
C1 = 32   # conv1 output channels
C2 = 48   # conv2 output channels


def _fused_kernel(p_ref, w1_ref, b1_ref, w2_ref, b2_ref, out_ref):
    """Whole featureExtractNet forward for one batch element.

    p_ref   : (4, 25, M)   bf16  layer-1 im2col patches; leading axis = conv1
                                 pool parity (a1,b1); rows = (kh1,kw1); columns
                                 ordered (kh2, kw2, a2, b2, i, j).
    w1_ref  : (32, 25)     bf16
    b1_ref  : (32, 1)      f32
    w2_ref  : (25, 48, 32) bf16  one (Cout, Cin) slab per conv2 tap (kh2,kw2)
    b2_ref  : (48, 1)      f32
    out_ref : (48, P)      f32   P = PH2*PW2 final spatial positions
    """
    w1 = w1_ref[...]
    # conv1 as one matmul per pool-parity, 2x2 max-pool fused as a running max.
    z = jnp.dot(w1, p_ref[0], preferred_element_type=jnp.float32)
    for p in range(1, 4):
        z = jnp.maximum(z, jnp.dot(w1, p_ref[p],
                                   preferred_element_type=jnp.float32))
    # bias + ReLU once, after the max (shared bias + monotone relu == pool(relu(conv+b)))
    y1 = jnp.maximum(z + b1_ref[...], 0.0).astype(jnp.bfloat16)      # (32, M)

    npos = out_ref.shape[1]          # PH2 * PW2
    blk = 4 * npos                   # columns per conv2 tap: (a2, b2, i, j)
    acc = jnp.zeros((out_ref.shape[0], blk), jnp.float32)            # (48, blk)
    for kk in range(K1 * K1):        # accumulate conv2 over its 25 taps
        acc = acc + jnp.dot(w2_ref[kk], y1[:, kk * blk:(kk + 1) * blk],
                            preferred_element_type=jnp.float32)
    # conv2 2x2 max-pool = max over the four (a2, b2) column blocks.
    z2 = jnp.maximum(
        jnp.maximum(acc[:, 0:npos], acc[:, npos:2 * npos]),
        jnp.maximum(acc[:, 2 * npos:3 * npos], acc[:, 3 * npos:4 * npos]))
    out_ref[...] = jnp.maximum(z2 + b2_ref[...], 0.0).astype(out_ref.dtype)


def _sizes(H, W):
    OH1, OW1 = (H - K1) // 2 + 1, (W - K1) // 2 + 1
    PH1, PW1 = OH1 // 2, OW1 // 2
    OH2, OW2 = (PH1 - K1) // 2 + 1, (PW1 - K1) // 2 + 1
    PH2, PW2 = OH2 // 2, OW2 // 2
    return OH1, OW1, PH1, PW1, PH2, PW2


def _build_patches(x_nchw):
    """Glue (static slices only, no gathers): (N, 4, 25, 100*PH2*PW2) bf16.

    Column order is (kh2, kw2, a2, b2, i, j): every conv1 pixel that conv2
    needs is materialised (~4x duplication) so conv2's taps are contiguous
    column blocks inside the kernel.
    """
    N, _, H, W = x_nchw.shape
    OH1, OW1, PH1, PW1, PH2, PW2 = _sizes(H, W)
    x = x_nchw[:, 0]                                            # (N, H, W), Cin=1
    # layer-1 im2col: one strided slice per (kh1, kw1) tap
    cols = [x[:, kh:kh + 2 * OH1 - 1:2, kw:kw + 2 * OW1 - 1:2]
            for kh in range(K1) for kw in range(K1)]
    pt = jnp.stack(cols, axis=0)                                # (25, N, OH1, OW1)
    # layer-1 max-pool parity groups
    gs = [pt[:, :, a:2 * PH1:2, b:2 * PW1:2]
          for a in range(2) for b in range(2)]
    g = jnp.stack(gs, axis=0)                                   # (4, 25, N, PH1, PW1)
    # layer-2 im2col + pool parity by duplication:
    #   pooled row needed = 4*i + (2*a2 + kh2); pooled col = 4*j + (2*b2 + kw2)
    hs = [g[:, :, :, 2 * a2 + kh2:2 * a2 + kh2 + 4 * (PH2 - 1) + 1:4, :]
          for kh2 in range(K1) for a2 in range(2)]
    g = jnp.stack(hs, axis=3)                                   # (4,25,N,10,PH2,PW1)
    ws = [g[..., 2 * b2 + kw2:2 * b2 + kw2 + 4 * (PW2 - 1) + 1:4]
          for kw2 in range(K1) for b2 in range(2)]
    g = jnp.stack(ws, axis=5)                                   # (4,25,N,10,PH2,10,PW2)
    g = g.reshape(4, K1 * K1, N, K1, 2, PH2, K1, 2, PW2)
    # -> (n, parity1, k1, kh2, kw2, a2, b2, i, j)
    g = jnp.transpose(g, (2, 0, 1, 3, 6, 4, 7, 5, 8))
    M = K1 * K1 * 4 * PH2 * PW2
    return g.reshape(N, 4, K1 * K1, M).astype(jnp.bfloat16)


def feature_extract_net(x_nchw, params):
    """Pallas implementation of featureExtractNet.forward (NCHW in, NCHW out)."""
    N, _, H, W = x_nchw.shape
    _, _, _, _, PH2, PW2 = _sizes(H, W)
    npos = PH2 * PW2
    Mn = K1 * K1 * 4 * npos

    p1 = _build_patches(x_nchw)                                       # (N,4,25,Mn)
    w1 = params["w1"].reshape(C1, K1 * K1).astype(jnp.bfloat16)       # (32, 25)
    b1 = params["b1"].reshape(C1, 1).astype(jnp.float32)
    w2 = jnp.transpose(params["w2"], (2, 3, 0, 1)).reshape(
        K1 * K1, C2, C1).astype(jnp.bfloat16)                         # (25, 48, 32)
    b2 = params["b2"].reshape(C2, 1).astype(jnp.float32)

    flops = 2 * N * (4 * C1 * K1 * K1 * Mn + K1 * K1 * C2 * C1 * 4 * npos)
    bytes_accessed = (N * 4 * K1 * K1 * Mn * 2 + C1 * K1 * K1 * 2
                      + K1 * K1 * C2 * C1 * 2 + (C1 + C2) * 4
                      + N * C2 * npos * 4)

    out = pl.pallas_call(
        _fused_kernel,
        out_shape=jax.ShapeDtypeStruct((N, C2, npos), jnp.float32),
        grid=(N,),
        in_specs=[
            pl.BlockSpec((None, 4, K1 * K1, Mn), lambda n: (n, 0, 0, 0)),
            pl.BlockSpec((C1, K1 * K1), lambda n: (0, 0)),
            pl.BlockSpec((C1, 1), lambda n: (0, 0)),
            pl.BlockSpec((K1 * K1, C2, C1), lambda n: (0, 0, 0)),
            pl.BlockSpec((C2, 1), lambda n: (0, 0)),
        ],
        out_specs=pl.BlockSpec((None, C2, npos), lambda n: (n, 0, 0)),
        compiler_params=pltpu.CompilerParams(
            dimension_semantics=("parallel",)),   # dual-TC on v7x; harmless on 1-TC chips
        cost_estimate=pl.CostEstimate(flops=flops, transcendentals=0,
                                      bytes_accessed=bytes_accessed),
    )(p1, w1, b1, w2, b2)
    return out.reshape(N, C2, PH2, PW2)


def _reference_forward(x_nchw, params):
    """Pure-JAX reference mirroring the PyTorch forward (for verification)."""
    def conv(x, w, b, stride):
        y = jax.lax.conv_general_dilated(
            x, w, window_strides=(stride, stride), padding="VALID",
            dimension_numbers=("NCHW", "OIHW", "NCHW"))
        return y + b.reshape(1, -1, 1, 1)

    def pool(x):
        return jax.lax.reduce_window(x, -jnp.inf, jax.lax.max,
                                     (1, 1, 2, 2), (1, 1, 2, 2), "VALID")

    x = pool(jax.nn.relu(conv(x_nchw, params["w1"], params["b1"], 2)))
    x = pool(jax.nn.relu(conv(x, params["w2"], params["b2"], 2)))
    return x


def _init_params(key):
    # Deterministic init matching nn.Conv2d default scheme: U(-1/sqrt(fan_in), +).
    k1, k2, k3, k4 = jax.random.split(key, 4)
    bnd1 = 1.0 / ((1 * 5 * 5) ** 0.5)
    bnd2 = 1.0 / ((32 * 5 * 5) ** 0.5)
    return {
        "w1": jax.random.uniform(k1, (32, 1, 5, 5), jnp.float32, -bnd1, bnd1),
        "b1": jax.random.uniform(k2, (32,), jnp.float32, -bnd1, bnd1),
        "w2": jax.random.uniform(k3, (48, 32, 5, 5), jnp.float32, -bnd2, bnd2),
        "b2": jax.random.uniform(k4, (48,), jnp.float32, -bnd2, bnd2),
    }


if __name__ == "__main__":
    key = jax.random.PRNGKey(0)
    pkey, xkey = jax.random.split(key)
    params = _init_params(pkey)
    # N=2, Cin=1 (required by conv1), 64x64 spatial -> output (2, 48, 3, 3)
    x = jax.random.normal(xkey, (2, 1, 64, 64), jnp.float32)

    fwd = jax.jit(feature_extract_net)
    out = jax.block_until_ready(fwd(x, params))
    assert out.shape == (2, 48, 3, 3), out.shape

    ref = jax.block_until_ready(_reference_forward(x, params))
    max_err = float(jnp.max(jnp.abs(out - ref)))
    assert max_err < 1e-2, max_err

    print("KERNEL_OK")
</pallas_src>

<mosaic_0001>
module attributes {stable_mosaic.version = 11 : i64} {
  func.func @_fused_kernel(%arg0: i32, %arg1: memref<1x4x25x900xbf16, #tpu.memory_space<vmem>>, %arg2: memref<32x25xbf16, #tpu.memory_space<vmem>>, %arg3: memref<32x1xf32, #tpu.memory_space<vmem>>, %arg4: memref<25x48x32xbf16, #tpu.memory_space<vmem>>, %arg5: memref<48x1xf32, #tpu.memory_space<vmem>>, %arg6: memref<1x48x9xf32, #tpu.memory_space<vmem>>) attributes {dimension_semantics = [#tpu.dimension_semantics<parallel>], iteration_bounds = array<i64: 2>, scalar_prefetch = 0 : i64, scratch_operands = 0 : i64, tpu.core_type = #tpu.core_type<tc>, window_params = [{transform_indices = @transform_0, window_bounds = array<i64: 1, 4, 25, 900>}, {pipeline_mode = #tpu.pipeline_mode<synchronous>, transform_indices = @transform_1, window_bounds = array<i64: 32, 25>}, {pipeline_mode = #tpu.pipeline_mode<synchronous>, transform_indices = @transform_2, window_bounds = array<i64: 32, 1>}, {pipeline_mode = #tpu.pipeline_mode<synchronous>, transform_indices = @transform_3, window_bounds = array<i64: 25, 48, 32>}, {pipeline_mode = #tpu.pipeline_mode<synchronous>, transform_indices = @transform_4, window_bounds = array<i64: 48, 1>}, {transform_indices = @transform_5, window_bounds = array<i64: 1, 48, 9>}]} {
    %c0 = arith.constant 0 : index
    %c0_0 = arith.constant 0 : index
    %0 = vector.load %arg2[%c0, %c0_0] : memref<32x25xbf16, #tpu.memory_space<vmem>>, vector<32x25xbf16>
    %c0_1 = arith.constant 0 : index
    %c0_2 = arith.constant 0 : index
    %c0_3 = arith.constant 0 : index
    %c0_4 = arith.constant 0 : index
    %1 = vector.load %arg1[%c0_1, %c0_2, %c0_3, %c0_4] : memref<1x4x25x900xbf16, #tpu.memory_space<vmem>>, vector<1x1x25x900xbf16>
    %2 = vector.shape_cast %1 : vector<1x1x25x900xbf16> to vector<25x900xbf16>
    %cst = arith.constant dense<0.000000e+00> : vector<32x900xf32>
    %3 = tpu.matmul %0, %2, %cst {dimension_numbers = #tpu.dot_dimension_numbers<[1], [0], [0], [1], [0, 0, 1, 1], [], []>} : vector<32x25xbf16>, vector<25x900xbf16>, vector<32x900xf32> -> vector<32x900xf32>
    %c0_5 = arith.constant 0 : index
    %c1 = arith.constant 1 : index
    %c0_6 = arith.constant 0 : index
    %c0_7 = arith.constant 0 : index
    %4 = vector.load %arg1[%c0_5, %c1, %c0_6, %c0_7] : memref<1x4x25x900xbf16, #tpu.memory_space<vmem>>, vector<1x1x25x900xbf16>
    %5 = vector.shape_cast %4 : vector<1x1x25x900xbf16> to vector<25x900xbf16>
    %cst_8 = arith.constant dense<0.000000e+00> : vector<32x900xf32>
    %6 = tpu.matmul %0, %5, %cst_8 {dimension_numbers = #tpu.dot_dimension_numbers<[1], [0], [0], [1], [0, 0, 1, 1], [], []>} : vector<32x25xbf16>, vector<25x900xbf16>, vector<32x900xf32> -> vector<32x900xf32>
    %7 = arith.maximumf %3, %6 : vector<32x900xf32>
    %c0_9 = arith.constant 0 : index
    %c2 = arith.constant 2 : index
    %c0_10 = arith.constant 0 : index
    %c0_11 = arith.constant 0 : index
    %8 = vector.load %arg1[%c0_9, %c2, %c0_10, %c0_11] : memref<1x4x25x900xbf16, #tpu.memory_space<vmem>>, vector<1x1x25x900xbf16>
    %9 = vector.shape_cast %8 : vector<1x1x25x900xbf16> to vector<25x900xbf16>
    %cst_12 = arith.constant dense<0.000000e+00> : vector<32x900xf32>
    %10 = tpu.matmul %0, %9, %cst_12 {dimension_numbers = #tpu.dot_dimension_numbers<[1], [0], [0], [1], [0, 0, 1, 1], [], []>} : vector<32x25xbf16>, vector<25x900xbf16>, vector<32x900xf32> -> vector<32x900xf32>
    %11 = arith.maximumf %7, %10 : vector<32x900xf32>
    %c0_13 = arith.constant 0 : index
    %c3 = arith.constant 3 : index
    %c0_14 = arith.constant 0 : index
    %c0_15 = arith.constant 0 : index
    %12 = vector.load %arg1[%c0_13, %c3, %c0_14, %c0_15] : memref<1x4x25x900xbf16, #tpu.memory_space<vmem>>, vector<1x1x25x900xbf16>
    %13 = vector.shape_cast %12 : vector<1x1x25x900xbf16> to vector<25x900xbf16>
    %cst_16 = arith.constant dense<0.000000e+00> : vector<32x900xf32>
    %14 = tpu.matmul %0, %13, %cst_16 {dimension_numbers = #tpu.dot_dimension_numbers<[1], [0], [0], [1], [0, 0, 1, 1], [], []>} : vector<32x25xbf16>, vector<25x900xbf16>, vector<32x900xf32> -> vector<32x900xf32>
    %15 = arith.maximumf %11, %14 : vector<32x900xf32>
    %c0_17 = arith.constant 0 : index
    %c0_18 = arith.constant 0 : index
    %16 = vector.load %arg3[%c0_17, %c0_18] : memref<32x1xf32, #tpu.memory_space<vmem>>, vector<32x1xf32>
    %17 = vector.broadcast %16 : vector<32x1xf32> to vector<32x900xf32>
    %18 = arith.addf %15, %17 : vector<32x900xf32>
    %cst_19 = arith.constant 0.000000e+00 : f32
    %19 = vector.broadcast %cst_19 : f32 to vector<32x900xf32>
    %20 = arith.maximumf %18, %19 : vector<32x900xf32>
    %21 = arith.truncf %20 : vector<32x900xf32> to vector<32x900xbf16>
    %cst_20 = arith.constant 0.000000e+00 : f32
    %22 = vector.broadcast %cst_20 : f32 to vector<48x36xf32>
    %c0_21 = arith.constant 0 : index
    %c0_22 = arith.constant 0 : index
    %c0_23 = arith.constant 0 : index
    %23 = vector.load %arg4[%c0_21, %c0_22, %c0_23] : memref<25x48x32xbf16, #tpu.memory_space<vmem>>, vector<1x48x32xbf16>
    %24 = vector.shape_cast %23 : vector<1x48x32xbf16> to vector<48x32xbf16>
    %25 = vector.extract_strided_slice %21 {offsets = [0, 0], sizes = [32, 36], strides = [1, 1]} : vector<32x900xbf16> to vector<32x36xbf16>
    %cst_24 = arith.constant dense<0.000000e+00> : vector<48x36xf32>
    %26 = tpu.matmul %24, %25, %cst_24 {dimension_numbers = #tpu.dot_dimension_numbers<[1], [0], [0], [1], [0, 0, 1, 1], [], []>} : vector<48x32xbf16>, vector<32x36xbf16>, vector<48x36xf32> -> vector<48x36xf32>
    %27 = arith.addf %22, %26 : vector<48x36xf32>
    %c1_25 = arith.constant 1 : index
    %c0_26 = arith.constant 0 : index
    %c0_27 = arith.constant 0 : index
    %28 = vector.load %arg4[%c1_25, %c0_26, %c0_27] : memref<25x48x32xbf16, #tpu.memory_space<vmem>>, vector<1x48x32xbf16>
    %29 = vector.shape_cast %28 : vector<1x48x32xbf16> to vector<48x32xbf16>
    %30 = vector.extract_strided_slice %21 {offsets = [0, 36], sizes = [32, 36], strides = [1, 1]} : vector<32x900xbf16> to vector<32x36xbf16>
    %cst_28 = arith.constant dense<0.000000e+00> : vector<48x36xf32>
    %31 = tpu.matmul %29, %30, %cst_28 {dimension_numbers = #tpu.dot_dimension_numbers<[1], [0], [0], [1], [0, 0, 1, 1], [], []>} : vector<48x32xbf16>, vector<32x36xbf16>, vector<48x36xf32> -> vector<48x36xf32>
    %32 = arith.addf %27, %31 : vector<48x36xf32>
    %c2_29 = arith.constant 2 : index
    %c0_30 = arith.constant 0 : index
    %c0_31 = arith.constant 0 : index
    %33 = vector.load %arg4[%c2_29, %c0_30, %c0_31] : memref<25x48x32xbf16, #tpu.memory_space<vmem>>, vector<1x48x32xbf16>
    %34 = vector.shape_cast %33 : vector<1x48x32xbf16> to vector<48x32xbf16>
    %35 = vector.extract_strided_slice %21 {offsets = [0, 72], sizes = [32, 36], strides = [1, 1]} : vector<32x900xbf16> to vector<32x36xbf16>
    %cst_32 = arith.constant dense<0.000000e+00> : vector<48x36xf32>
    %36 = tpu.matmul %34, %35, %cst_32 {dimension_numbers = #tpu.dot_dimension_numbers<[1], [0], [0], [1], [0, 0, 1, 1], [], []>} : vector<48x32xbf16>, vector<32x36xbf16>, vector<48x36xf32> -> vector<48x36xf32>
    %37 = arith.addf %32, %36 : vector<48x36xf32>
    %c3_33 = arith.constant 3 : index
    %c0_34 = arith.constant 0 : index
    %c0_35 = arith.constant 0 : index
    %38 = vector.load %arg4[%c3_33, %c0_34, %c0_35] : memref<25x48x32xbf16, #tpu.memory_space<vmem>>, vector<1x48x32xbf16>
    %39 = vector.shape_cast %38 : vector<1x48x32xbf16> to vector<48x32xbf16>
    %40 = vector.extract_strided_slice %21 {offsets = [0, 108], sizes = [32, 36], strides = [1, 1]} : vector<32x900xbf16> to vector<32x36xbf16>
    %cst_36 = arith.constant dense<0.000000e+00> : vector<48x36xf32>
    %41 = tpu.matmul %39, %40, %cst_36 {dimension_numbers = #tpu.dot_dimension_numbers<[1], [0], [0], [1], [0, 0, 1, 1], [], []>} : vector<48x32xbf16>, vector<32x36xbf16>, vector<48x36xf32> -> vector<48x36xf32>
    %42 = arith.addf %37, %41 : vector<48x36xf32>
    %c4 = arith.constant 4 : index
    %c0_37 = arith.constant 0 : index
    %c0_38 = arith.constant 0 : index
    %43 = vector.load %arg4[%c4, %c0_37, %c0_38] : memref<25x48x32xbf16, #tpu.memory_space<vmem>>, vector<1x48x32xbf16>
    %44 = vector.shape_cast %43 : vector<1x48x32xbf16> to vector<48x32xbf16>
    %45 = vector.extract_strided_slice %21 {offsets = [0, 144], sizes = [32, 36], strides = [1, 1]} : vector<32x900xbf16> to vector<32x36xbf16>
    %cst_39 = arith.constant dense<0.000000e+00> : vector<48x36xf32>
    %46 = tpu.matmul %44, %45, %cst_39 {dimension_numbers = #tpu.dot_dimension_numbers<[1], [0], [0], [1], [0, 0, 1, 1], [], []>} : vector<48x32xbf16>, vector<32x36xbf16>, vector<48x36xf32> -> vector<48x36xf32>
    %47 = arith.addf %42, %46 : vector<48x36xf32>
    %c5 = arith.constant 5 : index
    %c0_40 = arith.constant 0 : index
    %c0_41 = arith.constant 0 : index
    %48 = vector.load %arg4[%c5, %c0_40, %c0_41] : memref<25x48x32xbf16, #tpu.memory_space<vmem>>, vector<1x48x32xbf16>
    %49 = vector.shape_cast %48 : vector<1x48x32xbf16> to vector<48x32xbf16>
    %50 = vector.extract_strided_slice %21 {offsets = [0, 180], sizes = [32, 36], strides = [1, 1]} : vector<32x900xbf16> to vector<32x36xbf16>
    %cst_42 = arith.constant dense<0.000000e+00> : vector<48x36xf32>
    %51 = tpu.matmul %49, %50, %cst_42 {dimension_numbers = #tpu.dot_dimension_numbers<[1], [0], [0], [1], [0, 0, 1, 1], [], []>} : vector<48x32xbf16>, vector<32x36xbf16>, vector<48x36xf32> -> vector<48x36xf32>
    %52 = arith.addf %47, %51 : vector<48x36xf32>
    %c6 = arith.constant 6 : index
    %c0_43 = arith.constant 0 : index
    %c0_44 = arith.constant 0 : index
    %53 = vector.load %arg4[%c6, %c0_43, %c0_44] : memref<25x48x32xbf16, #tpu.memory_space<vmem>>, vector<1x48x32xbf16>
    %54 = vector.shape_cast %53 : vector<1x48x32xbf16> to vector<48x32xbf16>
    %55 = vector.extract_strided_slice %21 {offsets = [0, 216], sizes = [32, 36], strides = [1, 1]} : vector<32x900xbf16> to vector<32x36xbf16>
    %cst_45 = arith.constant dense<0.000000e+00> : vector<48x36xf32>
    %56 = tpu.matmul %54, %55, %cst_45 {dimension_numbers = #tpu.dot_dimension_numbers<[1], [0], [0], [1], [0, 0, 1, 1], [], []>} : vector<48x32xbf16>, vector<32x36xbf16>, vector<48x36xf32> -> vector<48x36xf32>
    %57 = arith.addf %52, %56 : vector<48x36xf32>
    %c7 = arith.constant 7 : index
    %c0_46 = arith.constant 0 : index
    %c0_47 = arith.constant 0 : index
    %58 = vector.load %arg4[%c7, %c0_46, %c0_47] : memref<25x48x32xbf16, #tpu.memory_space<vmem>>, vector<1x48x32xbf16>
    %59 = vector.shape_cast %58 : vector<1x48x32xbf16> to vector<48x32xbf16>
    %60 = vector.extract_strided_slice %21 {offsets = [0, 252], sizes = [32, 36], strides = [1, 1]} : vector<32x900xbf16> to vector<32x36xbf16>
    %cst_48 = arith.constant dense<0.000000e+00> : vector<48x36xf32>
    %61 = tpu.matmul %59, %60, %cst_48 {dimension_numbers = #tpu.dot_dimension_numbers<[1], [0], [0], [1], [0, 0, 1, 1], [], []>} : vector<48x32xbf16>, vector<32x36xbf16>, vector<48x36xf32> -> vector<48x36xf32>
    %62 = arith.addf %57, %61 : vector<48x36xf32>
    %c8 = arith.constant 8 : index
    %c0_49 = arith.constant 0 : index
    %c0_50 = arith.constant 0 : index
    %63 = vector.load %arg4[%c8, %c0_49, %c0_50] : memref<25x48x32xbf16, #tpu.memory_space<vmem>>, vector<1x48x32xbf16>
    %64 = vector.shape_cast %63 : vector<1x48x32xbf16> to vector<48x32xbf16>
    %65 = vector.extract_strided_slice %21 {offsets = [0, 288], sizes = [32, 36], strides = [1, 1]} : vector<32x900xbf16> to vector<32x36xbf16>
    %cst_51 = arith.constant dense<0.000000e+00> : vector<48x36xf32>
    %66 = tpu.matmul %64, %65, %cst_51 {dimension_numbers = #tpu.dot_dimension_numbers<[1], [0], [0], [1], [0, 0, 1, 1], [], []>} : vector<48x32xbf16>, vector<32x36xbf16>, vector<48x36xf32> -> vector<48x36xf32>
    %67 = arith.addf %62, %66 : vector<48x36xf32>
    %c9 = arith.constant 9 : index
    %c0_52 = arith.constant 0 : index
    %c0_53 = arith.constant 0 : index
    %68 = vector.load %arg4[%c9, %c0_52, %c0_53] : memref<25x48x32xbf16, #tpu.memory_space<vmem>>, vector<1x48x32xbf16>
    %69 = vector.shape_cast %68 : vector<1x48x32xbf16> to vector<48x32xbf16>
    %70 = vector.extract_strided_slice %21 {offsets = [0, 324], sizes = [32, 36], strides = [1, 1]} : vector<32x900xbf16> to vector<32x36xbf16>
    %cst_54 = arith.constant dense<0.000000e+00> : vector<48x36xf32>
    %71 = tpu.matmul %69, %70, %cst_54 {dimension_numbers = #tpu.dot_dimension_numbers<[1], [0], [0], [1], [0, 0, 1, 1], [], []>} : vector<48x32xbf16>, vector<32x36xbf16>, vector<48x36xf32> -> vector<48x36xf32>
    %72 = arith.addf %67, %71 : vector<48x36xf32>
    %c10 = arith.constant 10 : index
    %c0_55 = arith.constant 0 : index
    %c0_56 = arith.constant 0 : index
    %73 = vector.load %arg4[%c10, %c0_55, %c0_56] : memref<25x48x32xbf16, #tpu.memory_space<vmem>>, vector<1x48x32xbf16>
    %74 = vector.shape_cast %73 : vector<1x48x32xbf16> to vector<48x32xbf16>
    %75 = vector.extract_strided_slice %21 {offsets = [0, 360], sizes = [32, 36], strides = [1, 1]} : vector<32x900xbf16> to vector<32x36xbf16>
    %cst_57 = arith.constant dense<0.000000e+00> : vector<48x36xf32>
    %76 = tpu.matmul %74, %75, %cst_57 {dimension_numbers = #tpu.dot_dimension_numbers<[1], [0], [0], [1], [0, 0, 1, 1], [], []>} : vector<48x32xbf16>, vector<32x36xbf16>, vector<48x36xf32> -> vector<48x36xf32>
    %77 = arith.addf %72, %76 : vector<48x36xf32>
    %c11 = arith.constant 11 : index
    %c0_58 = arith.constant 0 : index
    %c0_59 = arith.constant 0 : index
    %78 = vector.load %arg4[%c11, %c0_58, %c0_59] : memref<25x48x32xbf16, #tpu.memory_space<vmem>>, vector<1x48x32xbf16>
    %79 = vector.shape_cast %78 : vector<1x48x32xbf16> to vector<48x32xbf16>
    %80 = vector.extract_strided_slice %21 {offsets = [0, 396], sizes = [32, 36], strides = [1, 1]} : vector<32x900xbf16> to vector<32x36xbf16>
    %cst_60 = arith.constant dense<0.000000e+00> : vector<48x36xf32>
    %81 = tpu.matmul %79, %80, %cst_60 {dimension_numbers = #tpu.dot_dimension_numbers<[1], [0], [0], [1], [0, 0, 1, 1], [], []>} : vector<48x32xbf16>, vector<32x36xbf16>, vector<48x36xf32> -> vector<48x36xf32>
    %82 = arith.addf %77, %81 : vector<48x36xf32>
    %c12 = arith.constant 12 : index
    %c0_61 = arith.constant 0 : index
    %c0_62 = arith.constant 0 : index
    %83 = vector.load %arg4[%c12, %c0_61, %c0_62] : memref<25x48x32xbf16, #tpu.memory_space<vmem>>, vector<1x48x32xbf16>
    %84 = vector.shape_cast %83 : vector<1x48x32xbf16> to vector<48x32xbf16>
    %85 = vector.extract_strided_slice %21 {offsets = [0, 432], sizes = [32, 36], strides = [1, 1]} : vector<32x900xbf16> to vector<32x36xbf16>
    %cst_63 = arith.constant dense<0.000000e+00> : vector<48x36xf32>
    %86 = tpu.matmul %84, %85, %cst_63 {dimension_numbers = #tpu.dot_dimension_numbers<[1], [0], [0], [1], [0, 0, 1, 1], [], []>} : vector<48x32xbf16>, vector<32x36xbf16>, vector<48x36xf32> -> vector<48x36xf32>
    %87 = arith.addf %82, %86 : vector<48x36xf32>
    %c13 = arith.constant 13 : index
    %c0_64 = arith.constant 0 : index
    %c0_65 = arith.constant 0 : index
    %88 = vector.load %arg4[%c13, %c0_64, %c0_65] : memref<25x48x32xbf16, #tpu.memory_space<vmem>>, vector<1x48x32xbf16>
    %89 = vector.shape_cast %88 : vector<1x48x32xbf16> to vector<48x32xbf16>
    %90 = vector.extract_strided_slice %21 {offsets = [0, 468], sizes = [32, 36], strides = [1, 1]} : vector<32x900xbf16> to vector<32x36xbf16>
    %cst_66 = arith.constant dense<0.000000e+00> : vector<48x36xf32>
    %91 = tpu.matmul %89, %90, %cst_66 {dimension_numbers = #tpu.dot_dimension_numbers<[1], [0], [0], [1], [0, 0, 1, 1], [], []>} : vector<48x32xbf16>, vector<32x36xbf16>, vector<48x36xf32> -> vector<48x36xf32>
    %92 = arith.addf %87, %91 : vector<48x36xf32>
    %c14 = arith.constant 14 : index
    %c0_67 = arith.constant 0 : index
    %c0_68 = arith.constant 0 : index
    %93 = vector.load %arg4[%c14, %c0_67, %c0_68] : memref<25x48x32xbf16, #tpu.memory_space<vmem>>, vector<1x48x32xbf16>
    %94 = vector.shape_cast %93 : vector<1x48x32xbf16> to vector<48x32xbf16>
    %95 = vector.extract_strided_slice %21 {offsets = [0, 504], sizes = [32, 36], strides = [1, 1]} : vector<32x900xbf16> to vector<32x36xbf16>
    %cst_69 = arith.constant dense<0.000000e+00> : vector<48x36xf32>
    %96 = tpu.matmul %94, %95, %cst_69 {dimension_numbers = #tpu.dot_dimension_numbers<[1], [0], [0], [1], [0, 0, 1, 1], [], []>} : vector<48x32xbf16>, vector<32x36xbf16>, vector<48x36xf32> -> vector<48x36xf32>
    %97 = arith.addf %92, %96 : vector<48x36xf32>
    %c15 = arith.constant 15 : index
    %c0_70 = arith.constant 0 : index
    %c0_71 = arith.constant 0 : index
    %98 = vector.load %arg4[%c15, %c0_70, %c0_71] : memref<25x48x32xbf16, #tpu.memory_space<vmem>>, vector<1x48x32xbf16>
    %99 = vector.shape_cast %98 : vector<1x48x32xbf16> to vector<48x32xbf16>
    %100 = vector.extract_strided_slice %21 {offsets = [0, 540], sizes = [32, 36], strides = [1, 1]} : vector<32x900xbf16> to vector<32x36xbf16>
    %cst_72 = arith.constant dense<0.000000e+00> : vector<48x36xf32>
    %101 = tpu.matmul %99, %100, %cst_72 {dimension_numbers = #tpu.dot_dimension_numbers<[1], [0], [0], [1], [0, 0, 1, 1], [], []>} : vector<48x32xbf16>, vector<32x36xbf16>, vector<48x36xf32> -> vector<48x36xf32>
    %102 = arith.addf %97, %101 : vector<48x36xf32>
    %c16 = arith.constant 16 : index
    %c0_73 = arith.constant 0 : index
    %c0_74 = arith.constant 0 : index
    %103 = vector.load %arg4[%c16, %c0_73, %c0_74] : memref<25x48x32xbf16, #tpu.memory_space<vmem>>, vector<1x48x32xbf16>
    %104 = vector.shape_cast %103 : vector<1x48x32xbf16> to vector<48x32xbf16>
    %105 = vector.extract_strided_slice %21 {offsets = [0, 576], sizes = [32, 36], strides = [1, 1]} : vector<32x900xbf16> to vector<32x36xbf16>
    %cst_75 = arith.constant dense<0.000000e+00> : vector<48x36xf32>
    %106 = tpu.matmul %104, %105, %cst_75 {dimension_numbers = #tpu.dot_dimension_numbers<[1], [0], [0], [1], [0, 0, 1, 1], [], []>} : vector<48x32xbf16>, vector<32x36xbf16>, vector<48x36xf32> -> vector<48x36xf32>
    %107 = arith.addf %102, %106 : vector<48x36xf32>
    %c17 = arith.constant 17 : index
    %c0_76 = arith.constant 0 : index
    %c0_77 = arith.constant 0 : index
    %108 = vector.load %arg4[%c17, %c0_76, %c0_77] : memref<25x48x32xbf16, #tpu.memory_space<vmem>>, vector<1x48x32xbf16>
    %109 = vector.shape_cast %108 : vector<1x48x32xbf16> to vector<48x32xbf16>
    %110 = vector.extract_strided_slice %21 {offsets = [0, 612], sizes = [32, 36], strides = [1, 1]} : vector<32x900xbf16> to vector<32x36xbf16>
    %cst_78 = arith.constant dense<0.000000e+00> : vector<48x36xf32>
    %111 = tpu.matmul %109, %110, %cst_78 {dimension_numbers = #tpu.dot_dimension_numbers<[1], [0], [0], [1], [0, 0, 1, 1], [], []>} : vector<48x32xbf16>, vector<32x36xbf16>, vector<48x36xf32> -> vector<48x36xf32>
    %112 = arith.addf %107, %111 : vector<48x36xf32>
    %c18 = arith.constant 18 : index
    %c0_79 = arith.constant 0 : index
    %c0_80 = arith.constant 0 : index
    %113 = vector.load %arg4[%c18, %c0_79, %c0_80] : memref<25x48x32xbf16, #tpu.memory_space<vmem>>, vector<1x48x32xbf16>
    %114 = vector.shape_cast %113 : vector<1x48x32xbf16> to vector<48x32xbf16>
    %115 = vector.extract_strided_slice %21 {offsets = [0, 648], sizes = [32, 36], strides = [1, 1]} : vector<32x900xbf16> to vector<32x36xbf16>
    %cst_81 = arith.constant dense<0.000000e+00> : vector<48x36xf32>
    %116 = tpu.matmul %114, %115, %cst_81 {dimension_numbers = #tpu.dot_dimension_numbers<[1], [0], [0], [1], [0, 0, 1, 1], [], []>} : vector<48x32xbf16>, vector<32x36xbf16>, vector<48x36xf32> -> vector<48x36xf32>
    %117 = arith.addf %112, %116 : vector<48x36xf32>
    %c19 = arith.constant 19 : index
    %c0_82 = arith.constant 0 : index
    %c0_83 = arith.constant 0 : index
    %118 = vector.load %arg4[%c19, %c0_82, %c0_83] : memref<25x48x32xbf16, #tpu.memory_space<vmem>>, vector<1x48x32xbf16>
    %119 = vector.shape_cast %118 : vector<1x48x32xbf16> to vector<48x32xbf16>
    %120 = vector.extract_strided_slice %21 {offsets = [0, 684], sizes = [32, 36], strides = [1, 1]} : vector<32x900xbf16> to vector<32x36xbf16>
    %cst_84 = arith.constant dense<0.000000e+00> : vector<48x36xf32>
    %121 = tpu.matmul %119, %120, %cst_84 {dimension_numbers = #tpu.dot_dimension_numbers<[1], [0], [0], [1], [0, 0, 1, 1], [], []>} : vector<48x32xbf16>, vector<32x36xbf16>, vector<48x36xf32> -> vector<48x36xf32>
    %122 = arith.addf %117, %121 : vector<48x36xf32>
    %c20 = arith.constant 20 : index
    %c0_85 = arith.constant 0 : index
    %c0_86 = arith.constant 0 : index
    %123 = vector.load %arg4[%c20, %c0_85, %c0_86] : memref<25x48x32xbf16, #tpu.memory_space<vmem>>, vector<1x48x32xbf16>
    %124 = vector.shape_cast %123 : vector<1x48x32xbf16> to vector<48x32xbf16>
    %125 = vector.extract_strided_slice %21 {offsets = [0, 720], sizes = [32, 36], strides = [1, 1]} : vector<32x900xbf16> to vector<32x36xbf16>
    %cst_87 = arith.constant dense<0.000000e+00> : vector<48x36xf32>
    %126 = tpu.matmul %124, %125, %cst_87 {dimension_numbers = #tpu.dot_dimension_numbers<[1], [0], [0], [1], [0, 0, 1, 1], [], []>} : vector<48x32xbf16>, vector<32x36xbf16>, vector<48x36xf32> -> vector<48x36xf32>
    %127 = arith.addf %122, %126 : vector<48x36xf32>
    %c21 = arith.constant 21 : index
    %c0_88 = arith.constant 0 : index
    %c0_89 = arith.constant 0 : index
    %128 = vector.load %arg4[%c21, %c0_88, %c0_89] : memref<25x48x32xbf16, #tpu.memory_space<vmem>>, vector<1x48x32xbf16>
    %129 = vector.shape_cast %128 : vector<1x48x32xbf16> to vector<48x32xbf16>
    %130 = vector.extract_strided_slice %21 {offsets = [0, 756], sizes = [32, 36], strides = [1, 1]} : vector<32x900xbf16> to vector<32x36xbf16>
    %cst_90 = arith.constant dense<0.000000e+00> : vector<48x36xf32>
    %131 = tpu.matmul %129, %130, %cst_90 {dimension_numbers = #tpu.dot_dimension_numbers<[1], [0], [0], [1], [0, 0, 1, 1], [], []>} : vector<48x32xbf16>, vector<32x36xbf16>, vector<48x36xf32> -> vector<48x36xf32>
    %132 = arith.addf %127, %131 : vector<48x36xf32>
    %c22 = arith.constant 22 : index
    %c0_91 = arith.constant 0 : index
    %c0_92 = arith.constant 0 : index
    %133 = vector.load %arg4[%c22, %c0_91, %c0_92] : memref<25x48x32xbf16, #tpu.memory_space<vmem>>, vector<1x48x32xbf16>
    %134 = vector.shape_cast %133 : vector<1x48x32xbf16> to vector<48x32xbf16>
    %135 = vector.extract_strided_slice %21 {offsets = [0, 792], sizes = [32, 36], strides = [1, 1]} : vector<32x900xbf16> to vector<32x36xbf16>
    %cst_93 = arith.constant dense<0.000000e+00> : vector<48x36xf32>
    %136 = tpu.matmul %134, %135, %cst_93 {dimension_numbers = #tpu.dot_dimension_numbers<[1], [0], [0], [1], [0, 0, 1, 1], [], []>} : vector<48x32xbf16>, vector<32x36xbf16>, vector<48x36xf32> -> vector<48x36xf32>
    %137 = arith.addf %132, %136 : vector<48x36xf32>
    %c23 = arith.constant 23 : index
    %c0_94 = arith.constant 0 : index
    %c0_95 = arith.constant 0 : index
    %138 = vector.load %arg4[%c23, %c0_94, %c0_95] : memref<25x48x32xbf16, #tpu.memory_space<vmem>>, vector<1x48x32xbf16>
    %139 = vector.shape_cast %138 : vector<1x48x32xbf16> to vector<48x32xbf16>
    %140 = vector.extract_strided_slice %21 {offsets = [0, 828], sizes = [32, 36], strides = [1, 1]} : vector<32x900xbf16> to vector<32x36xbf16>
    %cst_96 = arith.constant dense<0.000000e+00> : vector<48x36xf32>
    %141 = tpu.matmul %139, %140, %cst_96 {dimension_numbers = #tpu.dot_dimension_numbers<[1], [0], [0], [1], [0, 0, 1, 1], [], []>} : vector<48x32xbf16>, vector<32x36xbf16>, vector<48x36xf32> -> vector<48x36xf32>
    %142 = arith.addf %137, %141 : vector<48x36xf32>
    %c24 = arith.constant 24 : index
    %c0_97 = arith.constant 0 : index
    %c0_98 = arith.constant 0 : index
    %143 = vector.load %arg4[%c24, %c0_97, %c0_98] : memref<25x48x32xbf16, #tpu.memory_space<vmem>>, vector<1x48x32xbf16>
    %144 = vector.shape_cast %143 : vector<1x48x32xbf16> to vector<48x32xbf16>
    %145 = vector.extract_strided_slice %21 {offsets = [0, 864], sizes = [32, 36], strides = [1, 1]} : vector<32x900xbf16> to vector<32x36xbf16>
    %cst_99 = arith.constant dense<0.000000e+00> : vector<48x36xf32>
    %146 = tpu.matmul %144, %145, %cst_99 {dimension_numbers = #tpu.dot_dimension_numbers<[1], [0], [0], [1], [0, 0, 1, 1], [], []>} : vector<48x32xbf16>, vector<32x36xbf16>, vector<48x36xf32> -> vector<48x36xf32>
    %147 = arith.addf %142, %146 : vector<48x36xf32>
    %148 = vector.extract_strided_slice %147 {offsets = [0, 0], sizes = [48, 9], strides = [1, 1]} : vector<48x36xf32> to vector<48x9xf32>
    %149 = vector.extract_strided_slice %147 {offsets = [0, 9], sizes = [48, 9], strides = [1, 1]} : vector<48x36xf32> to vector<48x9xf32>
    %150 = arith.maximumf %148, %149 : vector<48x9xf32>
    %151 = vector.extract_strided_slice %147 {offsets = [0, 18], sizes = [48, 9], strides = [1, 1]} : vector<48x36xf32> to vector<48x9xf32>
    %152 = vector.extract_strided_slice %147 {offsets = [0, 27], sizes = [48, 9], strides = [1, 1]} : vector<48x36xf32> to vector<48x9xf32>
    %153 = arith.maximumf %151, %152 : vector<48x9xf32>
    %154 = arith.maximumf %150, %153 : vector<48x9xf32>
    %c0_100 = arith.constant 0 : index
    %c0_101 = arith.constant 0 : index
    %155 = vector.load %arg5[%c0_100, %c0_101] : memref<48x1xf32, #tpu.memory_space<vmem>>, vector<48x1xf32>
    %156 = vector.broadcast %155 : vector<48x1xf32> to vector<48x9xf32>
    %157 = arith.addf %154, %156 : vector<48x9xf32>
    %cst_102 = arith.constant 0.000000e+00 : f32
    %158 = vector.broadcast %cst_102 : f32 to vector<48x9xf32>
    %159 = arith.maximumf %157, %158 : vector<48x9xf32>
    %c0_103 = arith.constant 0 : index
    %c0_104 = arith.constant 0 : index
    %c0_105 = arith.constant 0 : index
    %160 = vector.load %arg6[%c0_103, %c0_104, %c0_105] : memref<1x48x9xf32, #tpu.memory_space<vmem>>, vector<1x48x9xf32>
    %161 = vector.shape_cast %160 : vector<1x48x9xf32> to vector<48x9xf32>
    %162 = vector.shape_cast %159 : vector<48x9xf32> to vector<1x48x9xf32>
    tpu.vector_store %arg6[%c0_103, %c0_104, %c0_105], %162 {strides = array<i32>} : memref<1x48x9xf32, #tpu.memory_space<vmem>>, vector<1x48x9xf32>,
    return
  }
  func.func @transform_0(%arg0: i32) -> (i32, i32, i32, i32) {
    %c0_i32 = arith.constant 0 : i32
    %c0_i32_0 = arith.constant 0 : i32
    %c0_i32_1 = arith.constant 0 : i32
    %c0_i32_2 = arith.constant 0 : i32
    return %arg0, %c0_i32, %c0_i32_0, %c0_i32_1 : i32, i32, i32, i32
  }
  func.func @transform_1(%arg0: i32) -> (i32, i32) {
    %c0_i32 = arith.constant 0 : i32
    %c0_i32_0 = arith.constant 0 : i32
    %c0_i32_1 = arith.constant 0 : i32
    return %c0_i32, %c0_i32_0 : i32, i32
  }
  func.func @transform_2(%arg0: i32) -> (i32, i32) {
    %c0_i32 = arith.constant 0 : i32
    %c0_i32_0 = arith.constant 0 : i32
    %c0_i32_1 = arith.constant 0 : i32
    return %c0_i32, %c0_i32_0 : i32, i32
  }
  func.func @transform_3(%arg0: i32) -> (i32, i32, i32) {
    %c0_i32 = arith.constant 0 : i32
    %c0_i32_0 = arith.constant 0 : i32
    %c0_i32_1 = arith.constant 0 : i32
    %c0_i32_2 = arith.constant 0 : i32
    return %c0_i32, %c0_i32_0, %c0_i32_1 : i32, i32, i32
  }
  func.func @transform_4(%arg0: i32) -> (i32, i32) {
    %c0_i32 = arith.constant 0 : i32
    %c0_i32_0 = arith.constant 0 : i32
    %c0_i32_1 = arith.constant 0 : i32
    return %c0_i32, %c0_i32_0 : i32, i32
  }
  func.func @transform_5(%arg0: i32) -> (i32, i32, i32) {
    %c0_i32 = arith.constant 0 : i32
    %c0_i32_0 = arith.constant 0 : i32
    %c0_i32_1 = arith.constant 0 : i32
    return %arg0, %c0_i32, %c0_i32_0 : i32, i32, i32
  }
}

</mosaic_0001>

<llo_original>
// kernel: feature_extract_net.1
$region0: #{feature_extract_net.1}
  #allocation0 [shape = 'u32[]', space=smem, size = 0x4, offset = 0x4, fixed_abs, tag = 'smem constant byte address 0x4 - core index']
  #allocation1 [shape = 'u32[144,128]{1,0:T(1,128)}', space=vmem, size = 0x12000, scoped, tag = 'internal scratch']
  %s0 = inlined_call_operand.vmem [shape: bf16[2,4,25,900], index: 0, kind: input, shape index: {}]
  %s1 = inlined_call_operand.vmem [shape: bf16[32,25], index: 1, kind: input, shape index: {}]
  %s2 = inlined_call_operand.vmem [shape: f32[32,1], index: 2, kind: input, shape index: {}]
  %s3 = inlined_call_operand.vmem [shape: bf16[25,48,32], index: 3, kind: input, shape index: {}]
  %s4 = inlined_call_operand.vmem [shape: f32[48,1], index: 4, kind: input, shape index: {}]
  %s5 = inlined_call_operand.vmem [shape: f32[2,48,9], index: 5, kind: output, shape index: {}]
  %s6 = sld [smem:[#allocation0]]
  $region53: #{feature_extract_net.1} parent=0
    _
  %s8 = ssub.s32 1, %s6
  %s9 = scalar_select 0, %s8, %s6
  loop: start=0, step=1, limit=4
  $region2: #{feature_extract_net.1} parent=0 // loop_pre_header
    _
  $region3: #{feature_extract_net.1} parent=0 // loop_header
    %s11 = sphi 0, %s15
    %p12 = scmp.ge.s32.totalorder %s11, 4
    %s21 = sphi 0, %s23
    %s24 = sphi 0, %s21
    %s25 = sphi 0, %s24
    %s41 = sphi 0, %s25
    %s45 = sphi 0, %s45
    %s47 = sphi 0, %s45
    %s48 = sphi 0, %s47
    %s62 = sphi 0, %s48
    %s66 = sphi 0, %s66
    %s68 = sphi 0, %s66
    %s69 = sphi 0, %s68
    %s83 = sphi 0, %s69
    %s87 = sphi 0, %s87
    %s89 = sphi 0, %s87
    %s90 = sphi 0, %s89
    %s104 = sphi 0, %s90
    %s108 = sphi 0, %s108
    %s110 = sphi 0, %s108
    %s111 = sphi 0, %s110
    %s125 = sphi 0, %s111
    %s131 = sphi 0, %s133
    %s134 = sphi 0, %s131
    %s135 = sphi 0, %s134
    %s151 = sphi 0, %s135
  $region4: #{feature_extract_net.1} parent=0 // loop_header_branch
    %14 = sbr.rel (%p12) target = $region8
  $region5: #{feature_extract_net.1} parent=0 // loop_body
    %s16 = ssub.s32 %s11, 1
    %s17 = ssub.s32 %s11, 2
    %s18 = sadd.s32 %s11, 1
    %s19 = ssub.s32 %s11, %s18
    %p20 = scmp.eq.s32.totalorder %s19, 0
    %s22 = sadd.s32 %s21, 1
    %s23 = scalar_select %p20, %s21, %s22
    %p26 = pneg %p20
    %p27 = scmp.eq.s32.totalorder %s11, 1
    %p28 = por %p26, %p27
    %p29 = scmp.ne.s32.totalorder %s21, %s24
    %p30 = scmp.eq.s32.totalorder %s11, 0
    %p31 = por %p29, %p30
    %p32 = scmp.ne.s32.totalorder %s21, %s24
    %p33 = scmp.eq.s32.totalorder %s16, 1
    %p34 = por %p32, %p33
    %p35 = scmp.ne.s32.totalorder %s24, %s25
    %p36 = scmp.eq.s32.totalorder %s16, 0
    %p37 = por %p35, %p36
    %p38 = scmp.ne.s32.totalorder %s24, %s25
    %p39 = scmp.eq.s32.totalorder %s17, 1
    %p40 = por %p38, %p39
    %p42 = scmp.ne.s32.totalorder %s25, %s41
    %p43 = scmp.eq.s32.totalorder %s17, 0
    %p44 = por %p42, %p43
    %s46 = sadd.s32 %s45, 1
    %p49 = scmp.eq.s32.totalorder %s11, 1
    %p50 = scmp.ne.s32.totalorder %s45, %s47
    %p51 = scmp.eq.s32.totalorder %s11, 0
    %p52 = por %p50, %p51
    %p53 = scmp.ne.s32.totalorder %s45, %s47
    %p54 = scmp.eq.s32.totalorder %s16, 1
    %p55 = por %p53, %p54
    %p56 = scmp.ne.s32.totalorder %s47, %s48
    %p57 = scmp.eq.s32.totalorder %s16, 0
    %p58 = por %p56, %p57
    %p59 = scmp.ne.s32.totalorder %s47, %s48
    %p60 = scmp.eq.s32.totalorder %s17, 1
    %p61 = por %p59, %p60
    %p63 = scmp.ne.s32.totalorder %s48, %s62
    %p64 = scmp.eq.s32.totalorder %s17, 0
    %p65 = por %p63, %p64
    %s67 = sadd.s32 %s66, 1
    %p70 = scmp.eq.s32.totalorder %s11, 1
    %p71 = scmp.ne.s32.totalorder %s66, %s68
    %p72 = scmp.eq.s32.totalorder %s11, 0
    %p73 = por %p71, %p72
    %p74 = scmp.ne.s32.totalorder %s66, %s68
    %p75 = scmp.eq.s32.totalorder %s16, 1
    %p76 = por %p74, %p75
    %p77 = scmp.ne.s32.totalorder %s68, %s69
    %p78 = scmp.eq.s32.totalorder %s16, 0
    %p79 = por %p77, %p78
    %p80 = scmp.ne.s32.totalorder %s68, %s69
    %p81 = scmp.eq.s32.totalorder %s17, 1
    %p82 = por %p80, %p81
    %p84 = scmp.ne.s32.totalorder %s69, %s83
    %p85 = scmp.eq.s32.totalorder %s17, 0
    %p86 = por %p84, %p85
    %s88 = sadd.s32 %s87, 1
    %p91 = scmp.eq.s32.totalorder %s11, 1
    %p92 = scmp.ne.s32.totalorder %s87, %s89
    %p93 = scmp.eq.s32.totalorder %s11, 0
    %p94 = por %p92, %p93
    %p95 = scmp.ne.s32.totalorder %s87, %s89
    %p96 = scmp.eq.s32.totalorder %s16, 1
    %p97 = por %p95, %p96
    %p98 = scmp.ne.s32.totalorder %s89, %s90
    %p99 = scmp.eq.s32.totalorder %s16, 0
    %p100 = por %p98, %p99
    %p101 = scmp.ne.s32.totalorder %s89, %s90
    %p102 = scmp.eq.s32.totalorder %s17, 1
    %p103 = por %p101, %p102
    %p105 = scmp.ne.s32.totalorder %s90, %s104
    %p106 = scmp.eq.s32.totalorder %s17, 0
    %p107 = por %p105, %p106
    %s109 = sadd.s32 %s108, 1
    %p112 = scmp.eq.s32.totalorder %s11, 1
    %p113 = scmp.ne.s32.totalorder %s108, %s110
    %p114 = scmp.eq.s32.totalorder %s11, 0
    %p115 = por %p113, %p114
    %p116 = scmp.ne.s32.totalorder %s108, %s110
    %p117 = scmp.eq.s32.totalorder %s16, 1
    %p118 = por %p116, %p117
    %p119 = scmp.ne.s32.totalorder %s110, %s111
    %p120 = scmp.eq.s32.totalorder %s16, 0
    %p121 = por %p119, %p120
    %p122 = scmp.ne.s32.totalorder %s110, %s111
    %p123 = scmp.eq.s32.totalorder %s17, 1
    %p124 = por %p122, %p123
    %p126 = scmp.ne.s32.totalorder %s111, %s125
    %p127 = scmp.eq.s32.totalorder %s17, 0
    %p128 = por %p126, %p127
    %s129 = ssub.s32 %s11, %s18
    %p130 = scmp.eq.s32.totalorder %s129, 0
    %s132 = sadd.s32 %s131, 1
    %s133 = scalar_select %p130, %s131, %s132
    %p136 = pneg %p130
    %p137 = scmp.eq.s32.totalorder %s11, 1
    %p138 = por %p136, %p137
    %p139 = scmp.ne.s32.totalorder %s131, %s134
    %p140 = scmp.eq.s32.totalorder %s11, 0
    %p141 = por %p139, %p140
    %p142 = scmp.ne.s32.totalorder %s131, %s134
    %p143 = scmp.eq.s32.totalorder %s16, 1
    %p144 = por %p142, %p143
    %p145 = scmp.ne.s32.totalorder %s134, %s135
    %p146 = scmp.eq.s32.totalorder %s16, 0
    %p147 = por %p145, %p146
    %p148 = scmp.ne.s32.totalorder %s134, %s135
    %p149 = scmp.eq.s32.totalorder %s17, 1
    %p150 = por %p148, %p149
    %p152 = scmp.ne.s32.totalorder %s135, %s151
    %p153 = scmp.eq.s32.totalorder %s17, 0
    %p154 = por %p152, %p153
    %p155 = scmp.le.s32.totalorder 1, %s11
    %p156 = scmp.lt.s32.totalorder %s11, 3
    %p157 = pnand %p155, %p156
    %p158 = pneg %p157
    // Predicated region
    $region9: #{feature_extract_net.1} parent=5 // pred_check
      _
    $region10: #{feature_extract_net.1} parent=5 // pred_check_branch
      %160 = sbr.rel (%p157) target = $region12
    $region11: #{feature_extract_net.1} parent=5 // pred_region
      %s161 = ssub.s32 %s11, 1
      // Predicated region
      $region13: #{feature_extract_net.1} parent=11 // pred_check
        %p162 = pneg %p58
      $region14: #{feature_extract_net.1} parent=11 // pred_check_branch
        %164 = sbr.rel (%p162) target = $region16
      $region15: #{feature_extract_net.1} parent=11 // pred_region
        _
      $region16: #{feature_extract_net.1} parent=11 // pred_fallthru
        _
      // Predicated region
      $region17: #{feature_extract_net.1} parent=11 // pred_check
        %p165 = pneg %p79
      $region18: #{feature_extract_net.1} parent=11 // pred_check_branch
        %167 = sbr.rel (%p165) target = $region20
      $region19: #{feature_extract_net.1} parent=11 // pred_region
        _
      $region20: #{feature_extract_net.1} parent=11 // pred_fallthru
        _
      // Predicated region
      $region21: #{feature_extract_net.1} parent=11 // pred_check
        %p168 = pneg %p100
      $region22: #{feature_extract_net.1} parent=11 // pred_check_branch
        %170 = sbr.rel (%p168) target = $region24
      $region23: #{feature_extract_net.1} parent=11 // pred_region
        _
      $region24: #{feature_extract_net.1} parent=11 // pred_fallthru
        _
      // Predicated region
      $region25: #{feature_extract_net.1} parent=11 // pred_check
        %p171 = pneg %p121
      $region26: #{feature_extract_net.1} parent=11 // pred_check_branch
        %173 = sbr.rel (%p171) target = $region28
      $region27: #{feature_extract_net.1} parent=11 // pred_region
        _
      $region28: #{feature_extract_net.1} parent=11 // pred_fallthru
        _
    $region12: #{feature_extract_net.1} parent=5 // pred_fallthru
      _
    %p174 = scmp.lt.s32.totalorder %s11, 2
    // Predicated region
    $region29: #{feature_extract_net.1} parent=5 // pred_check
      %p175 = pneg %p174
    $region30: #{feature_extract_net.1} parent=5 // pred_check_branch
      %177 = sbr.rel (%p175) target = $region32
    $region31: #{feature_extract_net.1} parent=5 // pred_region
      // Predicated region
      $region33: #{feature_extract_net.1} parent=31 // pred_check
        %p178 = pneg %p31
      $region34: #{feature_extract_net.1} parent=31 // pred_check_branch
        %180 = sbr.rel (%p178) target = $region36
      $region35: #{feature_extract_net.1} parent=31 // pred_region
        %p181 = scmp.lt.s32.totalorder %s11, 1
        %s182 = scalar_select %p181, %s11, 1
        %s183 = smul.addr %s182, 128
        %s184 = smul.addr %s183, 4
        %s185 = scalar_lea.vmem %s0, %s184
      $region36: #{feature_extract_net.1} parent=31 // pred_fallthru
        _
    $region32: #{feature_extract_net.1} parent=5 // pred_fallthru
      _
    %p186 = scmp.le.s32.totalorder 1, %s11
    %p187 = scmp.lt.s32.totalorder %s11, 3
    %p188 = pnand %p186, %p187
    %p189 = pneg %p188
    // Predicated region
    $region37: #{feature_extract_net.1} parent=5 // pred_check
      _
    $region38: #{feature_extract_net.1} parent=5 // pred_check_branch
      %191 = sbr.rel (%p188) target = $region40
    $region39: #{feature_extract_net.1} parent=5 // pred_region
      %s192 = ssub.s32 %s11, 1
      %p193 = scmp.lt.s32.totalorder %s16, 1
      %s194 = scalar_select %p193, %s16, 1
      %s195 = smul.addr %s194, 128
      %s196 = smul.addr %s195, 4
      %s197 = scalar_lea.vmem %s0, %s196
      %p198 = pneg %p37
      %p199 = pneg %p34
      %p200 = pneg %p58
      %p201 = pneg %p55
      %p202 = pneg %p79
      %p203 = pneg %p76
      %p204 = pneg %p100
      %p205 = pneg %p97
      %p206 = pneg %p121
      %p207 = pneg %p118
      %p208 = pneg %p147
      %p209 = pneg %p144
      %p210 = scmp.lt.s32.totalorder %s16, 1
      %s211 = scalar_select %p210, %s16, 1
      %s212 = smul.addr %s211, 6
      %s213 = smul.addr %s212, 8
      %s214 = scalar_lea.vmem %s5, %s213
      %p215 = scmp.lt.s32.totalorder %s16, 1
      %s216 = scalar_select %p215, %s16, 1
      %s217 = smul.addr %s216, 128
      %s218 = smul.addr %s217, 4
      %s219 = scalar_lea.vmem %s0, %s218
      %p220 = scmp.lt.s32.totalorder %s16, 1
      %s221 = scalar_select %p220, %s16, 1
      %s222 = smul.addr %s221, 6
      %s223 = smul.addr %s222, 8
      %s224 = scalar_lea.vmem %s5, %s223
      %v226 = vld [vmem:[%s1] sm:$0xf]
      %v227 = vld [vmem:[%s1 + $0x4] sm:$0xf]
      %v228 = vld [vmem:[%s1 + $0x8] sm:$0xf]
      %v229 = vld [vmem:[%s1 + $0xc] sm:$0xf]
      %v230 = vld [vmem:[%s219] sm:$0xff]
      %v231 = vld [vmem:[%s219 + $0x8] sm:$0xff]
      %v232 = vld [vmem:[%s219 + $0x10] sm:$0xff]
      %v233 = vld [vmem:[%s219 + $0x18] sm:$0xff]
      %v234 = vld [vmem:[%s219 + $0x20] sm:$0xff]
      %v235 = vld [vmem:[%s219 + $0x28] sm:$0xff]
      %v236 = vld [vmem:[%s219 + $0x30] sm:$0xff]
      %v237 = vld [vmem:[%s219 + $0x38] sm:$0xff]
      %v238 = vld [vmem:[%s219 + $0x40] sm:$0xff]
      %v239 = vld [vmem:[%s219 + $0x48] sm:$0xff]
      %v240 = vld [vmem:[%s219 + $0x50] sm:$0xff]
      %v241 = vld [vmem:[%s219 + $0x58] sm:$0xff]
      %v242 = vld [vmem:[%s219 + $0x60] sm:$0x11]
      %v243 = vld [vmem:[%s219 + $0x68] sm:$0x11]
      %v244 = vld [vmem:[%s219 + $0x70] sm:$0x11]
      %v245 = vld [vmem:[%s219 + $0x78] sm:$0x11]
      %v250 = vunpack.c.l.b16 %v226
      %v251 = vunpack.c.l.b16 %v227
      %v252 = vunpack.c.l.b16 %v228
      %v253 = vunpack.c.l.b16 %v229
      %v254 = vpack.c.b16 %v251, %v250
      %v255 = vpack.c.b16 %v253, %v252
      %v272 = vunpack.c.l.b16 %v230
      %v273 = vunpack.c.h.b16 %v230
      %v274 = vunpack.c.l.b16 %v231
      %v275 = vunpack.c.h.b16 %v231
      %v276 = vunpack.c.l.b16 %v232
      %v277 = vunpack.c.h.b16 %v232
      %v278 = vunpack.c.l.b16 %v233
      %v279 = vunpack.c.h.b16 %v233
      %v280 = vunpack.c.l.b16 %v234
      %v281 = vunpack.c.h.b16 %v234
      %v282 = vunpack.c.l.b16 %v235
      %v283 = vunpack.c.h.b16 %v235
      %v284 = vunpack.c.l.b16 %v236
      %v285 = vunpack.c.h.b16 %v236
      %v286 = vunpack.c.l.b16 %v237
      %v287 = vunpack.c.h.b16 %v237
      %v288 = vunpack.c.l.b16 %v238
      %v289 = vunpack.c.h.b16 %v238
      %v290 = vunpack.c.l.b16 %v239
      %v291 = vunpack.c.h.b16 %v239
      %v292 = vunpack.c.l.b16 %v240
      %v293 = vunpack.c.h.b16 %v240
      %v294 = vunpack.c.l.b16 %v241
      %v295 = vunpack.c.h.b16 %v241
      %v296 = vunpack.c.l.b16 %v242
      %v297 = vunpack.c.h.b16 %v242
      %v298 = vunpack.c.l.b16 %v243
      %v299 = vunpack.c.h.b16 %v243
      %v300 = vunpack.c.l.b16 %v244
      %v301 = vunpack.c.h.b16 %v244
      %v302 = vunpack.c.l.b16 %v245
      %v303 = vunpack.c.h.b16 %v245
      %v304 = vpack.c.b16 %v280, %v272
      %v305 = vpack.c.b16 %v281, %v273
      %v306 = vpack.c.b16 %v282, %v274
      %v307 = vpack.c.b16 %v283, %v275
      %v308 = vpack.c.b16 %v284, %v276
      %v309 = vpack.c.b16 %v285, %v277
      %v310 = vpack.c.b16 %v286, %v278
      %v311 = vpack.c.b16 %v287, %v279
      %v312 = vpack.c.b16 %v296, %v288
      %v313 = vpack.c.b16 %v297, %v289
      %v314 = vpack.c.b16 %v298, %v290
      %v315 = vpack.c.b16 %v299, %v291
      %v316 = vpack.c.b16 %v300, %v292
      %v317 = vpack.c.b16 %v301, %v293
      %v318 = vpack.c.b16 %v302, %v294
      %v319 = vpack.c.b16 %v303, %v295
      %vm328 = vcmask 203776
      %v330 = vsel %vm328, %v254, 0
      %v333 = vsel %vm328, %v255, 0
      %vm335 = vcmask 1043456
      %vm336 = vcmask 1044480
      %v337 = vsel %vm335, 4294967295, 65535
      %v338 = vsel %vm336, %v337, 0
      %v340 = vand.u32 %v312, %v338
      %v343 = vand.u32 %v313, %v338
      %v346 = vand.u32 %v314, %v338
      %v349 = vand.u32 %v315, %v338
      %v352 = vand.u32 %v316, %v338
      %v355 = vand.u32 %v317, %v338
      %v358 = vand.u32 %v318, %v338
      %v361 = vand.u32 %v319, %v338
      %363 = vmatprep.subr.bf16.mxu0 %v305
      %364 = vmatpush1.bf16.msra.mxu0 %v304
      %365 = vmatprep.subr.bf16.mxu0 %v343
      %366 = vmatpush1.bf16.msra.mxu0 %v340
      %367 = vmatprep.subr.bf16.mxu0 0
      %368 = vmatpush1.bf16.msra.mxu0 0
      %369 = vmatprep.subr.bf16.mxu0 0
      %370 = vmatpush1.bf16.msra.mxu0 0
      %371 = vmatprep.subr.bf16.mxu0 0
      %372 = vmatpush1.bf16.msra.mxu0 0
      %373 = vmatprep.subr.bf16.mxu0 0
      %374 = vmatpush1.bf16.msra.mxu0 0
      %375 = vmatprep.subr.bf16.mxu0 0
      %376 = vmatpush1.bf16.msra.mxu0 0
      %377 = vmatprep.subr.bf16.mxu0 0
      %378 = vmatpush1.bf16.msra.mxu0 0
      %379 = vmatprep.subr.bf16.mxu0 0
      %380 = vmatpush1.bf16.msra.mxu0 0
      %381 = vmatprep.subr.bf16.mxu0 0
      %382 = vmatpush1.bf16.msra.mxu0 0
      %383 = vmatprep.subr.bf16.mxu0 0
      %384 = vmatpush1.bf16.msra.mxu0 0
      %385 = vmatprep.subr.bf16.mxu0 0
      %386 = vmatpush1.bf16.msra.mxu0 0
      %387 = vmatprep.subr.bf16.mxu0 0
      %388 = vmatpush1.bf16.msra.mxu0 0
      %389 = vmatprep.subr.bf16.mxu0 0
      %390 = vmatpush1.bf16.msra.mxu0 0
      %391 = vmatprep.subr.bf16.mxu0 0
      %392 = vmatpush1.bf16.msra.mxu0 0
      %393 = vmatprep.subr.bf16.mxu0 0
      %394 = vmatpush1.bf16.msra.mxu0 0
      %395 = vmatprep.mubr.bf16.mxu0 0
      %396 = vmatmul.mubr.bf16.gmra.mrb[0].mxu0 %v330
      %v397 = vpop.f32.mrb[0].mxu0
      %v398 = vadd.f32 0.0, %v397
      %v399 = vpop.f32.mrb[0].mxu0
      %v400 = vadd.f32 0.0, %v399
      %v401 = vpop.f32.mrb[0].mxu0
      %v402 = vadd.f32 0.0, %v401
      %v403 = vpop.f32.mrb[0].mxu0
      %v404 = vadd.f32 0.0, %v403
      %405 = vmatprep.mubr.bf16.mxu0 0
      %406 = vmatmul.mubr.bf16.gmra.mrb[0].mxu0 %v333
      %v407 = vpop.f32.mrb[0].mxu0
      %v408 = vadd.f32 0.0, %v407
      %v409 = vpop.f32.mrb[0].mxu0
      %v410 = vadd.f32 0.0, %v409
      %v411 = vpop.f32.mrb[0].mxu0
      %v412 = vadd.f32 0.0, %v411
      %v413 = vpop.f32.mrb[0].mxu0
      %v414 = vadd.f32 0.0, %v413
      %415 = vdwg.mxu0
      %416 = vmatprep.subr.bf16.mxu0 %v307
      %417 = vmatpush1.bf16.msra.mxu0 %v306
      %418 = vmatprep.subr.bf16.mxu0 %v349
      %419 = vmatpush1.bf16.msra.mxu0 %v346
      %420 = vmatprep.subr.bf16.mxu0 0
      %421 = vmatpush1.bf16.msra.mxu0 0
      %422 = vmatprep.subr.bf16.mxu0 0
      %423 = vmatpush1.bf16.msra.mxu0 0
      %424 = vmatprep.subr.bf16.mxu0 0
      %425 = vmatpush1.bf16.msra.mxu0 0
      %426 = vmatprep.subr.bf16.mxu0 0
      %427 = vmatpush1.bf16.msra.mxu0 0
      %428 = vmatprep.subr.bf16.mxu0 0
      %429 = vmatpush1.bf16.msra.mxu0 0
      %430 = vmatprep.subr.bf16.mxu0 0
      %431 = vmatpush1.bf16.msra.mxu0 0
      %432 = vmatprep.subr.bf16.mxu0 0
      %433 = vmatpush1.bf16.msra.mxu0 0
      %434 = vmatprep.subr.bf16.mxu0 0
      %435 = vmatpush1.bf16.msra.mxu0 0
      %436 = vmatprep.subr.bf16.mxu0 0
      %437 = vmatpush1.bf16.msra.mxu0 0
      %438 = vmatprep.subr.bf16.mxu0 0
      %439 = vmatpush1.bf16.msra.mxu0 0
      %440 = vmatprep.subr.bf16.mxu0 0
      %441 = vmatpush1.bf16.msra.mxu0 0
      %442 = vmatprep.subr.bf16.mxu0 0
      %443 = vmatpush1.bf16.msra.mxu0 0
      %444 = vmatprep.subr.bf16.mxu0 0
      %445 = vmatpush1.bf16.msra.mxu0 0
      %446 = vmatprep.subr.bf16.mxu0 0
      %447 = vmatpush1.bf16.msra.mxu0 0
      %448 = vmatprep.mubr.bf16.mxu0 0
      %449 = vmatmul.mubr.bf16.gmra.mrb[0].mxu0 %v330
      %v450 = vpop.f32.mrb[0].mxu0
      %v451 = vadd.f32 0.0, %v450
      %v452 = vpop.f32.mrb[0].mxu0
      %v453 = vadd.f32 0.0, %v452
      %v454 = vpop.f32.mrb[0].mxu0
      %v455 = vadd.f32 0.0, %v454
      %v456 = vpop.f32.mrb[0].mxu0
      %v457 = vadd.f32 0.0, %v456
      %458 = vmatprep.mubr.bf16.mxu0 0
      %459 = vmatmul.mubr.bf16.gmra.mrb[0].mxu0 %v333
      %v460 = vpop.f32.mrb[0].mxu0
      %v461 = vadd.f32 0.0, %v460
      %v462 = vpop.f32.mrb[0].mxu0
      %v463 = vadd.f32 0.0, %v462
      %v464 = vpop.f32.mrb[0].mxu0
      %v465 = vadd.f32 0.0, %v464
      %v466 = vpop.f32.mrb[0].mxu0
      %v467 = vadd.f32 0.0, %v466
      %468 = vdwg.mxu0
      %469 = vmatprep.subr.bf16.mxu0 %v309
      %470 = vmatpush1.bf16.msra.mxu0 %v308
      %471 = vmatprep.subr.bf16.mxu0 %v355
      %472 = vmatpush1.bf16.msra.mxu0 %v352
      %473 = vmatprep.subr.bf16.mxu0 0
      %474 = vmatpush1.bf16.msra.mxu0 0
      %475 = vmatprep.subr.bf16.mxu0 0
      %476 = vmatpush1.bf16.msra.mxu0 0
      %477 = vmatprep.subr.bf16.mxu0 0
      %478 = vmatpush1.bf16.msra.mxu0 0
      %479 = vmatprep.subr.bf16.mxu0 0
      %480 = vmatpush1.bf16.msra.mxu0 0
      %481 = vmatprep.subr.bf16.mxu0 0
      %482 = vmatpush1.bf16.msra.mxu0 0
      %483 = vmatprep.subr.bf16.mxu0 0
      %484 = vmatpush1.bf16.msra.mxu0 0
      %485 = vmatprep.subr.bf16.mxu0 0
      %486 = vmatpush1.bf16.msra.mxu0 0
      %487 = vmatprep.subr.bf16.mxu0 0
      %488 = vmatpush1.bf16.msra.mxu0 0
      %489 = vmatprep.subr.bf16.mxu0 0
      %490 = vmatpush1.bf16.msra.mxu0 0
      %491 = vmatprep.subr.bf16.mxu0 0
      %492 = vmatpush1.bf16.msra.mxu0 0
      %493 = vmatprep.subr.bf16.mxu0 0
      %494 = vmatpush1.bf16.msra.mxu0 0
      %495 = vmatprep.subr.bf16.mxu0 0
      %496 = vmatpush1.bf16.msra.mxu0 0
      %497 = vmatprep.subr.bf16.mxu0 0
      %498 = vmatpush1.bf16.msra.mxu0 0
      %499 = vmatprep.subr.bf16.mxu0 0
      %500 = vmatpush1.bf16.msra.mxu0 0
      %501 = vmatprep.mubr.bf16.mxu0 0
      %502 = vmatmul.mubr.bf16.gmra.mrb[0].mxu0 %v330
      %v503 = vpop.f32.mrb[0].mxu0
      %v504 = vadd.f32 0.0, %v503
      %v505 = vpop.f32.mrb[0].mxu0
      %v506 = vadd.f32 0.0, %v505
      %v507 = vpop.f32.mrb[0].mxu0
      %v508 = vadd.f32 0.0, %v507
      %v509 = vpop.f32.mrb[0].mxu0
      %v510 = vadd.f32 0.0, %v509
      %511 = vmatprep.mubr.bf16.mxu0 0
      %512 = vmatmul.mubr.bf16.gmra.mrb[0].mxu0 %v333
      %v513 = vpop.f32.mrb[0].mxu0
      %v514 = vadd.f32 0.0, %v513
      %v515 = vpop.f32.mrb[0].mxu0
      %v516 = vadd.f32 0.0, %v515
      %v517 = vpop.f32.mrb[0].mxu0
      %v518 = vadd.f32 0.0, %v517
      %v519 = vpop.f32.mrb[0].mxu0
      %v520 = vadd.f32 0.0, %v519
      %521 = vdwg.mxu0
      %522 = vmatprep.subr.bf16.mxu0 %v311
      %523 = vmatpush1.bf16.msra.mxu0 %v310
      %524 = vmatprep.subr.bf16.mxu0 %v361
      %525 = vmatpush1.bf16.msra.mxu0 %v358
      %526 = vmatprep.subr.bf16.mxu0 0
      %527 = vmatpush1.bf16.msra.mxu0 0
      %528 = vmatprep.subr.bf16.mxu0 0
      %529 = vmatpush1.bf16.msra.mxu0 0
      %530 = vmatprep.subr.bf16.mxu0 0
      %531 = vmatpush1.bf16.msra.mxu0 0
      %532 = vmatprep.subr.bf16.mxu0 0
      %533 = vmatpush1.bf16.msra.mxu0 0
      %534 = vmatprep.subr.bf16.mxu0 0
      %535 = vmatpush1.bf16.msra.mxu0 0
      %536 = vmatprep.subr.bf16.mxu0 0
      %537 = vmatpush1.bf16.msra.mxu0 0
      %538 = vmatprep.subr.bf16.mxu0 0
      %539 = vmatpush1.bf16.msra.mxu0 0
      %540 = vmatprep.subr.bf16.mxu0 0
      %541 = vmatpush1.bf16.msra.mxu0 0
      %542 = vmatprep.subr.bf16.mxu0 0
      %543 = vmatpush1.bf16.msra.mxu0 0
      %544 = vmatprep.subr.bf16.mxu0 0
      %545 = vmatpush1.bf16.msra.mxu0 0
      %546 = vmatprep.subr.bf16.mxu0 0
      %547 = vmatpush1.bf16.msra.mxu0 0
      %548 = vmatprep.subr.bf16.mxu0 0
      %549 = vmatpush1.bf16.msra.mxu0 0
      %550 = vmatprep.subr.bf16.mxu0 0
      %551 = vmatpush1.bf16.msra.mxu0 0
      %552 = vmatprep.subr.bf16.mxu0 0
      %553 = vmatpush1.bf16.msra.mxu0 0
      %554 = vmatprep.mubr.bf16.mxu0 0
      %555 = vmatmul.mubr.bf16.gmra.mrb[0].mxu0 %v330
      %v556 = vpop.f32.mrb[0].mxu0
      %v557 = vadd.f32 0.0, %v556
      %v558 = vpop.f32.mrb[0].mxu0
      %v559 = vadd.f32 0.0, %v558
      %v560 = vpop.f32.mrb[0].mxu0
      %v561 = vadd.f32 0.0, %v560
      %v562 = vpop.f32.mrb[0].mxu0
      %v563 = vadd.f32 0.0, %v562
      %564 = vmatprep.mubr.bf16.mxu0 0
      %565 = vmatmul.mubr.bf16.gmra.mrb[0].mxu0 %v333
      %v566 = vpop.f32.mrb[0].mxu0
      %v567 = vadd.f32 0.0, %v566
      %v568 = vpop.f32.mrb[0].mxu0
      %v569 = vadd.f32 0.0, %v568
      %v570 = vpop.f32.mrb[0].mxu0
      %v571 = vadd.f32 0.0, %v570
      %v572 = vpop.f32.mrb[0].mxu0
      %v573 = vadd.f32 0.0, %v572
      %574 = vdwg.mxu0
      %s575 = scalar_lea.vmem %s219, 128
      %v576 = vld [vmem:[%s575] sm:$0xff]
      %v577 = vld [vmem:[%s575 + $0x8] sm:$0xff]
      %v578 = vld [vmem:[%s575 + $0x10] sm:$0xff]
      %v579 = vld [vmem:[%s575 + $0x18] sm:$0xff]
      %v580 = vld [vmem:[%s575 + $0x20] sm:$0xff]
      %v581 = vld [vmem:[%s575 + $0x28] sm:$0xff]
      %v582 = vld [vmem:[%s575 + $0x30] sm:$0xff]
      %v583 = vld [vmem:[%s575 + $0x38] sm:$0xff]
      %v584 = vld [vmem:[%s575 + $0x40] sm:$0xff]
      %v585 = vld [vmem:[%s575 + $0x48] sm:$0xff]
      %v586 = vld [vmem:[%s575 + $0x50] sm:$0xff]
      %v587 = vld [vmem:[%s575 + $0x58] sm:$0xff]
      %v588 = vld [vmem:[%s575 + $0x60] sm:$0x11]
      %v589 = vld [vmem:[%s575 + $0x68] sm:$0x11]
      %v590 = vld [vmem:[%s575 + $0x70] sm:$0x11]
      %v591 = vld [vmem:[%s575 + $0x78] sm:$0x11]
      %v608 = vunpack.c.l.b16 %v576
      %v609 = vunpack.c.h.b16 %v576
      %v610 = vunpack.c.l.b16 %v577
      %v611 = vunpack.c.h.b16 %v577
      %v612 = vunpack.c.l.b16 %v578
      %v613 = vunpack.c.h.b16 %v578
      %v614 = vunpack.c.l.b16 %v579
      %v615 = vunpack.c.h.b16 %v579
      %v616 = vunpack.c.l.b16 %v580
      %v617 = vunpack.c.h.b16 %v580
      %v618 = vunpack.c.l.b16 %v581
      %v619 = vunpack.c.h.b16 %v581
      %v620 = vunpack.c.l.b16 %v582
      %v621 = vunpack.c.h.b16 %v582
      %v622 = vunpack.c.l.b16 %v583
      %v623 = vunpack.c.h.b16 %v583
      %v624 = vunpack.c.l.b16 %v584
      %v625 = vunpack.c.h.b16 %v584
      %v626 = vunpack.c.l.b16 %v585
      %v627 = vunpack.c.h.b16 %v585
      %v628 = vunpack.c.l.b16 %v586
      %v629 = vunpack.c.h.b16 %v586
      %v630 = vunpack.c.l.b16 %v587
      %v631 = vunpack.c.h.b16 %v587
      %v632 = vunpack.c.l.b16 %v588
      %v633 = vunpack.c.h.b16 %v588
      %v634 = vunpack.c.l.b16 %v589
      %v635 = vunpack.c.h.b16 %v589
      %v636 = vunpack.c.l.b16 %v590
      %v637 = vunpack.c.h.b16 %v590
      %v638 = vunpack.c.l.b16 %v591
      %v639 = vunpack.c.h.b16 %v591
      %v640 = vpack.c.b16 %v616, %v608
      %v641 = vpack.c.b16 %v617, %v609
      %v642 = vpack.c.b16 %v618, %v610
      %v643 = vpack.c.b16 %v619, %v611
      %v644 = vpack.c.b16 %v620, %v612
      %v645 = vpack.c.b16 %v621, %v613
      %v646 = vpack.c.b16 %v622, %v614
      %v647 = vpack.c.b16 %v623, %v615
      %v648 = vpack.c.b16 %v632, %v624
      %v649 = vpack.c.b16 %v633, %v625
      %v650 = vpack.c.b16 %v634, %v626
      %v651 = vpack.c.b16 %v635, %v627
      %v652 = vpack.c.b16 %v636, %v628
      %v653 = vpack.c.b16 %v637, %v629
      %v654 = vpack.c.b16 %v638, %v630
      %v655 = vpack.c.b16 %v639, %v631
      %v665 = vand.u32 %v648, %v338
      %v668 = vand.u32 %v649, %v338
      %v671 = vand.u32 %v650, %v338
      %v674 = vand.u32 %v651, %v338
      %v677 = vand.u32 %v652, %v338
      %v680 = vand.u32 %v653, %v338
      %v683 = vand.u32 %v654, %v338
      %v686 = vand.u32 %v655, %v338
      %688 = vmatprep.subr.bf16.mxu0 %v641
      %689 = vmatpush1.bf16.msra.mxu0 %v640
      %690 = vmatprep.subr.bf16.mxu0 %v668
      %691 = vmatpush1.bf16.msra.mxu0 %v665
      %692 = vmatprep.subr.bf16.mxu0 0
      %693 = vmatpush1.bf16.msra.mxu0 0
      %694 = vmatprep.subr.bf16.mxu0 0
      %695 = vmatpush1.bf16.msra.mxu0 0
      %696 = vmatprep.subr.bf16.mxu0 0
      %697 = vmatpush1.bf16.msra.mxu0 0
      %698 = vmatprep.subr.bf16.mxu0 0
      %699 = vmatpush1.bf16.msra.mxu0 0
      %700 = vmatprep.subr.bf16.mxu0 0
      %701 = vmatpush1.bf16.msra.mxu0 0
      %702 = vmatprep.subr.bf16.mxu0 0
      %703 = vmatpush1.bf16.msra.mxu0 0
      %704 = vmatprep.subr.bf16.mxu0 0
      %705 = vmatpush1.bf16.msra.mxu0 0
      %706 = vmatprep.subr.bf16.mxu0 0
      %707 = vmatpush1.bf16.msra.mxu0 0
      %708 = vmatprep.subr.bf16.mxu0 0
      %709 = vmatpush1.bf16.msra.mxu0 0
      %710 = vmatprep.subr.bf16.mxu0 0
      %711 = vmatpush1.bf16.msra.mxu0 0
      %712 = vmatprep.subr.bf16.mxu0 0
      %713 = vmatpush1.bf16.msra.mxu0 0
      %714 = vmatprep.subr.bf16.mxu0 0
      %715 = vmatpush1.bf16.msra.mxu0 0
      %716 = vmatprep.subr.bf16.mxu0 0
      %717 = vmatpush1.bf16.msra.mxu0 0
      %718 = vmatprep.subr.bf16.mxu0 0
      %719 = vmatpush1.bf16.msra.mxu0 0
      %720 = vmatprep.mubr.bf16.mxu0 0
      %721 = vmatmul.mubr.bf16.gmra.mrb[0].mxu0 %v330
      %v722 = vpop.f32.mrb[0].mxu0
      %v723 = vadd.f32 0.0, %v722
      %v724 = vpop.f32.mrb[0].mxu0
      %v725 = vadd.f32 0.0, %v724
      %v726 = vpop.f32.mrb[0].mxu0
      %v727 = vadd.f32 0.0, %v726
      %v728 = vpop.f32.mrb[0].mxu0
      %v729 = vadd.f32 0.0, %v728
      %730 = vmatprep.mubr.bf16.mxu0 0
      %731 = vmatmul.mubr.bf16.gmra.mrb[0].mxu0 %v333
      %v732 = vpop.f32.mrb[0].mxu0
      %v733 = vadd.f32 0.0, %v732
      %v734 = vpop.f32.mrb[0].mxu0
      %v735 = vadd.f32 0.0, %v734
      %v736 = vpop.f32.mrb[0].mxu0
      %v737 = vadd.f32 0.0, %v736
      %v738 = vpop.f32.mrb[0].mxu0
      %v739 = vadd.f32 0.0, %v738
      %740 = vdwg.mxu0
      %741 = vmatprep.subr.bf16.mxu0 %v643
      %742 = vmatpush1.bf16.msra.mxu0 %v642
      %743 = vmatprep.subr.bf16.mxu0 %v674
      %744 = vmatpush1.bf16.msra.mxu0 %v671
      %745 = vmatprep.subr.bf16.mxu0 0
      %746 = vmatpush1.bf16.msra.mxu0 0
      %747 = vmatprep.subr.bf16.mxu0 0
      %748 = vmatpush1.bf16.msra.mxu0 0
      %749 = vmatprep.subr.bf16.mxu0 0
      %750 = vmatpush1.bf16.msra.mxu0 0
      %751 = vmatprep.subr.bf16.mxu0 0
      %752 = vmatpush1.bf16.msra.mxu0 0
      %753 = vmatprep.subr.bf16.mxu0 0
      %754 = vmatpush1.bf16.msra.mxu0 0
      %755 = vmatprep.subr.bf16.mxu0 0
      %756 = vmatpush1.bf16.msra.mxu0 0
      %757 = vmatprep.subr.bf16.mxu0 0
      %758 = vmatpush1.bf16.msra.mxu0 0
      %759 = vmatprep.subr.bf16.mxu0 0
      %760 = vmatpush1.bf16.msra.mxu0 0
      %761 = vmatprep.subr.bf16.mxu0 0
      %762 = vmatpush1.bf16.msra.mxu0 0
      %763 = vmatprep.subr.bf16.mxu0 0
      %764 = vmatpush1.bf16.msra.mxu0 0
      %765 = vmatprep.subr.bf16.mxu0 0
      %766 = vmatpush1.bf16.msra.mxu0 0
      %767 = vmatprep.subr.bf16.mxu0 0
      %768 = vmatpush1.bf16.msra.mxu0 0
      %769 = vmatprep.subr.bf16.mxu0 0
      %770 = vmatpush1.bf16.msra.mxu0 0
      %771 = vmatprep.subr.bf16.mxu0 0
      %772 = vmatpush1.bf16.msra.mxu0 0
      %773 = vmatprep.mubr.bf16.mxu0 0
      %774 = vmatmul.mubr.bf16.gmra.mrb[0].mxu0 %v330
      %v775 = vpop.f32.mrb[0].mxu0
      %v776 = vadd.f32 0.0, %v775
      %v777 = vpop.f32.mrb[0].mxu0
      %v778 = vadd.f32 0.0, %v777
      %v779 = vpop.f32.mrb[0].mxu0
      %v780 = vadd.f32 0.0, %v779
      %v781 = vpop.f32.mrb[0].mxu0
      %v782 = vadd.f32 0.0, %v781
      %783 = vmatprep.mubr.bf16.mxu0 0
      %784 = vmatmul.mubr.bf16.gmra.mrb[0].mxu0 %v333
      %v785 = vpop.f32.mrb[0].mxu0
      %v786 = vadd.f32 0.0, %v785
      %v787 = vpop.f32.mrb[0].mxu0
      %v788 = vadd.f32 0.0, %v787
      %v789 = vpop.f32.mrb[0].mxu0
      %v790 = vadd.f32 0.0, %v789
      %v791 = vpop.f32.mrb[0].mxu0
      %v792 = vadd.f32 0.0, %v791
      %793 = vdwg.mxu0
      %794 = vmatprep.subr.bf16.mxu0 %v645
      %795 = vmatpush1.bf16.msra.mxu0 %v644
      %796 = vmatprep.subr.bf16.mxu0 %v680
      %797 = vmatpush1.bf16.msra.mxu0 %v677
      %798 = vmatprep.subr.bf16.mxu0 0
      %799 = vmatpush1.bf16.msra.mxu0 0
      %800 = vmatprep.subr.bf16.mxu0 0
      %801 = vmatpush1.bf16.msra.mxu0 0
      %802 = vmatprep.subr.bf16.mxu0 0
      %803 = vmatpush1.bf16.msra.mxu0 0
      %804 = vmatprep.subr.bf16.mxu0 0
      %805 = vmatpush1.bf16.msra.mxu0 0
      %806 = vmatprep.subr.bf16.mxu0 0
      %807 = vmatpush1.bf16.msra.mxu0 0
      %808 = vmatprep.subr.bf16.mxu0 0
      %809 = vmatpush1.bf16.msra.mxu0 0
      %810 = vmatprep.subr.bf16.mxu0 0
      %811 = vmatpush1.bf16.msra.mxu0 0
      %812 = vmatprep.subr.bf16.mxu0 0
      %813 = vmatpush1.bf16.msra.mxu0 0
      %814 = vmatprep.subr.bf16.mxu0 0
      %815 = vmatpush1.bf16.msra.mxu0 0
      %816 = vmatprep.subr.bf16.mxu0 0
      %817 = vmatpush1.bf16.msra.mxu0 0
      %818 = vmatprep.subr.bf16.mxu0 0
      %819 = vmatpush1.bf16.msra.mxu0 0
      %820 = vmatprep.subr.bf16.mxu0 0
      %821 = vmatpush1.bf16.msra.mxu0 0
      %822 = vmatprep.subr.bf16.mxu0 0
      %823 = vmatpush1.bf16.msra.mxu0 0
      %824 = vmatprep.subr.bf16.mxu0 0
      %825 = vmatpush1.bf16.msra.mxu0 0
      %826 = vmatprep.mubr.bf16.mxu0 0
      %827 = vmatmul.mubr.bf16.gmra.mrb[0].mxu0 %v330
      %v828 = vpop.f32.mrb[0].mxu0
      %v829 = vadd.f32 0.0, %v828
      %v830 = vpop.f32.mrb[0].mxu0
      %v831 = vadd.f32 0.0, %v830
      %v832 = vpop.f32.mrb[0].mxu0
      %v833 = vadd.f32 0.0, %v832
      %v834 = vpop.f32.mrb[0].mxu0
      %v835 = vadd.f32 0.0, %v834
      %836 = vmatprep.mubr.bf16.mxu0 0
      %837 = vmatmul.mubr.bf16.gmra.mrb[0].mxu0 %v333
      %v838 = vpop.f32.mrb[0].mxu0
      %v839 = vadd.f32 0.0, %v838
      %v840 = vpop.f32.mrb[0].mxu0
      %v841 = vadd.f32 0.0, %v840
      %v842 = vpop.f32.mrb[0].mxu0
      %v843 = vadd.f32 0.0, %v842
      %v844 = vpop.f32.mrb[0].mxu0
      %v845 = vadd.f32 0.0, %v844
      %846 = vdwg.mxu0
      %847 = vmatprep.subr.bf16.mxu0 %v647
      %848 = vmatpush1.bf16.msra.mxu0 %v646
      %849 = vmatprep.subr.bf16.mxu0 %v686
      %850 = vmatpush1.bf16.msra.mxu0 %v683
      %851 = vmatprep.subr.bf16.mxu0 0
      %852 = vmatpush1.bf16.msra.mxu0 0
      %853 = vmatprep.subr.bf16.mxu0 0
      %854 = vmatpush1.bf16.msra.mxu0 0
      %855 = vmatprep.subr.bf16.mxu0 0
      %856 = vmatpush1.bf16.msra.mxu0 0
      %857 = vmatprep.subr.bf16.mxu0 0
      %858 = vmatpush1.bf16.msra.mxu0 0
      %859 = vmatprep.subr.bf16.mxu0 0
      %860 = vmatpush1.bf16.msra.mxu0 0
      %861 = vmatprep.subr.bf16.mxu0 0
      %862 = vmatpush1.bf16.msra.mxu0 0
      %863 = vmatprep.subr.bf16.mxu0 0
      %864 = vmatpush1.bf16.msra.mxu0 0
      %865 = vmatprep.subr.bf16.mxu0 0
      %866 = vmatpush1.bf16.msra.mxu0 0
      %867 = vmatprep.subr.bf16.mxu0 0
      %868 = vmatpush1.bf16.msra.mxu0 0
      %869 = vmatprep.subr.bf16.mxu0 0
      %870 = vmatpush1.bf16.msra.mxu0 0
      %871 = vmatprep.subr.bf16.mxu0 0
      %872 = vmatpush1.bf16.msra.mxu0 0
      %873 = vmatprep.subr.bf16.mxu0 0
      %874 = vmatpush1.bf16.msra.mxu0 0
      %875 = vmatprep.subr.bf16.mxu0 0
      %876 = vmatpush1.bf16.msra.mxu0 0
      %877 = vmatprep.subr.bf16.mxu0 0
      %878 = vmatpush1.bf16.msra.mxu0 0
      %879 = vmatprep.mubr.bf16.mxu0 0
      %880 = vmatmul.mubr.bf16.gmra.mrb[0].mxu0 %v330
      %v881 = vpop.f32.mrb[0].mxu0
      %v882 = vadd.f32 0.0, %v881
      %v883 = vpop.f32.mrb[0].mxu0
      %v884 = vadd.f32 0.0, %v883
      %v885 = vpop.f32.mrb[0].mxu0
      %v886 = vadd.f32 0.0, %v885
      %v887 = vpop.f32.mrb[0].mxu0
      %v888 = vadd.f32 0.0, %v887
      %889 = vmatprep.mubr.bf16.mxu0 0
      %890 = vmatmul.mubr.bf16.gmra.mrb[0].mxu0 %v333
      %v891 = vpop.f32.mrb[0].mxu0
      %v892 = vadd.f32 0.0, %v891
      %v893 = vpop.f32.mrb[0].mxu0
      %v894 = vadd.f32 0.0, %v893
      %v895 = vpop.f32.mrb[0].mxu0
      %v896 = vadd.f32 0.0, %v895
      %v897 = vpop.f32.mrb[0].mxu0
      %v898 = vadd.f32 0.0, %v897
      %899 = vdwg.mxu0
      %v900 = vmax.f32 %v398, %v723
      %v901 = vmax.f32 %v400, %v725
      %v902 = vmax.f32 %v451, %v776
      %v903 = vmax.f32 %v453, %v778
      %v904 = vmax.f32 %v504, %v829
      %v905 = vmax.f32 %v506, %v831
      %v906 = vmax.f32 %v557, %v882
      %v907 = vmax.f32 %v559, %v884
      %v908 = vmax.f32 %v402, %v727
      %v909 = vmax.f32 %v404, %v729
      %v910 = vmax.f32 %v455, %v780
      %v911 = vmax.f32 %v457, %v782
      %v912 = vmax.f32 %v508, %v833
      %v913 = vmax.f32 %v510, %v835
      %v914 = vmax.f32 %v561, %v886
      %v915 = vmax.f32 %v563, %v888
      %v916 = vmax.f32 %v408, %v733
      %v917 = vmax.f32 %v410, %v735
      %v918 = vmax.f32 %v461, %v786
      %v919 = vmax.f32 %v463, %v788
      %v920 = vmax.f32 %v514, %v839
      %v921 = vmax.f32 %v516, %v841
      %v922 = vmax.f32 %v567, %v892
      %v923 = vmax.f32 %v569, %v894
      %v924 = vmax.f32 %v412, %v737
      %v925 = vmax.f32 %v414, %v739
      %v926 = vmax.f32 %v465, %v790
      %v927 = vmax.f32 %v467, %v792
      %v928 = vmax.f32 %v518, %v843
      %v929 = vmax.f32 %v520, %v845
      %v930 = vmax.f32 %v571, %v896
      %v931 = vmax.f32 %v573, %v898
      %s932 = scalar_lea.vmem %s219, 256
      %v933 = vld [vmem:[%s932] sm:$0xff]
      %v934 = vld [vmem:[%s932 + $0x8] sm:$0xff]
      %v935 = vld [vmem:[%s932 + $0x10] sm:$0xff]
      %v936 = vld [vmem:[%s932 + $0x18] sm:$0xff]
      %v937 = vld [vmem:[%s932 + $0x20] sm:$0xff]
      %v938 = vld [vmem:[%s932 + $0x28] sm:$0xff]
      %v939 = vld [vmem:[%s932 + $0x30] sm:$0xff]
      %v940 = vld [vmem:[%s932 + $0x38] sm:$0xff]
      %v941 = vld [vmem:[%s932 + $0x40] sm:$0xff]
      %v942 = vld [vmem:[%s932 + $0x48] sm:$0xff]
      %v943 = vld [vmem:[%s932 + $0x50] sm:$0xff]
      %v944 = vld [vmem:[%s932 + $0x58] sm:$0xff]
      %v945 = vld [vmem:[%s932 + $0x60] sm:$0x11]
      %v946 = vld [vmem:[%s932 + $0x68] sm:$0x11]
      %v947 = vld [vmem:[%s932 + $0x70] sm:$0x11]
      %v948 = vld [vmem:[%s932 + $0x78] sm:$0x11]
      %v965 = vunpack.c.l.b16 %v933
      %v966 = vunpack.c.h.b16 %v933
      %v967 = vunpack.c.l.b16 %v934
      %v968 = vunpack.c.h.b16 %v934
      %v969 = vunpack.c.l.b16 %v935
      %v970 = vunpack.c.h.b16 %v935
      %v971 = vunpack.c.l.b16 %v936
      %v972 = vunpack.c.h.b16 %v936
      %v973 = vunpack.c.l.b16 %v937
      %v974 = vunpack.c.h.b16 %v937
      %v975 = vunpack.c.l.b16 %v938
      %v976 = vunpack.c.h.b16 %v938
      %v977 = vunpack.c.l.b16 %v939
      %v978 = vunpack.c.h.b16 %v939
      %v979 = vunpack.c.l.b16 %v940
      %v980 = vunpack.c.h.b16 %v940
      %v981 = vunpack.c.l.b16 %v941
      %v982 = vunpack.c.h.b16 %v941
      %v983 = vunpack.c.l.b16 %v942
      %v984 = vunpack.c.h.b16 %v942
      %v985 = vunpack.c.l.b16 %v943
      %v986 = vunpack.c.h.b16 %v943
      %v987 = vunpack.c.l.b16 %v944
      %v988 = vunpack.c.h.b16 %v944
      %v989 = vunpack.c.l.b16 %v945
      %v990 = vunpack.c.h.b16 %v945
      %v991 = vunpack.c.l.b16 %v946
      %v992 = vunpack.c.h.b16 %v946
      %v993 = vunpack.c.l.b16 %v947
      %v994 = vunpack.c.h.b16 %v947
      %v995 = vunpack.c.l.b16 %v948
      %v996 = vunpack.c.h.b16 %v948
      %v997 = vpack.c.b16 %v973, %v965
      %v998 = vpack.c.b16 %v974, %v966
      %v999 = vpack.c.b16 %v975, %v967
      %v1000 = vpack.c.b16 %v976, %v968
      %v1001 = vpack.c.b16 %v977, %v969
      %v1002 = vpack.c.b16 %v978, %v970
      %v1003 = vpack.c.b16 %v979, %v971
      %v1004 = vpack.c.b16 %v980, %v972
      %v1005 = vpack.c.b16 %v989, %v981
      %v1006 = vpack.c.b16 %v990, %v982
      %v1007 = vpack.c.b16 %v991, %v983
      %v1008 = vpack.c.b16 %v992, %v984
      %v1009 = vpack.c.b16 %v993, %v985
      %v1010 = vpack.c.b16 %v994, %v986
      %v1011 = vpack.c.b16 %v995, %v987
      %v1012 = vpack.c.b16 %v996, %v988
      %v1022 = vand.u32 %v1005, %v338
      %v1025 = vand.u32 %v1006, %v338
      %v1028 = vand.u32 %v1007, %v338
      %v1031 = vand.u32 %v1008, %v338
      %v1034 = vand.u32 %v1009, %v338
      %v1037 = vand.u32 %v1010, %v338
      %v1040 = vand.u32 %v1011, %v338
      %v1043 = vand.u32 %v1012, %v338
      %1045 = vmatprep.subr.bf16.mxu0 %v998
      %1046 = vmatpush1.bf16.msra.mxu0 %v997
      %1047 = vmatprep.subr.bf16.mxu0 %v1025
      %1048 = vmatpush1.bf16.msra.mxu0 %v1022
      %1049 = vmatprep.subr.bf16.mxu0 0
      %1050 = vmatpush1.bf16.msra.mxu0 0
      %1051 = vmatprep.subr.bf16.mxu0 0
      %1052 = vmatpush1.bf16.msra.mxu0 0
      %1053 = vmatprep.subr.bf16.mxu0 0
      %1054 = vmatpush1.bf16.msra.mxu0 0
      %1055 = vmatprep.subr.bf16.mxu0 0
      %1056 = vmatpush1.bf16.msra.mxu0 0
      %1057 = vmatprep.subr.bf16.mxu0 0
      %1058 = vmatpush1.bf16.msra.mxu0 0
      %1059 = vmatprep.subr.bf16.mxu0 0
      %1060 = vmatpush1.bf16.msra.mxu0 0
      %1061 = vmatprep.subr.bf16.mxu0 0
      %1062 = vmatpush1.bf16.msra.mxu0 0
      %1063 = vmatprep.subr.bf16.mxu0 0
      %1064 = vmatpush1.bf16.msra.mxu0 0
      %1065 = vmatprep.subr.bf16.mxu0 0
      %1066 = vmatpush1.bf16.msra.mxu0 0
      %1067 = vmatprep.subr.bf16.mxu0 0
      %1068 = vmatpush1.bf16.msra.mxu0 0
      %1069 = vmatprep.subr.bf16.mxu0 0
      %1070 = vmatpush1.bf16.msra.mxu0 0
      %1071 = vmatprep.subr.bf16.mxu0 0
      %1072 = vmatpush1.bf16.msra.mxu0 0
      %1073 = vmatprep.subr.bf16.mxu0 0
      %1074 = vmatpush1.bf16.msra.mxu0 0
      %1075 = vmatprep.subr.bf16.mxu0 0
      %1076 = vmatpush1.bf16.msra.mxu0 0
      %1077 = vmatprep.mubr.bf16.mxu0 0
      %1078 = vmatmul.mubr.bf16.gmra.mrb[0].mxu0 %v330
      %v1079 = vpop.f32.mrb[0].mxu0
      %v1080 = vadd.f32 0.0, %v1079
      %v1081 = vpop.f32.mrb[0].mxu0
      %v1082 = vadd.f32 0.0, %v1081
      %v1083 = vpop.f32.mrb[0].mxu0
      %v1084 = vadd.f32 0.0, %v1083
      %v1085 = vpop.f32.mrb[0].mxu0
      %v1086 = vadd.f32 0.0, %v1085
      %1087 = vmatprep.mubr.bf16.mxu0 0
      %1088 = vmatmul.mubr.bf16.gmra.mrb[0].mxu0 %v333
      %v1089 = vpop.f32.mrb[0].mxu0
      %v1090 = vadd.f32 0.0, %v1089
      %v1091 = vpop.f32.mrb[0].mxu0
      %v1092 = vadd.f32 0.0, %v1091
      %v1093 = vpop.f32.mrb[0].mxu0
      %v1094 = vadd.f32 0.0, %v1093
      %v1095 = vpop.f32.mrb[0].mxu0
      %v1096 = vadd.f32 0.0, %v1095
      %1097 = vdwg.mxu0
      %1098 = vmatprep.subr.bf16.mxu0 %v1000
      %1099 = vmatpush1.bf16.msra.mxu0 %v999
      %1100 = vmatprep.subr.bf16.mxu0 %v1031
      %1101 = vmatpush1.bf16.msra.mxu0 %v1028
      %1102 = vmatprep.subr.bf16.mxu0 0
      %1103 = vmatpush1.bf16.msra.mxu0 0
      %1104 = vmatprep.subr.bf16.mxu0 0
      %1105 = vmatpush1.bf16.msra.mxu0 0
      %1106 = vmatprep.subr.bf16.mxu0 0
      %1107 = vmatpush1.bf16.msra.mxu0 0
      %1108 = vmatprep.subr.bf16.mxu0 0
      %1109 = vmatpush1.bf16.msra.mxu0 0
      %1110 = vmatprep.subr.bf16.mxu0 0
      %1111 = vmatpush1.bf16.msra.mxu0 0
      %1112 = vmatprep.subr.bf16.mxu0 0
      %1113 = vmatpush1.bf16.msra.mxu0 0
      %1114 = vmatprep.subr.bf16.mxu0 0
      %1115 = vmatpush1.bf16.msra.mxu0 0
      %1116 = vmatprep.subr.bf16.mxu0 0
      %1117 = vmatpush1.bf16.msra.mxu0 0
      %1118 = vmatprep.subr.bf16.mxu0 0
      %1119 = vmatpush1.bf16.msra.mxu0 0
      %1120 = vmatprep.subr.bf16.mxu0 0
      %1121 = vmatpush1.bf16.msra.mxu0 0
      %1122 = vmatprep.subr.bf16.mxu0 0
      %1123 = vmatpush1.bf16.msra.mxu0 0
      %1124 = vmatprep.subr.bf16.mxu0 0
      %1125 = vmatpush1.bf16.msra.mxu0 0
      %1126 = vmatprep.subr.bf16.mxu0 0
      %1127 = vmatpush1.bf16.msra.mxu0 0
      %1128 = vmatprep.subr.bf16.mxu0 0
      %1129 = vmatpush1.bf16.msra.mxu0 0
      %1130 = vmatprep.mubr.bf16.mxu0 0
      %1131 = vmatmul.mubr.bf16.gmra.mrb[0].mxu0 %v330
      %v1132 = vpop.f32.mrb[0].mxu0
      %v1133 = vadd.f32 0.0, %v1132
      %v1134 = vpop.f32.mrb[0].mxu0
      %v1135 = vadd.f32 0.0, %v1134
      %v1136 = vpop.f32.mrb[0].mxu0
      %v1137 = vadd.f32 0.0, %v1136
      %v1138 = vpop.f32.mrb[0].mxu0
      %v1139 = vadd.f32 0.0, %v1138
      %1140 = vmatprep.mubr.bf16.mxu0 0
      %1141 = vmatmul.mubr.bf16.gmra.mrb[0].mxu0 %v333
      %v1142 = vpop.f32.mrb[0].mxu0
      %v1143 = vadd.f32 0.0, %v1142
      %v1144 = vpop.f32.mrb[0].mxu0
      %v1145 = vadd.f32 0.0, %v1144
      %v1146 = vpop.f32.mrb[0].mxu0
      %v1147 = vadd.f32 0.0, %v1146
      %v1148 = vpop.f32.mrb[0].mxu0
      %v1149 = vadd.f32 0.0, %v1148
      %1150 = vdwg.mxu0
      %1151 = vmatprep.subr.bf16.mxu0 %v1002
      %1152 = vmatpush1.bf16.msra.mxu0 %v1001
      %1153 = vmatprep.subr.bf16.mxu0 %v1037
      %1154 = vmatpush1.bf16.msra.mxu0 %v1034
      %1155 = vmatprep.subr.bf16.mxu0 0
      %1156 = vmatpush1.bf16.msra.mxu0 0
      %1157 = vmatprep.subr.bf16.mxu0 0
      %1158 = vmatpush1.bf16.msra.mxu0 0
      %1159 = vmatprep.subr.bf16.mxu0 0
      %1160 = vmatpush1.bf16.msra.mxu0 0
      %1161 = vmatprep.subr.bf16.mxu0 0
      %1162 = vmatpush1.bf16.msra.mxu0 0
      %1163 = vmatprep.subr.bf16.mxu0 0
      %1164 = vmatpush1.bf16.msra.mxu0 0
      %1165 = vmatprep.subr.bf16.mxu0 0
      %1166 = vmatpush1.bf16.msra.mxu0 0
      %1167 = vmatprep.subr.bf16.mxu0 0
      %1168 = vmatpush1.bf16.msra.mxu0 0
      %1169 = vmatprep.subr.bf16.mxu0 0
      %1170 = vmatpush1.bf16.msra.mxu0 0
      %1171 = vmatprep.subr.bf16.mxu0 0
      %1172 = vmatpush1.bf16.msra.mxu0 0
      %1173 = vmatprep.subr.bf16.mxu0 0
      %1174 = vmatpush1.bf16.msra.mxu0 0
      %1175 = vmatprep.subr.bf16.mxu0 0
      %1176 = vmatpush1.bf16.msra.mxu0 0
      %1177 = vmatprep.subr.bf16.mxu0 0
      %1178 = vmatpush1.bf16.msra.mxu0 0
      %1179 = vmatprep.subr.bf16.mxu0 0
      %1180 = vmatpush1.bf16.msra.mxu0 0
      %1181 = vmatprep.subr.bf16.mxu0 0
      %1182 = vmatpush1.bf16.msra.mxu0 0
      %1183 = vmatprep.mubr.bf16.mxu0 0
      %1184 = vmatmul.mubr.bf16.gmra.mrb[0].mxu0 %v330
      %v1185 = vpop.f32.mrb[0].mxu0
      %v1186 = vadd.f32 0.0, %v1185
      %v1187 = vpop.f32.mrb[0].mxu0
      %v1188 = vadd.f32 0.0, %v1187
      %v1189 = vpop.f32.mrb[0].mxu0
      %v1190 = vadd.f32 0.0, %v1189
      %v1191 = vpop.f32.mrb[0].mxu0
      %v1192 = vadd.f32 0.0, %v1191
      %1193 = vmatprep.mubr.bf16.mxu0 0
      %1194 = vmatmul.mubr.bf16.gmra.mrb[0].mxu0 %v333
      %v1195 = vpop.f32.mrb[0].mxu0
      %v1196 = vadd.f32 0.0, %v1195
      %v1197 = vpop.f32.mrb[0].mxu0
      %v1198 = vadd.f32 0.0, %v1197
      %v1199 = vpop.f32.mrb[0].mxu0
      %v1200 = vadd.f32 0.0, %v1199
      %v1201 = vpop.f32.mrb[0].mxu0
      %v1202 = vadd.f32 0.0, %v1201
      %1203 = vdwg.mxu0
      %1204 = vmatprep.subr.bf16.mxu0 %v1004
      %1205 = vmatpush1.bf16.msra.mxu0 %v1003
      %1206 = vmatprep.subr.bf16.mxu0 %v1043
      %1207 = vmatpush1.bf16.msra.mxu0 %v1040
      %1208 = vmatprep.subr.bf16.mxu0 0
      %1209 = vmatpush1.bf16.msra.mxu0 0
      %1210 = vmatprep.subr.bf16.mxu0 0
      %1211 = vmatpush1.bf16.msra.mxu0 0
      %1212 = vmatprep.subr.bf16.mxu0 0
      %1213 = vmatpush1.bf16.msra.mxu0 0
      %1214 = vmatprep.subr.bf16.mxu0 0
      %1215 = vmatpush1.bf16.msra.mxu0 0
      %1216 = vmatprep.subr.bf16.mxu0 0
      %1217 = vmatpush1.bf16.msra.mxu0 0
      %1218 = vmatprep.subr.bf16.mxu0 0
      %1219 = vmatpush1.bf16.msra.mxu0 0
      %1220 = vmatprep.subr.bf16.mxu0 0
      %1221 = vmatpush1.bf16.msra.mxu0 0
      %1222 = vmatprep.subr.bf16.mxu0 0
      %1223 = vmatpush1.bf16.msra.mxu0 0
      %1224 = vmatprep.subr.bf16.mxu0 0
      %1225 = vmatpush1.bf16.msra.mxu0 0
      %1226 = vmatprep.subr.bf16.mxu0 0
      %1227 = vmatpush1.bf16.msra.mxu0 0
      %1228 = vmatprep.subr.bf16.mxu0 0
      %1229 = vmatpush1.bf16.msra.mxu0 0
      %1230 = vmatprep.subr.bf16.mxu0 0
      %1231 = vmatpush1.bf16.msra.mxu0 0
      %1232 = vmatprep.subr.bf16.mxu0 0
      %1233 = vmatpush1.bf16.msra.mxu0 0
      %1234 = vmatprep.subr.bf16.mxu0 0
      %1235 = vmatpush1.bf16.msra.mxu0 0
      %1236 = vmatprep.mubr.bf16.mxu0 0
      %1237 = vmatmul.mubr.bf16.gmra.mrb[0].mxu0 %v330
      %v1238 = vpop.f32.mrb[0].mxu0
      %v1239 = vadd.f32 0.0, %v1238
      %v1240 = vpop.f32.mrb[0].mxu0
      %v1241 = vadd.f32 0.0, %v1240
      %v1242 = vpop.f32.mrb[0].mxu0
      %v1243 = vadd.f32 0.0, %v1242
      %v1244 = vpop.f32.mrb[0].mxu0
      %v1245 = vadd.f32 0.0, %v1244
      %1246 = vmatprep.mubr.bf16.mxu0 0
      %1247 = vmatmul.mubr.bf16.gmra.mrb[0].mxu0 %v333
      %v1248 = vpop.f32.mrb[0].mxu0
      %v1249 = vadd.f32 0.0, %v1248
      %v1250 = vpop.f32.mrb[0].mxu0
      %v1251 = vadd.f32 0.0, %v1250
      %v1252 = vpop.f32.mrb[0].mxu0
      %v1253 = vadd.f32 0.0, %v1252
      %v1254 = vpop.f32.mrb[0].mxu0
      %v1255 = vadd.f32 0.0, %v1254
      %1256 = vdwg.mxu0
      %v1257 = vmax.f32 %v900, %v1080
      %v1258 = vmax.f32 %v901, %v1082
      %v1259 = vmax.f32 %v902, %v1133
      %v1260 = vmax.f32 %v903, %v1135
      %v1261 = vmax.f32 %v904, %v1186
      %v1262 = vmax.f32 %v905, %v1188
      %v1263 = vmax.f32 %v906, %v1239
      %v1264 = vmax.f32 %v907, %v1241
      %v1265 = vmax.f32 %v908, %v1084
      %v1266 = vmax.f32 %v909, %v1086
      %v1267 = vmax.f32 %v910, %v1137
      %v1268 = vmax.f32 %v911, %v1139
      %v1269 = vmax.f32 %v912, %v1190
      %v1270 = vmax.f32 %v913, %v1192
      %v1271 = vmax.f32 %v914, %v1243
      %v1272 = vmax.f32 %v915, %v1245
      %v1273 = vmax.f32 %v916, %v1090
      %v1274 = vmax.f32 %v917, %v1092
      %v1275 = vmax.f32 %v918, %v1143
      %v1276 = vmax.f32 %v919, %v1145
      %v1277 = vmax.f32 %v920, %v1196
      %v1278 = vmax.f32 %v921, %v1198
      %v1279 = vmax.f32 %v922, %v1249
      %v1280 = vmax.f32 %v923, %v1251
      %v1281 = vmax.f32 %v924, %v1094
      %v1282 = vmax.f32 %v925, %v1096
      %v1283 = vmax.f32 %v926, %v1147
      %v1284 = vmax.f32 %v927, %v1149
      %v1285 = vmax.f32 %v928, %v1200
      %v1286 = vmax.f32 %v929, %v1202
      %v1287 = vmax.f32 %v930, %v1253
      %v1288 = vmax.f32 %v931, %v1255
      %s1289 = scalar_lea.vmem %s219, 384
      %v1290 = vld [vmem:[%s1289] sm:$0xff]
      %v1291 = vld [vmem:[%s1289 + $0x8] sm:$0xff]
      %v1292 = vld [vmem:[%s1289 + $0x10] sm:$0xff]
      %v1293 = vld [vmem:[%s1289 + $0x18] sm:$0xff]
      %v1294 = vld [vmem:[%s1289 + $0x20] sm:$0xff]
      %v1295 = vld [vmem:[%s1289 + $0x28] sm:$0xff]
      %v1296 = vld [vmem:[%s1289 + $0x30] sm:$0xff]
      %v1297 = vld [vmem:[%s1289 + $0x38] sm:$0xff]
      %v1298 = vld [vmem:[%s1289 + $0x40] sm:$0xff]
      %v1299 = vld [vmem:[%s1289 + $0x48] sm:$0xff]
      %v1300 = vld [vmem:[%s1289 + $0x50] sm:$0xff]
      %v1301 = vld [vmem:[%s1289 + $0x58] sm:$0xff]
      %v1302 = vld [vmem:[%s1289 + $0x60] sm:$0x11]
      %v1303 = vld [vmem:[%s1289 + $0x68] sm:$0x11]
      %v1304 = vld [vmem:[%s1289 + $0x70] sm:$0x11]
      %v1305 = vld [vmem:[%s1289 + $0x78] sm:$0x11]
      %v1322 = vunpack.c.l.b16 %v1290
      %v1323 = vunpack.c.h.b16 %v1290
      %v1324 = vunpack.c.l.b16 %v1291
      %v1325 = vunpack.c.h.b16 %v1291
      %v1326 = vunpack.c.l.b16 %v1292
      %v1327 = vunpack.c.h.b16 %v1292
      %v1328 = vunpack.c.l.b16 %v1293
      %v1329 = vunpack.c.h.b16 %v1293
      %v1330 = vunpack.c.l.b16 %v1294
      %v1331 = vunpack.c.h.b16 %v1294
      %v1332 = vunpack.c.l.b16 %v1295
      %v1333 = vunpack.c.h.b16 %v1295
      %v1334 = vunpack.c.l.b16 %v1296
      %v1335 = vunpack.c.h.b16 %v1296
      %v1336 = vunpack.c.l.b16 %v1297
      %v1337 = vunpack.c.h.b16 %v1297
      %v1338 = vunpack.c.l.b16 %v1298
      %v1339 = vunpack.c.h.b16 %v1298
      %v1340 = vunpack.c.l.b16 %v1299
      %v1341 = vunpack.c.h.b16 %v1299
      %v1342 = vunpack.c.l.b16 %v1300
      %v1343 = vunpack.c.h.b16 %v1300
      %v1344 = vunpack.c.l.b16 %v1301
      %v1345 = vunpack.c.h.b16 %v1301
      %v1346 = vunpack.c.l.b16 %v1302
      %v1347 = vunpack.c.h.b16 %v1302
      %v1348 = vunpack.c.l.b16 %v1303
      %v1349 = vunpack.c.h.b16 %v1303
      %v1350 = vunpack.c.l.b16 %v1304
      %v1351 = vunpack.c.h.b16 %v1304
      %v1352 = vunpack.c.l.b16 %v1305
      %v1353 = vunpack.c.h.b16 %v1305
      %v1354 = vpack.c.b16 %v1330, %v1322
      %v1355 = vpack.c.b16 %v1331, %v1323
      %v1356 = vpack.c.b16 %v1332, %v1324
      %v1357 = vpack.c.b16 %v1333, %v1325
      %v1358 = vpack.c.b16 %v1334, %v1326
      %v1359 = vpack.c.b16 %v1335, %v1327
      %v1360 = vpack.c.b16 %v1336, %v1328
      %v1361 = vpack.c.b16 %v1337, %v1329
      %v1362 = vpack.c.b16 %v1346, %v1338
      %v1363 = vpack.c.b16 %v1347, %v1339
      %v1364 = vpack.c.b16 %v1348, %v1340
      %v1365 = vpack.c.b16 %v1349, %v1341
      %v1366 = vpack.c.b16 %v1350, %v1342
      %v1367 = vpack.c.b16 %v1351, %v1343
      %v1368 = vpack.c.b16 %v1352, %v1344
      %v1369 = vpack.c.b16 %v1353, %v1345
      %v1379 = vand.u32 %v1362, %v338
      %v1382 = vand.u32 %v1363, %v338
      %v1385 = vand.u32 %v1364, %v338
      %v1388 = vand.u32 %v1365, %v338
      %v1391 = vand.u32 %v1366, %v338
      %v1394 = vand.u32 %v1367, %v338
      %v1397 = vand.u32 %v1368, %v338
      %v1400 = vand.u32 %v1369, %v338
      %1402 = vmatprep.subr.bf16.mxu0 %v1355
      %1403 = vmatpush1.bf16.msra.mxu0 %v1354
      %1404 = vmatprep.subr.bf16.mxu0 %v1382
      %1405 = vmatpush1.bf16.msra.mxu0 %v1379
      %1406 = vmatprep.subr.bf16.mxu0 0
      %1407 = vmatpush1.bf16.msra.mxu0 0
      %1408 = vmatprep.subr.bf16.mxu0 0
      %1409 = vmatpush1.bf16.msra.mxu0 0
      %1410 = vmatprep.subr.bf16.mxu0 0
      %1411 = vmatpush1.bf16.msra.mxu0 0
      %1412 = vmatprep.subr.bf16.mxu0 0
      %1413 = vmatpush1.bf16.msra.mxu0 0
      %1414 = vmatprep.subr.bf16.mxu0 0
      %1415 = vmatpush1.bf16.msra.mxu0 0
      %1416 = vmatprep.subr.bf16.mxu0 0
      %1417 = vmatpush1.bf16.msra.mxu0 0
      %1418 = vmatprep.subr.bf16.mxu0 0
      %1419 = vmatpush1.bf16.msra.mxu0 0
      %1420 = vmatprep.subr.bf16.mxu0 0
      %1421 = vmatpush1.bf16.msra.mxu0 0
      %1422 = vmatprep.subr.bf16.mxu0 0
      %1423 = vmatpush1.bf16.msra.mxu0 0
      %1424 = vmatprep.subr.bf16.mxu0 0
      %1425 = vmatpush1.bf16.msra.mxu0 0
      %1426 = vmatprep.subr.bf16.mxu0 0
      %1427 = vmatpush1.bf16.msra.mxu0 0
      %1428 = vmatprep.subr.bf16.mxu0 0
      %1429 = vmatpush1.bf16.msra.mxu0 0
      %1430 = vmatprep.subr.bf16.mxu0 0
      %1431 = vmatpush1.bf16.msra.mxu0 0
      %1432 = vmatprep.subr.bf16.mxu0 0
      %1433 = vmatpush1.bf16.msra.mxu0 0
      %1434 = vmatprep.mubr.bf16.mxu0 0
      %1435 = vmatmul.mubr.bf16.gmra.mrb[0].mxu0 %v330
      %v1436 = vpop.f32.mrb[0].mxu0
      %v1437 = vadd.f32 0.0, %v1436
      %v1438 = vpop.f32.mrb[0].mxu0
      %v1439 = vadd.f32 0.0, %v1438
      %v1440 = vpop.f32.mrb[0].mxu0
      %v1441 = vadd.f32 0.0, %v1440
      %v1442 = vpop.f32.mrb[0].mxu0
      %v1443 = vadd.f32 0.0, %v1442
      %1444 = vmatprep.mubr.bf16.mxu0 0
      %1445 = vmatmul.mubr.bf16.gmra.mrb[0].mxu0 %v333
      %v1446 = vpop.f32.mrb[0].mxu0
      %v1447 = vadd.f32 0.0, %v1446
      %v1448 = vpop.f32.mrb[0].mxu0
      %v1449 = vadd.f32 0.0, %v1448
      %v1450 = vpop.f32.mrb[0].mxu0
      %v1451 = vadd.f32 0.0, %v1450
      %v1452 = vpop.f32.mrb[0].mxu0
      %v1453 = vadd.f32 0.0, %v1452
      %1454 = vdwg.mxu0
      %1455 = vmatprep.subr.bf16.mxu0 %v1357
      %1456 = vmatpush1.bf16.msra.mxu0 %v1356
      %1457 = vmatprep.subr.bf16.mxu0 %v1388
      %1458 = vmatpush1.bf16.msra.mxu0 %v1385
      %1459 = vmatprep.subr.bf16.mxu0 0
      %1460 = vmatpush1.bf16.msra.mxu0 0
      %1461 = vmatprep.subr.bf16.mxu0 0
      %1462 = vmatpush1.bf16.msra.mxu0 0
      %1463 = vmatprep.subr.bf16.mxu0 0
      %1464 = vmatpush1.bf16.msra.mxu0 0
      %1465 = vmatprep.subr.bf16.mxu0 0
      %1466 = vmatpush1.bf16.msra.mxu0 0
      %1467 = vmatprep.subr.bf16.mxu0 0
      %1468 = vmatpush1.bf16.msra.mxu0 0
      %1469 = vmatprep.subr.bf16.mxu0 0
      %1470 = vmatpush1.bf16.msra.mxu0 0
      %1471 = vmatprep.subr.bf16.mxu0 0
      %1472 = vmatpush1.bf16.msra.mxu0 0
      %1473 = vmatprep.subr.bf16.mxu0 0
      %1474 = vmatpush1.bf16.msra.mxu0 0
      %1475 = vmatprep.subr.bf16.mxu0 0
      %1476 = vmatpush1.bf16.msra.mxu0 0
      %1477 = vmatprep.subr.bf16.mxu0 0
      %1478 = vmatpush1.bf16.msra.mxu0 0
      %1479 = vmatprep.subr.bf16.mxu0 0
      %1480 = vmatpush1.bf16.msra.mxu0 0
      %1481 = vmatprep.subr.bf16.mxu0 0
      %1482 = vmatpush1.bf16.msra.mxu0 0
      %1483 = vmatprep.subr.bf16.mxu0 0
      %1484 = vmatpush1.bf16.msra.mxu0 0
      %1485 = vmatprep.subr.bf16.mxu0 0
      %1486 = vmatpush1.bf16.msra.mxu0 0
      %1487 = vmatprep.mubr.bf16.mxu0 0
      %1488 = vmatmul.mubr.bf16.gmra.mrb[0].mxu0 %v330
      %v1489 = vpop.f32.mrb[0].mxu0
      %v1490 = vadd.f32 0.0, %v1489
      %v1491 = vpop.f32.mrb[0].mxu0
      %v1492 = vadd.f32 0.0, %v1491
      %v1493 = vpop.f32.mrb[0].mxu0
      %v1494 = vadd.f32 0.0, %v1493
      %v1495 = vpop.f32.mrb[0].mxu0
      %v1496 = vadd.f32 0.0, %v1495
      %1497 = vmatprep.mubr.bf16.mxu0 0
      %1498 = vmatmul.mubr.bf16.gmra.mrb[0].mxu0 %v333
      %v1499 = vpop.f32.mrb[0].mxu0
      %v1500 = vadd.f32 0.0, %v1499
      %v1501 = vpop.f32.mrb[0].mxu0
      %v1502 = vadd.f32 0.0, %v1501
      %v1503 = vpop.f32.mrb[0].mxu0
      %v1504 = vadd.f32 0.0, %v1503
      %v1505 = vpop.f32.mrb[0].mxu0
      %v1506 = vadd.f32 0.0, %v1505
      %1507 = vdwg.mxu0
      %1508 = vmatprep.subr.bf16.mxu0 %v1359
      %1509 = vmatpush1.bf16.msra.mxu0 %v1358
      %1510 = vmatprep.subr.bf16.mxu0 %v1394
      %1511 = vmatpush1.bf16.msra.mxu0 %v1391
      %1512 = vmatprep.subr.bf16.mxu0 0
      %1513 = vmatpush1.bf16.msra.mxu0 0
      %1514 = vmatprep.subr.bf16.mxu0 0
      %1515 = vmatpush1.bf16.msra.mxu0 0
      %1516 = vmatprep.subr.bf16.mxu0 0
      %1517 = vmatpush1.bf16.msra.mxu0 0
      %1518 = vmatprep.subr.bf16.mxu0 0
      %1519 = vmatpush1.bf16.msra.mxu0 0
      %1520 = vmatprep.subr.bf16.mxu0 0
      %1521 = vmatpush1.bf16.msra.mxu0 0
      %1522 = vmatprep.subr.bf16.mxu0 0
      %1523 = vmatpush1.bf16.msra.mxu0 0
      %1524 = vmatprep.subr.bf16.mxu0 0
      %1525 = vmatpush1.bf16.msra.mxu0 0
      %1526 = vmatprep.subr.bf16.mxu0 0
      %1527 = vmatpush1.bf16.msra.mxu0 0
      %1528 = vmatprep.subr.bf16.mxu0 0
      %1529 = vmatpush1.bf16.msra.mxu0 0
      %1530 = vmatprep.subr.bf16.mxu0 0
      %1531 = vmatpush1.bf16.msra.mxu0 0
      %1532 = vmatprep.subr.bf16.mxu0 0
      %1533 = vmatpush1.bf16.msra.mxu0 0
      %1534 = vmatprep.subr.bf16.mxu0 0
      %1535 = vmatpush1.bf16.msra.mxu0 0
      %1536 = vmatprep.subr.bf16.mxu0 0
      %1537 = vmatpush1.bf16.msra.mxu0 0
      %1538 = vmatprep.subr.bf16.mxu0 0
      %1539 = vmatpush1.bf16.msra.mxu0 0
      %1540 = vmatprep.mubr.bf16.mxu0 0
      %1541 = vmatmul.mubr.bf16.gmra.mrb[0].mxu0 %v330
      %v1542 = vpop.f32.mrb[0].mxu0
      %v1543 = vadd.f32 0.0, %v1542
      %v1544 = vpop.f32.mrb[0].mxu0
      %v1545 = vadd.f32 0.0, %v1544
      %v1546 = vpop.f32.mrb[0].mxu0
      %v1547 = vadd.f32 0.0, %v1546
      %v1548 = vpop.f32.mrb[0].mxu0
      %v1549 = vadd.f32 0.0, %v1548
      %1550 = vmatprep.mubr.bf16.mxu0 0
      %1551 = vmatmul.mubr.bf16.gmra.mrb[0].mxu0 %v333
      %v1552 = vpop.f32.mrb[0].mxu0
      %v1553 = vadd.f32 0.0, %v1552
      %v1554 = vpop.f32.mrb[0].mxu0
      %v1555 = vadd.f32 0.0, %v1554
      %v1556 = vpop.f32.mrb[0].mxu0
      %v1557 = vadd.f32 0.0, %v1556
      %v1558 = vpop.f32.mrb[0].mxu0
      %v1559 = vadd.f32 0.0, %v1558
      %1560 = vdwg.mxu0
      %1561 = vmatprep.subr.bf16.mxu0 %v1361
      %1562 = vmatpush1.bf16.msra.mxu0 %v1360
      %1563 = vmatprep.subr.bf16.mxu0 %v1400
      %1564 = vmatpush1.bf16.msra.mxu0 %v1397
      %1565 = vmatprep.subr.bf16.mxu0 0
      %1566 = vmatpush1.bf16.msra.mxu0 0
      %1567 = vmatprep.subr.bf16.mxu0 0
      %1568 = vmatpush1.bf16.msra.mxu0 0
      %1569 = vmatprep.subr.bf16.mxu0 0
      %1570 = vmatpush1.bf16.msra.mxu0 0
      %1571 = vmatprep.subr.bf16.mxu0 0
      %1572 = vmatpush1.bf16.msra.mxu0 0
      %1573 = vmatprep.subr.bf16.mxu0 0
      %1574 = vmatpush1.bf16.msra.mxu0 0
      %1575 = vmatprep.subr.bf16.mxu0 0
      %1576 = vmatpush1.bf16.msra.mxu0 0
      %1577 = vmatprep.subr.bf16.mxu0 0
      %1578 = vmatpush1.bf16.msra.mxu0 0
      %1579 = vmatprep.subr.bf16.mxu0 0
      %1580 = vmatpush1.bf16.msra.mxu0 0
      %1581 = vmatprep.subr.bf16.mxu0 0
      %1582 = vmatpush1.bf16.msra.mxu0 0
      %1583 = vmatprep.subr.bf16.mxu0 0
      %1584 = vmatpush1.bf16.msra.mxu0 0
      %1585 = vmatprep.subr.bf16.mxu0 0
      %1586 = vmatpush1.bf16.msra.mxu0 0
      %1587 = vmatprep.subr.bf16.mxu0 0
      %1588 = vmatpush1.bf16.msra.mxu0 0
      %1589 = vmatprep.subr.bf16.mxu0 0
      %1590 = vmatpush1.bf16.msra.mxu0 0
      %1591 = vmatprep.subr.bf16.mxu0 0
      %1592 = vmatpush1.bf16.msra.mxu0 0
      %1593 = vmatprep.mubr.bf16.mxu0 0
      %1594 = vmatmul.mubr.bf16.gmra.mrb[0].mxu0 %v330
      %v1595 = vpop.f32.mrb[0].mxu0
      %v1596 = vadd.f32 0.0, %v1595
      %v1597 = vpop.f32.mrb[0].mxu0
      %v1598 = vadd.f32 0.0, %v1597
      %v1599 = vpop.f32.mrb[0].mxu0
      %v1600 = vadd.f32 0.0, %v1599
      %v1601 = vpop.f32.mrb[0].mxu0
      %v1602 = vadd.f32 0.0, %v1601
      %1603 = vmatprep.mubr.bf16.mxu0 0
      %1604 = vmatmul.mubr.bf16.gmra.mrb[0].mxu0 %v333
      %v1605 = vpop.f32.mrb[0].mxu0
      %v1606 = vadd.f32 0.0, %v1605
      %v1607 = vpop.f32.mrb[0].mxu0
      %v1608 = vadd.f32 0.0, %v1607
      %v1609 = vpop.f32.mrb[0].mxu0
      %v1610 = vadd.f32 0.0, %v1609
      %v1611 = vpop.f32.mrb[0].mxu0
      %v1612 = vadd.f32 0.0, %v1611
      %1613 = vdwg.mxu0
      %v1614 = vmax.f32 %v1257, %v1437
      %v1615 = vmax.f32 %v1258, %v1439
      %v1616 = vmax.f32 %v1259, %v1490
      %v1617 = vmax.f32 %v1260, %v1492
      %v1618 = vmax.f32 %v1261, %v1543
      %v1619 = vmax.f32 %v1262, %v1545
      %v1620 = vmax.f32 %v1263, %v1596
      %v1621 = vmax.f32 %v1264, %v1598
      %v1622 = vmax.f32 %v1265, %v1441
      %v1623 = vmax.f32 %v1266, %v1443
      %v1624 = vmax.f32 %v1267, %v1494
      %v1625 = vmax.f32 %v1268, %v1496
      %v1626 = vmax.f32 %v1269, %v1547
      %v1627 = vmax.f32 %v1270, %v1549
      %v1628 = vmax.f32 %v1271, %v1600
      %v1629 = vmax.f32 %v1272, %v1602
      %v1630 = vmax.f32 %v1273, %v1447
      %v1631 = vmax.f32 %v1274, %v1449
      %v1632 = vmax.f32 %v1275, %v1500
      %v1633 = vmax.f32 %v1276, %v1502
      %v1634 = vmax.f32 %v1277, %v1553
      %v1635 = vmax.f32 %v1278, %v1555
      %v1636 = vmax.f32 %v1279, %v1606
      %v1637 = vmax.f32 %v1280, %v1608
      %v1638 = vmax.f32 %v1281, %v1451
      %v1639 = vmax.f32 %v1282, %v1453
      %v1640 = vmax.f32 %v1283, %v1504
      %v1641 = vmax.f32 %v1284, %v1506
      %v1642 = vmax.f32 %v1285, %v1557
      %v1643 = vmax.f32 %v1286, %v1559
      %v1644 = vmax.f32 %v1287, %v1610
      %v1645 = vmax.f32 %v1288, %v1612
      %v1646 = vld [vmem:[%s2] sm:$0xff]
      %v1647 = vld [vmem:[%s2 + $0x8] sm:$0xff]
      %v1648 = vld [vmem:[%s2 + $0x10] sm:$0xff]
      %v1649 = vld [vmem:[%s2 + $0x18] sm:$0xff]
      %1651 = vset.pattern.permute.xlu0 0
      %1652 = vperm.xlu0 %1651, %v1646
      %v1653 = vpop.permute.xlu0 %1652
      %1656 = vset.pattern.permute.xlu0 0
      %1657 = vperm.xlu0 %1656, %v1647
      %v1658 = vpop.permute.xlu0 %1657
      %1661 = vset.pattern.permute.xlu0 0
      %1662 = vperm.xlu0 %1661, %v1648
      %v1663 = vpop.permute.xlu0 %1662
      %1666 = vset.pattern.permute.xlu0 0
      %1667 = vperm.xlu0 %1666, %v1649
      %v1668 = vpop.permute.xlu0 %1667
      %v1670 = vadd.f32 %v1614, %v1653
      %v1671 = vadd.f32 %v1615, %v1653
      %v1672 = vadd.f32 %v1616, %v1653
      %v1673 = vadd.f32 %v1617, %v1653
      %v1674 = vadd.f32 %v1618, %v1653
      %v1675 = vadd.f32 %v1619, %v1653
      %v1676 = vadd.f32 %v1620, %v1653
      %v1677 = vadd.f32 %v1621, %v1653
      %v1678 = vadd.f32 %v1622, %v1658
      %v1679 = vadd.f32 %v1623, %v1658
      %v1680 = vadd.f32 %v1624, %v1658
      %v1681 = vadd.f32 %v1625, %v1658
      %v1682 = vadd.f32 %v1626, %v1658
      %v1683 = vadd.f32 %v1627, %v1658
      %v1684 = vadd.f32 %v1628, %v1658
      %v1685 = vadd.f32 %v1629, %v1658
      %v1686 = vadd.f32 %v1630, %v1663
      %v1687 = vadd.f32 %v1631, %v1663
      %v1688 = vadd.f32 %v1632, %v1663
      %v1689 = vadd.f32 %v1633, %v1663
      %v1690 = vadd.f32 %v1634, %v1663
      %v1691 = vadd.f32 %v1635, %v1663
      %v1692 = vadd.f32 %v1636, %v1663
      %v1693 = vadd.f32 %v1637, %v1663
      %v1694 = vadd.f32 %v1638, %v1668
      %v1695 = vadd.f32 %v1639, %v1668
      %v1696 = vadd.f32 %v1640, %v1668
      %v1697 = vadd.f32 %v1641, %v1668
      %v1698 = vadd.f32 %v1642, %v1668
      %v1699 = vadd.f32 %v1643, %v1668
      %v1700 = vadd.f32 %v1644, %v1668
      %v1701 = vadd.f32 %v1645, %v1668
      %v1702 = vmax.f32 %v1670, 0.0
      %v1703 = vmax.f32 %v1671, 0.0
      %v1704 = vmax.f32 %v1672, 0.0
      %v1705 = vmax.f32 %v1673, 0.0
      %v1706 = vmax.f32 %v1674, 0.0
      %v1707 = vmax.f32 %v1675, 0.0
      %v1708 = vmax.f32 %v1676, 0.0
      %v1709 = vmax.f32 %v1677, 0.0
      %v1710 = vmax.f32 %v1678, 0.0
      %v1711 = vmax.f32 %v1679, 0.0
      %v1712 = vmax.f32 %v1680, 0.0
      %v1713 = vmax.f32 %v1681, 0.0
      %v1714 = vmax.f32 %v1682, 0.0
      %v1715 = vmax.f32 %v1683, 0.0
      %v1716 = vmax.f32 %v1684, 0.0
      %v1717 = vmax.f32 %v1685, 0.0
      %v1718 = vmax.f32 %v1686, 0.0
      %v1719 = vmax.f32 %v1687, 0.0
      %v1720 = vmax.f32 %v1688, 0.0
      %v1721 = vmax.f32 %v1689, 0.0
      %v1722 = vmax.f32 %v1690, 0.0
      %v1723 = vmax.f32 %v1691, 0.0
      %v1724 = vmax.f32 %v1692, 0.0
      %v1725 = vmax.f32 %v1693, 0.0
      %v1726 = vmax.f32 %v1694, 0.0
      %v1727 = vmax.f32 %v1695, 0.0
      %v1728 = vmax.f32 %v1696, 0.0
      %v1729 = vmax.f32 %v1697, 0.0
      %v1730 = vmax.f32 %v1698, 0.0
      %v1731 = vmax.f32 %v1699, 0.0
      %v1732 = vmax.f32 %v1700, 0.0
      %v1733 = vmax.f32 %v1701, 0.0
      %v1734 = vpack.c.bf16 %v1710, %v1702
      %v1735 = vpack.c.bf16 %v1711, %v1703
      %v1736 = vpack.c.bf16 %v1712, %v1704
      %v1737 = vpack.c.bf16 %v1713, %v1705
      %v1738 = vpack.c.bf16 %v1714, %v1706
      %v1739 = vpack.c.bf16 %v1715, %v1707
      %v1740 = vpack.c.bf16 %v1716, %v1708
      %v1741 = vpack.c.bf16 %v1717, %v1709
      %v1742 = vpack.c.bf16 %v1726, %v1718
      %v1743 = vpack.c.bf16 %v1727, %v1719
      %v1744 = vpack.c.bf16 %v1728, %v1720
      %v1745 = vpack.c.bf16 %v1729, %v1721
      %v1746 = vpack.c.bf16 %v1730, %v1722
      %v1747 = vpack.c.bf16 %v1731, %v1723
      %v1748 = vpack.c.bf16 %v1732, %v1724
      %v1749 = vpack.c.bf16 %v1733, %v1725
      %v1750 = vld [vmem:[%s3] sm:$0xf]
      %v1751 = vld [vmem:[%s3 + $0x4] sm:$0xf]
      %v1752 = vld [vmem:[%s3 + $0x8] sm:$0xf]
      %v1753 = vld [vmem:[%s3 + $0xc] sm:$0xf]
      %v1754 = vld [vmem:[%s3 + $0x10] sm:$0xf]
      %v1755 = vld [vmem:[%s3 + $0x14] sm:$0xf]
      %s1756 = scalar_lea.vmem %s3, 24
      %v1757 = vld [vmem:[%s1756] sm:$0xf]
      %v1758 = vld [vmem:[%s1756 + $0x4] sm:$0xf]
      %v1759 = vld [vmem:[%s1756 + $0x8] sm:$0xf]
      %v1760 = vld [vmem:[%s1756 + $0xc] sm:$0xf]
      %v1761 = vld [vmem:[%s1756 + $0x10] sm:$0xf]
      %v1762 = vld [vmem:[%s1756 + $0x14] sm:$0xf]
      %v1769 = vunpack.c.l.b16 %v1757
      %v1770 = vunpack.c.l.b16 %v1758
      %v1771 = vunpack.c.l.b16 %v1759
      %v1772 = vunpack.c.l.b16 %v1760
      %v1773 = vunpack.c.l.b16 %v1761
      %v1774 = vunpack.c.l.b16 %v1762
      %v1775 = vpack.c.b16 %v1770, %v1769
      %v1776 = vpack.c.b16 %v1772, %v1771
      %v1777 = vpack.c.b16 %v1774, %v1773
      %1780 = vrot.lane.b32.xlu0 %v1734, 92
      %v1781 = vpop.permute.xlu0 %1780
      %1782 = vrot.lane.b32.xlu0 %v1742, 92
      %v1783 = vpop.permute.xlu0 %1782
      %vm1786 = vcmask 261120
      %v1788 = vsel %vm1786, %v1775, 0
      %v1791 = vsel %vm1786, %v1776, 0
      %v1794 = vsel %vm1786, %v1777, 0
      %1796 = vmatprep.subr.bf16.mxu0 0
      %1797 = vmatpush1.bf16.msra.mxu0 %v1781
      %1798 = vmatprep.subr.bf16.mxu0 0
      %1799 = vmatpush1.bf16.msra.mxu0 %v1783
      %1800 = vmatprep.subr.bf16.mxu0 0
      %1801 = vmatpush1.bf16.msra.mxu0 0
      %1802 = vmatprep.subr.bf16.mxu0 0
      %1803 = vmatpush1.bf16.msra.mxu0 0
      %1804 = vmatprep.subr.bf16.mxu0 0
      %1805 = vmatpush1.bf16.msra.mxu0 0
      %1806 = vmatprep.subr.bf16.mxu0 0
      %1807 = vmatpush1.bf16.msra.mxu0 0
      %1808 = vmatprep.subr.bf16.mxu0 0
      %1809 = vmatpush1.bf16.msra.mxu0 0
      %1810 = vmatprep.subr.bf16.mxu0 0
      %1811 = vmatpush1.bf16.msra.mxu0 0
      %1812 = vmatprep.subr.bf16.mxu0 0
      %1813 = vmatpush1.bf16.msra.mxu0 0
      %1814 = vmatprep.subr.bf16.mxu0 0
      %1815 = vmatpush1.bf16.msra.mxu0 0
      %1816 = vmatprep.subr.bf16.mxu0 0
      %1817 = vmatpush1.bf16.msra.mxu0 0
      %1818 = vmatprep.subr.bf16.mxu0 0
      %1819 = vmatpush1.bf16.msra.mxu0 0
      %1820 = vmatprep.subr.bf16.mxu0 0
      %1821 = vmatpush1.bf16.msra.mxu0 0
      %1822 = vmatprep.subr.bf16.mxu0 0
      %1823 = vmatpush1.bf16.msra.mxu0 0
      %1824 = vmatprep.subr.bf16.mxu0 0
      %1825 = vmatpush1.bf16.msra.mxu0 0
      %1826 = vmatprep.subr.bf16.mxu0 0
      %1827 = vmatpush1.bf16.msra.mxu0 0
      %1828 = vmatprep.mubr.bf16.mxu0 0
      %1829 = vmatmul.mubr.bf16.gmra.mrb[0].mxu0 %v1788
      %v1830 = vpop.f32.mrb[0].mxu0
      %v1831 = vadd.f32 0.0, %v1830
      %v1832 = vpop.f32.mrb[0].mxu0
      %v1833 = vpop.f32.mrb[0].mxu0
      %v1834 = vadd.f32 0.0, %v1833
      %v1835 = vpop.f32.mrb[0].mxu0
      %1836 = vmatprep.mubr.bf16.mxu0 0
      %1837 = vmatmul.mubr.bf16.gmra.mrb[0].mxu0 %v1791
      %v1838 = vpop.f32.mrb[0].mxu0
      %v1839 = vadd.f32 0.0, %v1838
      %v1840 = vpop.f32.mrb[0].mxu0
      %v1841 = vpop.f32.mrb[0].mxu0
      %v1842 = vadd.f32 0.0, %v1841
      %v1843 = vpop.f32.mrb[0].mxu0
      %1844 = vmatprep.mubr.bf16.mxu0 0
      %1845 = vmatmul.mubr.bf16.gmra.mrb[0].mxu0 %v1794
      %v1846 = vpop.f32.mrb[0].mxu0
      %v1847 = vadd.f32 0.0, %v1846
      %v1848 = vpop.f32.mrb[0].mxu0
      %v1849 = vpop.f32.mrb[0].mxu0
      %v1850 = vadd.f32 0.0, %v1849
      %v1851 = vpop.f32.mrb[0].mxu0
      %1852 = vdwg.mxu0
      %v1859 = vunpack.c.l.b16 %v1750
      %v1860 = vunpack.c.l.b16 %v1751
      %v1861 = vunpack.c.l.b16 %v1752
      %v1862 = vunpack.c.l.b16 %v1753
      %v1863 = vunpack.c.l.b16 %v1754
      %v1864 = vunpack.c.l.b16 %v1755
      %v1865 = vpack.c.b16 %v1860, %v1859
      %v1866 = vpack.c.b16 %v1862, %v1861
      %v1867 = vpack.c.b16 %v1864, %v1863
      %v1869 = vsel %vm1786, %v1865, 0
      %v1872 = vsel %vm1786, %v1866, 0
      %v1875 = vsel %vm1786, %v1867, 0
      %1877 = vmatprep.subr.bf16.mxu0 0
      %1878 = vmatpush1.bf16.msra.mxu0 %v1734
      %1879 = vmatprep.subr.bf16.mxu0 0
      %1880 = vmatpush1.bf16.msra.mxu0 %v1742
      %1881 = vmatprep.subr.bf16.mxu0 0
      %1882 = vmatpush1.bf16.msra.mxu0 0
      %1883 = vmatprep.subr.bf16.mxu0 0
      %1884 = vmatpush1.bf16.msra.mxu0 0
      %1885 = vmatprep.subr.bf16.mxu0 0
      %1886 = vmatpush1.bf16.msra.mxu0 0
      %1887 = vmatprep.subr.bf16.mxu0 0
      %1888 = vmatpush1.bf16.msra.mxu0 0
      %1889 = vmatprep.subr.bf16.mxu0 0
      %1890 = vmatpush1.bf16.msra.mxu0 0
      %1891 = vmatprep.subr.bf16.mxu0 0
      %1892 = vmatpush1.bf16.msra.mxu0 0
      %1893 = vmatprep.subr.bf16.mxu0 0
      %1894 = vmatpush1.bf16.msra.mxu0 0
      %1895 = vmatprep.subr.bf16.mxu0 0
      %1896 = vmatpush1.bf16.msra.mxu0 0
      %1897 = vmatprep.subr.bf16.mxu0 0
      %1898 = vmatpush1.bf16.msra.mxu0 0
      %1899 = vmatprep.subr.bf16.mxu0 0
      %1900 = vmatpush1.bf16.msra.mxu0 0
      %1901 = vmatprep.subr.bf16.mxu0 0
      %1902 = vmatpush1.bf16.msra.mxu0 0
      %1903 = vmatprep.subr.bf16.mxu0 0
      %1904 = vmatpush1.bf16.msra.mxu0 0
      %1905 = vmatprep.subr.bf16.mxu0 0
      %1906 = vmatpush1.bf16.msra.mxu0 0
      %1907 = vmatprep.subr.bf16.mxu0 0
      %1908 = vmatpush1.bf16.msra.mxu0 0
      %1909 = vmatprep.mubr.bf16.mxu0 0
      %1910 = vmatmul.mubr.bf16.gmra.mrb[0].mxu0 %v1869
      %v1911 = vpop.f32.mrb[0].mxu0
      %v1912 = vadd.f32 %v1831, %v1911
      %v1913 = vpop.f32.mrb[0].mxu0
      %v1914 = vpop.f32.mrb[0].mxu0
      %v1915 = vadd.f32 %v1834, %v1914
      %v1916 = vpop.f32.mrb[0].mxu0
      %1917 = vmatprep.mubr.bf16.mxu0 0
      %1918 = vmatmul.mubr.bf16.gmra.mrb[0].mxu0 %v1872
      %v1919 = vpop.f32.mrb[0].mxu0
      %v1920 = vadd.f32 %v1839, %v1919
      %v1921 = vpop.f32.mrb[0].mxu0
      %v1922 = vpop.f32.mrb[0].mxu0
      %v1923 = vadd.f32 %v1842, %v1922
      %v1924 = vpop.f32.mrb[0].mxu0
      %1925 = vmatprep.mubr.bf16.mxu0 0
      %1926 = vmatmul.mubr.bf16.gmra.mrb[0].mxu0 %v1875
      %v1927 = vpop.f32.mrb[0].mxu0
      %v1928 = vadd.f32 %v1847, %v1927
      %v1929 = vpop.f32.mrb[0].mxu0
      %v1930 = vpop.f32.mrb[0].mxu0
      %v1931 = vadd.f32 %v1850, %v1930
      %v1932 = vpop.f32.mrb[0].mxu0
      %1933 = vdwg.mxu0
      %s1934 = scalar_lea.vmem %s3, 48
      %v1935 = vld [vmem:[%s1934] sm:$0xf]
      %v1936 = vld [vmem:[%s1934 + $0x4] sm:$0xf]
      %v1937 = vld [vmem:[%s1934 + $0x8] sm:$0xf]
      %v1938 = vld [vmem:[%s1934 + $0xc] sm:$0xf]
      %v1939 = vld [vmem:[%s1934 + $0x10] sm:$0xf]
      %v1940 = vld [vmem:[%s1934 + $0x14] sm:$0xf]
      %v1947 = vunpack.c.l.b16 %v1935
      %v1948 = vunpack.c.l.b16 %v1936
      %v1949 = vunpack.c.l.b16 %v1937
      %v1950 = vunpack.c.l.b16 %v1938
      %v1951 = vunpack.c.l.b16 %v1939
      %v1952 = vunpack.c.l.b16 %v1940
      %v1953 = vpack.c.b16 %v1948, %v1947
      %v1954 = vpack.c.b16 %v1950, %v1949
      %v1955 = vpack.c.b16 %v1952, %v1951
      %1956 = vrot.lane.b32.xlu0 %v1734, 56
      %v1957 = vpop.permute.xlu0 %1956
      %1958 = vrot.lane.b32.xlu0 %v1742, 56
      %v1959 = vpop.permute.xlu0 %1958
      %v1963 = vsel %vm1786, %v1953, 0
      %v1966 = vsel %vm1786, %v1954, 0
      %v1969 = vsel %vm1786, %v1955, 0
      %1971 = vmatprep.subr.bf16.mxu0 0
      %1972 = vmatpush1.bf16.msra.mxu0 %v1957
      %1973 = vmatprep.subr.bf16.mxu0 0
      %1974 = vmatpush1.bf16.msra.mxu0 %v1959
      %1975 = vmatprep.subr.bf16.mxu0 0
      %1976 = vmatpush1.bf16.msra.mxu0 0
      %1977 = vmatprep.subr.bf16.mxu0 0
      %1978 = vmatpush1.bf16.msra.mxu0 0
      %1979 = vmatprep.subr.bf16.mxu0 0
      %1980 = vmatpush1.bf16.msra.mxu0 0
      %1981 = vmatprep.subr.bf16.mxu0 0
      %1982 = vmatpush1.bf16.msra.mxu0 0
      %1983 = vmatprep.subr.bf16.mxu0 0
      %1984 = vmatpush1.bf16.msra.mxu0 0
      %1985 = vmatprep.subr.bf16.mxu0 0
      %1986 = vmatpush1.bf16.msra.mxu0 0
      %1987 = vmatprep.subr.bf16.mxu0 0
      %1988 = vmatpush1.bf16.msra.mxu0 0
      %1989 = vmatprep.subr.bf16.mxu0 0
      %1990 = vmatpush1.bf16.msra.mxu0 0
      %1991 = vmatprep.subr.bf16.mxu0 0
      %1992 = vmatpush1.bf16.msra.mxu0 0
      %1993 = vmatprep.subr.bf16.mxu0 0
      %1994 = vmatpush1.bf16.msra.mxu0 0
      %1995 = vmatprep.subr.bf16.mxu0 0
      %1996 = vmatpush1.bf16.msra.mxu0 0
      %1997 = vmatprep.subr.bf16.mxu0 0
      %1998 = vmatpush1.bf16.msra.mxu0 0
      %1999 = vmatprep.subr.bf16.mxu0 0
      %2000 = vmatpush1.bf16.msra.mxu0 0
      %2001 = vmatprep.subr.bf16.mxu0 0
      %2002 = vmatpush1.bf16.msra.mxu0 0
      %2003 = vmatprep.mubr.bf16.mxu0 0
      %2004 = vmatmul.mubr.bf16.gmra.mrb[0].mxu0 %v1963
      %v2005 = vpop.f32.mrb[0].mxu0
      %v2006 = vadd.f32 0.0, %v2005
      %v2007 = vpop.f32.mrb[0].mxu0
      %v2008 = vpop.f32.mrb[0].mxu0
      %v2009 = vadd.f32 0.0, %v2008
      %v2010 = vpop.f32.mrb[0].mxu0
      %2011 = vmatprep.mubr.bf16.mxu0 0
      %2012 = vmatmul.mubr.bf16.gmra.mrb[0].mxu0 %v1966
      %v2013 = vpop.f32.mrb[0].mxu0
      %v2014 = vadd.f32 0.0, %v2013
      %v2015 = vpop.f32.mrb[0].mxu0
      %v2016 = vpop.f32.mrb[0].mxu0
      %v2017 = vadd.f32 0.0, %v2016
      %v2018 = vpop.f32.mrb[0].mxu0
      %2019 = vmatprep.mubr.bf16.mxu0 0
      %2020 = vmatmul.mubr.bf16.gmra.mrb[0].mxu0 %v1969
      %v2021 = vpop.f32.mrb[0].mxu0
      %v2022 = vadd.f32 0.0, %v2021
      %v2023 = vpop.f32.mrb[0].mxu0
      %v2024 = vpop.f32.mrb[0].mxu0
      %v2025 = vadd.f32 0.0, %v2024
      %v2026 = vpop.f32.mrb[0].mxu0
      %2027 = vdwg.mxu0
      %v2028 = vadd.f32 %v1912, %v2006
      %v2029 = vadd.f32 %v1915, %v2009
      %v2030 = vadd.f32 %v1920, %v2014
      %v2031 = vadd.f32 %v1923, %v2017
      %v2032 = vadd.f32 %v1928, %v2022
      %v2033 = vadd.f32 %v1931, %v2025
      %s2034 = scalar_lea.vmem %s3, 72
      %v2035 = vld [vmem:[%s2034] sm:$0xf]
      %v2036 = vld [vmem:[%s2034 + $0x4] sm:$0xf]
      %v2037 = vld [vmem:[%s2034 + $0x8] sm:$0xf]
      %v2038 = vld [vmem:[%s2034 + $0xc] sm:$0xf]
      %v2039 = vld [vmem:[%s2034 + $0x10] sm:$0xf]
      %v2040 = vld [vmem:[%s2034 + $0x14] sm:$0xf]
      %v2047 = vunpack.c.l.b16 %v2035
      %v2048 = vunpack.c.l.b16 %v2036
      %v2049 = vunpack.c.l.b16 %v2037
      %v2050 = vunpack.c.l.b16 %v2038
      %v2051 = vunpack.c.l.b16 %v2039
      %v2052 = vunpack.c.l.b16 %v2040
      %v2053 = vpack.c.b16 %v2048, %v2047
      %v2054 = vpack.c.b16 %v2050, %v2049
      %v2055 = vpack.c.b16 %v2052, %v2051
      %2058 = vrot.lane.b32.xlu0 %v1734, 20
      %v2059 = vpop.permute.xlu0 %2058
      %2060 = vrot.lane.b32.xlu0 %v1735, 20
      %v2061 = vpop.permute.xlu0 %2060
      %2062 = vrot.lane.b32.xlu0 %v1742, 20
      %v2063 = vpop.permute.xlu0 %2062
      %2064 = vrot.lane.b32.xlu0 %v1743, 20
      %v2065 = vpop.permute.xlu0 %2064
      %vm2066 = vcmask 162816
      %v2067 = vsel %vm2066, %v2059, %v2061
      %v2068 = vsel %vm2066, %v2063, %v2065
      %v2072 = vsel %vm1786, %v2053, 0
      %v2075 = vsel %vm1786, %v2054, 0
      %v2078 = vsel %vm1786, %v2055, 0
      %2080 = vmatprep.subr.bf16.mxu0 0
      %2081 = vmatpush1.bf16.msra.mxu0 %v2067
      %2082 = vmatprep.subr.bf16.mxu0 0
      %2083 = vmatpush1.bf16.msra.mxu0 %v2068
      %2084 = vmatprep.subr.bf16.mxu0 0
      %2085 = vmatpush1.bf16.msra.mxu0 0
      %2086 = vmatprep.subr.bf16.mxu0 0
      %2087 = vmatpush1.bf16.msra.mxu0 0
      %2088 = vmatprep.subr.bf16.mxu0 0
      %2089 = vmatpush1.bf16.msra.mxu0 0
      %2090 = vmatprep.subr.bf16.mxu0 0
      %2091 = vmatpush1.bf16.msra.mxu0 0
      %2092 = vmatprep.subr.bf16.mxu0 0
      %2093 = vmatpush1.bf16.msra.mxu0 0
      %2094 = vmatprep.subr.bf16.mxu0 0
      %2095 = vmatpush1.bf16.msra.mxu0 0
      %2096 = vmatprep.subr.bf16.mxu0 0
      %2097 = vmatpush1.bf16.msra.mxu0 0
      %2098 = vmatprep.subr.bf16.mxu0 0
      %2099 = vmatpush1.bf16.msra.mxu0 0
      %2100 = vmatprep.subr.bf16.mxu0 0
      %2101 = vmatpush1.bf16.msra.mxu0 0
      %2102 = vmatprep.subr.bf16.mxu0 0
      %2103 = vmatpush1.bf16.msra.mxu0 0
      %2104 = vmatprep.subr.bf16.mxu0 0
      %2105 = vmatpush1.bf16.msra.mxu0 0
      %2106 = vmatprep.subr.bf16.mxu0 0
      %2107 = vmatpush1.bf16.msra.mxu0 0
      %2108 = vmatprep.subr.bf16.mxu0 0
      %2109 = vmatpush1.bf16.msra.mxu0 0
      %2110 = vmatprep.subr.bf16.mxu0 0
      %2111 = vmatpush1.bf16.msra.mxu0 0
      %2112 = vmatprep.mubr.bf16.mxu0 0
      %2113 = vmatmul.mubr.bf16.gmra.mrb[0].mxu0 %v2072
      %v2114 = vpop.f32.mrb[0].mxu0
      %v2115 = vadd.f32 0.0, %v2114
      %v2116 = vpop.f32.mrb[0].mxu0
      %v2117 = vpop.f32.mrb[0].mxu0
      %v2118 = vadd.f32 0.0, %v2117
      %v2119 = vpop.f32.mrb[0].mxu0
      %2120 = vmatprep.mubr.bf16.mxu0 0
      %2121 = vmatmul.mubr.bf16.gmra.mrb[0].mxu0 %v2075
      %v2122 = vpop.f32.mrb[0].mxu0
      %v2123 = vadd.f32 0.0, %v2122
      %v2124 = vpop.f32.mrb[0].mxu0
      %v2125 = vpop.f32.mrb[0].mxu0
      %v2126 = vadd.f32 0.0, %v2125
      %v2127 = vpop.f32.mrb[0].mxu0
      %2128 = vmatprep.mubr.bf16.mxu0 0
      %2129 = vmatmul.mubr.bf16.gmra.mrb[0].mxu0 %v2078
      %v2130 = vpop.f32.mrb[0].mxu0
      %v2131 = vadd.f32 0.0, %v2130
      %v2132 = vpop.f32.mrb[0].mxu0
      %v2133 = vpop.f32.mrb[0].mxu0
      %v2134 = vadd.f32 0.0, %v2133
      %v2135 = vpop.f32.mrb[0].mxu0
      %2136 = vdwg.mxu0
      %v2137 = vadd.f32 %v2028, %v2115
      %v2138 = vadd.f32 %v2029, %v2118
      %v2139 = vadd.f32 %v2030, %v2123
      %v2140 = vadd.f32 %v2031, %v2126
      %v2141 = vadd.f32 %v2032, %v2131
      %v2142 = vadd.f32 %v2033, %v2134
      %s2143 = scalar_lea.vmem %s3, 96
      %v2144 = vld [vmem:[%s2143] sm:$0xf]
      %v2145 = vld [vmem:[%s2143 + $0x4] sm:$0xf]
      %v2146 = vld [vmem:[%s2143 + $0x8] sm:$0xf]
      %v2147 = vld [vmem:[%s2143 + $0xc] sm:$0xf]
      %v2148 = vld [vmem:[%s2143 + $0x10] sm:$0xf]
      %v2149 = vld [vmem:[%s2143 + $0x14] sm:$0xf]
      %v2156 = vunpack.c.l.b16 %v2144
      %v2157 = vunpack.c.l.b16 %v2145
      %v2158 = vunpack.c.l.b16 %v2146
      %v2159 = vunpack.c.l.b16 %v2147
      %v2160 = vunpack.c.l.b16 %v2148
      %v2161 = vunpack.c.l.b16 %v2149
      %v2162 = vpack.c.b16 %v2157, %v2156
      %v2163 = vpack.c.b16 %v2159, %v2158
      %v2164 = vpack.c.b16 %v2161, %v2160
      %2165 = vrot.lane.b32.xlu0 %v1735, 112
      %v2166 = vpop.permute.xlu0 %2165
      %2167 = vrot.lane.b32.xlu0 %v1743, 112
      %v2168 = vpop.permute.xlu0 %2167
      %v2172 = vsel %vm1786, %v2162, 0
      %v2175 = vsel %vm1786, %v2163, 0
      %v2178 = vsel %vm1786, %v2164, 0
      %2180 = vmatprep.subr.bf16.mxu0 0
      %2181 = vmatpush1.bf16.msra.mxu0 %v2166
      %2182 = vmatprep.subr.bf16.mxu0 0
      %2183 = vmatpush1.bf16.msra.mxu0 %v2168
      %2184 = vmatprep.subr.bf16.mxu0 0
      %2185 = vmatpush1.bf16.msra.mxu0 0
      %2186 = vmatprep.subr.bf16.mxu0 0
      %2187 = vmatpush1.bf16.msra.mxu0 0
      %2188 = vmatprep.subr.bf16.mxu0 0
      %2189 = vmatpush1.bf16.msra.mxu0 0
      %2190 = vmatprep.subr.bf16.mxu0 0
      %2191 = vmatpush1.bf16.msra.mxu0 0
      %2192 = vmatprep.subr.bf16.mxu0 0
      %2193 = vmatpush1.bf16.msra.mxu0 0
      %2194 = vmatprep.subr.bf16.mxu0 0
      %2195 = vmatpush1.bf16.msra.mxu0 0
      %2196 = vmatprep.subr.bf16.mxu0 0
      %2197 = vmatpush1.bf16.msra.mxu0 0
      %2198 = vmatprep.subr.bf16.mxu0 0
      %2199 = vmatpush1.bf16.msra.mxu0 0
      %2200 = vmatprep.subr.bf16.mxu0 0
      %2201 = vmatpush1.bf16.msra.mxu0 0
      %2202 = vmatprep.subr.bf16.mxu0 0
      %2203 = vmatpush1.bf16.msra.mxu0 0
      %2204 = vmatprep.subr.bf16.mxu0 0
      %2205 = vmatpush1.bf16.msra.mxu0 0
      %2206 = vmatprep.subr.bf16.mxu0 0
      %2207 = vmatpush1.bf16.msra.mxu0 0
      %2208 = vmatprep.subr.bf16.mxu0 0
      %2209 = vmatpush1.bf16.msra.mxu0 0
      %2210 = vmatprep.subr.bf16.mxu0 0
      %2211 = vmatpush1.bf16.msra.mxu0 0
      %2212 = vmatprep.mubr.bf16.mxu0 0
      %2213 = vmatmul.mubr.bf16.gmra.mrb[0].mxu0 %v2172
      %v2214 = vpop.f32.mrb[0].mxu0
      %v2215 = vadd.f32 0.0, %v2214
      %v2216 = vpop.f32.mrb[0].mxu0
      %v2217 = vpop.f32.mrb[0].mxu0
      %v2218 = vadd.f32 0.0, %v2217
      %v2219 = vpop.f32.mrb[0].mxu0
      %2220 = vmatprep.mubr.bf16.mxu0 0
      %2221 = vmatmul.mubr.bf16.gmra.mrb[0].mxu0 %v2175
      %v2222 = vpop.f32.mrb[0].mxu0
      %v2223 = vadd.f32 0.0, %v2222
      %v2224 = vpop.f32.mrb[0].mxu0
      %v2225 = vpop.f32.mrb[0].mxu0
      %v2226 = vadd.f32 0.0, %v2225
      %v2227 = vpop.f32.mrb[0].mxu0
      %2228 = vmatprep.mubr.bf16.mxu0 0
      %2229 = vmatmul.mubr.bf16.gmra.mrb[0].mxu0 %v2178
      %v2230 = vpop.f32.mrb[0].mxu0
      %v2231 = vadd.f32 0.0, %v2230
      %v2232 = vpop.f32.mrb[0].mxu0
      %v2233 = vpop.f32.mrb[0].mxu0
      %v2234 = vadd.f32 0.0, %v2233
      %v2235 = vpop.f32.mrb[0].mxu0
      %2236 = vdwg.mxu0
      %v2237 = vadd.f32 %v2137, %v2215
      %v2238 = vadd.f32 %v2138, %v2218
      %v2239 = vadd.f32 %v2139, %v2223
      %v2240 = vadd.f32 %v2140, %v2226
      %v2241 = vadd.f32 %v2141, %v2231
      %v2242 = vadd.f32 %v2142, %v2234
      %s2243 = scalar_lea.vmem %s3, 120
      %v2244 = vld [vmem:[%s2243] sm:$0xf]
      %v2245 = vld [vmem:[%s2243 + $0x4] sm:$0xf]
      %v2246 = vld [vmem:[%s2243 + $0x8] sm:$0xf]
      %v2247 = vld [vmem:[%s2243 + $0xc] sm:$0xf]
      %v2248 = vld [vmem:[%s2243 + $0x10] sm:$0xf]
      %v2249 = vld [vmem:[%s2243 + $0x14] sm:$0xf]
      %v2256 = vunpack.c.l.b16 %v2244
      %v2257 = vunpack.c.l.b16 %v2245
      %v2258 = vunpack.c.l.b16 %v2246
      %v2259 = vunpack.c.l.b16 %v2247
      %v2260 = vunpack.c.l.b16 %v2248
      %v2261 = vunpack.c.l.b16 %v2249
      %v2262 = vpack.c.b16 %v2257, %v2256
      %v2263 = vpack.c.b16 %v2259, %v2258
      %v2264 = vpack.c.b16 %v2261, %v2260
      %2265 = vrot.lane.b32.xlu0 %v1735, 76
      %v2266 = vpop.permute.xlu0 %2265
      %2267 = vrot.lane.b32.xlu0 %v1743, 76
      %v2268 = vpop.permute.xlu0 %2267
      %v2272 = vsel %vm1786, %v2262, 0
      %v2275 = vsel %vm1786, %v2263, 0
      %v2278 = vsel %vm1786, %v2264, 0
      %2280 = vmatprep.subr.bf16.mxu0 0
      %2281 = vmatpush1.bf16.msra.mxu0 %v2266
      %2282 = vmatprep.subr.bf16.mxu0 0
      %2283 = vmatpush1.bf16.msra.mxu0 %v2268
      %2284 = vmatprep.subr.bf16.mxu0 0
      %2285 = vmatpush1.bf16.msra.mxu0 0
      %2286 = vmatprep.subr.bf16.mxu0 0
      %2287 = vmatpush1.bf16.msra.mxu0 0
      %2288 = vmatprep.subr.bf16.mxu0 0
      %2289 = vmatpush1.bf16.msra.mxu0 0
      %2290 = vmatprep.subr.bf16.mxu0 0
      %2291 = vmatpush1.bf16.msra.mxu0 0
      %2292 = vmatprep.subr.bf16.mxu0 0
      %2293 = vmatpush1.bf16.msra.mxu0 0
      %2294 = vmatprep.subr.bf16.mxu0 0
      %2295 = vmatpush1.bf16.msra.mxu0 0
      %2296 = vmatprep.subr.bf16.mxu0 0
      %2297 = vmatpush1.bf16.msra.mxu0 0
      %2298 = vmatprep.subr.bf16.mxu0 0
      %2299 = vmatpush1.bf16.msra.mxu0 0
      %2300 = vmatprep.subr.bf16.mxu0 0
      %2301 = vmatpush1.bf16.msra.mxu0 0
      %2302 = vmatprep.subr.bf16.mxu0 0
      %2303 = vmatpush1.bf16.msra.mxu0 0
      %2304 = vmatprep.subr.bf16.mxu0 0
      %2305 = vmatpush1.bf16.msra.mxu0 0
      %2306 = vmatprep.subr.bf16.mxu0 0
      %2307 = vmatpush1.bf16.msra.mxu0 0
      %2308 = vmatprep.subr.bf16.mxu0 0
      %2309 = vmatpush1.bf16.msra.mxu0 0
      %2310 = vmatprep.subr.bf16.mxu0 0
      %2311 = vmatpush1.bf16.msra.mxu0 0
      %2312 = vmatprep.mubr.bf16.mxu0 0
      %2313 = vmatmul.mubr.bf16.gmra.mrb[0].mxu0 %v2272
      %v2314 = vpop.f32.mrb[0].mxu0
      %v2315 = vadd.f32 0.0, %v2314
      %v2316 = vpop.f32.mrb[0].mxu0
      %v2317 = vpop.f32.mrb[0].mxu0
      %v2318 = vadd.f32 0.0, %v2317
      %v2319 = vpop.f32.mrb[0].mxu0
      %2320 = vmatprep.mubr.bf16.mxu0 0
      %2321 = vmatmul.mubr.bf16.gmra.mrb[0].mxu0 %v2275
      %v2322 = vpop.f32.mrb[0].mxu0
      %v2323 = vadd.f32 0.0, %v2322
      %v2324 = vpop.f32.mrb[0].mxu0
      %v2325 = vpop.f32.mrb[0].mxu0
      %v2326 = vadd.f32 0.0, %v2325
      %v2327 = vpop.f32.mrb[0].mxu0
      %2328 = vmatprep.mubr.bf16.mxu0 0
      %2329 = vmatmul.mubr.bf16.gmra.mrb[0].mxu0 %v2278
      %v2330 = vpop.f32.mrb[0].mxu0
      %v2331 = vadd.f32 0.0, %v2330
      %v2332 = vpop.f32.mrb[0].mxu0
      %v2333 = vpop.f32.mrb[0].mxu0
      %v2334 = vadd.f32 0.0, %v2333
      %v2335 = vpop.f32.mrb[0].mxu0
      %2336 = vdwg.mxu0
      %v2337 = vadd.f32 %v2237, %v2315
      %v2338 = vadd.f32 %v2238, %v2318
      %v2339 = vadd.f32 %v2239, %v2323
      %v2340 = vadd.f32 %v2240, %v2326
      %v2341 = vadd.f32 %v2241, %v2331
      %v2342 = vadd.f32 %v2242, %v2334
      %s2343 = scalar_lea.vmem %s3, 144
      %v2344 = vld [vmem:[%s2343] sm:$0xf]
      %v2345 = vld [vmem:[%s2343 + $0x4] sm:$0xf]
      %v2346 = vld [vmem:[%s2343 + $0x8] sm:$0xf]
      %v2347 = vld [vmem:[%s2343 + $0xc] sm:$0xf]
      %v2348 = vld [vmem:[%s2343 + $0x10] sm:$0xf]
      %v2349 = vld [vmem:[%s2343 + $0x14] sm:$0xf]
      %v2356 = vunpack.c.l.b16 %v2344
      %v2357 = vunpack.c.l.b16 %v2345
      %v2358 = vunpack.c.l.b16 %v2346
      %v2359 = vunpack.c.l.b16 %v2347
      %v2360 = vunpack.c.l.b16 %v2348
      %v2361 = vunpack.c.l.b16 %v2349
      %v2362 = vpack.c.b16 %v2357, %v2356
      %v2363 = vpack.c.b16 %v2359, %v2358
      %v2364 = vpack.c.b16 %v2361, %v2360
      %2365 = vrot.lane.b32.xlu0 %v1735, 40
      %v2366 = vpop.permute.xlu0 %2365
      %2367 = vrot.lane.b32.xlu0 %v1743, 40
      %v2368 = vpop.permute.xlu0 %2367
      %v2372 = vsel %vm1786, %v2362, 0
      %v2375 = vsel %vm1786, %v2363, 0
      %v2378 = vsel %vm1786, %v2364, 0
      %2380 = vmatprep.subr.bf16.mxu0 0
      %2381 = vmatpush1.bf16.msra.mxu0 %v2366
      %2382 = vmatprep.subr.bf16.mxu0 0
      %2383 = vmatpush1.bf16.msra.mxu0 %v2368
      %2384 = vmatprep.subr.bf16.mxu0 0
      %2385 = vmatpush1.bf16.msra.mxu0 0
      %2386 = vmatprep.subr.bf16.mxu0 0
      %2387 = vmatpush1.bf16.msra.mxu0 0
      %2388 = vmatprep.subr.bf16.mxu0 0
      %2389 = vmatpush1.bf16.msra.mxu0 0
      %2390 = vmatprep.subr.bf16.mxu0 0
      %2391 = vmatpush1.bf16.msra.mxu0 0
      %2392 = vmatprep.subr.bf16.mxu0 0
      %2393 = vmatpush1.bf16.msra.mxu0 0
      %2394 = vmatprep.subr.bf16.mxu0 0
      %2395 = vmatpush1.bf16.msra.mxu0 0
      %2396 = vmatprep.subr.bf16.mxu0 0
      %2397 = vmatpush1.bf16.msra.mxu0 0
      %2398 = vmatprep.subr.bf16.mxu0 0
      %2399 = vmatpush1.bf16.msra.mxu0 0
      %2400 = vmatprep.subr.bf16.mxu0 0
      %2401 = vmatpush1.bf16.msra.mxu0 0
      %2402 = vmatprep.subr.bf16.mxu0 0
      %2403 = vmatpush1.bf16.msra.mxu0 0
      %2404 = vmatprep.subr.bf16.mxu0 0
      %2405 = vmatpush1.bf16.msra.mxu0 0
      %2406 = vmatprep.subr.bf16.mxu0 0
      %2407 = vmatpush1.bf16.msra.mxu0 0
      %2408 = vmatprep.subr.bf16.mxu0 0
      %2409 = vmatpush1.bf16.msra.mxu0 0
      %2410 = vmatprep.subr.bf16.mxu0 0
      %2411 = vmatpush1.bf16.msra.mxu0 0
      %2412 = vmatprep.mubr.bf16.mxu0 0
      %2413 = vmatmul.mubr.bf16.gmra.mrb[0].mxu0 %v2372
      %v2414 = vpop.f32.mrb[0].mxu0
      %v2415 = vadd.f32 0.0, %v2414
      %v2416 = vpop.f32.mrb[0].mxu0
      %v2417 = vpop.f32.mrb[0].mxu0
      %v2418 = vadd.f32 0.0, %v2417
      %v2419 = vpop.f32.mrb[0].mxu0
      %2420 = vmatprep.mubr.bf16.mxu0 0
      %2421 = vmatmul.mubr.bf16.gmra.mrb[0].mxu0 %v2375
      %v2422 = vpop.f32.mrb[0].mxu0
      %v2423 = vadd.f32 0.0, %v2422
      %v2424 = vpop.f32.mrb[0].mxu0
      %v2425 = vpop.f32.mrb[0].mxu0
      %v2426 = vadd.f32 0.0, %v2425
      %v2427 = vpop.f32.mrb[0].mxu0
      %2428 = vmatprep.mubr.bf16.mxu0 0
      %2429 = vmatmul.mubr.bf16.gmra.mrb[0].mxu0 %v2378
      %v2430 = vpop.f32.mrb[0].mxu0
      %v2431 = vadd.f32 0.0, %v2430
      %v2432 = vpop.f32.mrb[0].mxu0
      %v2433 = vpop.f32.mrb[0].mxu0
      %v2434 = vadd.f32 0.0, %v2433
      %v2435 = vpop.f32.mrb[0].mxu0
      %2436 = vdwg.mxu0
      %v2437 = vadd.f32 %v2337, %v2415
      %v2438 = vadd.f32 %v2338, %v2418
      %v2439 = vadd.f32 %v2339, %v2423
      %v2440 = vadd.f32 %v2340, %v2426
      %v2441 = vadd.f32 %v2341, %v2431
      %v2442 = vadd.f32 %v2342, %v2434
      %s2443 = scalar_lea.vmem %s3, 168
      %v2444 = vld [vmem:[%s2443] sm:$0xf]
      %v2445 = vld [vmem:[%s2443 + $0x4] sm:$0xf]
      %v2446 = vld [vmem:[%s2443 + $0x8] sm:$0xf]
      %v2447 = vld [vmem:[%s2443 + $0xc] sm:$0xf]
      %v2448 = vld [vmem:[%s2443 + $0x10] sm:$0xf]
      %v2449 = vld [vmem:[%s2443 + $0x14] sm:$0xf]
      %v2456 = vunpack.c.l.b16 %v2444
      %v2457 = vunpack.c.l.b16 %v2445
      %v2458 = vunpack.c.l.b16 %v2446
      %v2459 = vunpack.c.l.b16 %v2447
      %v2460 = vunpack.c.l.b16 %v2448
      %v2461 = vunpack.c.l.b16 %v2449
      %v2462 = vpack.c.b16 %v2457, %v2456
      %v2463 = vpack.c.b16 %v2459, %v2458
      %v2464 = vpack.c.b16 %v2461, %v2460
      %2467 = vrot.lane.b32.xlu0 %v1735, 4
      %v2468 = vpop.permute.xlu0 %2467
      %2469 = vrot.lane.b32.xlu0 %v1736, 4
      %v2470 = vpop.permute.xlu0 %2469
      %2471 = vrot.lane.b32.xlu0 %v1743, 4
      %v2472 = vpop.permute.xlu0 %2471
      %2473 = vrot.lane.b32.xlu0 %v1744, 4
      %v2474 = vpop.permute.xlu0 %2473
      %vm2475 = vcmask 31744
      %v2476 = vsel %vm2475, %v2468, %v2470
      %v2477 = vsel %vm2475, %v2472, %v2474
      %v2481 = vsel %vm1786, %v2462, 0
      %v2484 = vsel %vm1786, %v2463, 0
      %v2487 = vsel %vm1786, %v2464, 0
      %2489 = vmatprep.subr.bf16.mxu0 0
      %2490 = vmatpush1.bf16.msra.mxu0 %v2476
      %2491 = vmatprep.subr.bf16.mxu0 0
      %2492 = vmatpush1.bf16.msra.mxu0 %v2477
      %2493 = vmatprep.subr.bf16.mxu0 0
      %2494 = vmatpush1.bf16.msra.mxu0 0
      %2495 = vmatprep.subr.bf16.mxu0 0
      %2496 = vmatpush1.bf16.msra.mxu0 0
      %2497 = vmatprep.subr.bf16.mxu0 0
      %2498 = vmatpush1.bf16.msra.mxu0 0
      %2499 = vmatprep.subr.bf16.mxu0 0
      %2500 = vmatpush1.bf16.msra.mxu0 0
      %2501 = vmatprep.subr.bf16.mxu0 0
      %2502 = vmatpush1.bf16.msra.mxu0 0
      %2503 = vmatprep.subr.bf16.mxu0 0
      %2504 = vmatpush1.bf16.msra.mxu0 0
      %2505 = vmatprep.subr.bf16.mxu0 0
      %2506 = vmatpush1.bf16.msra.mxu0 0
      %2507 = vmatprep.subr.bf16.mxu0 0
      %2508 = vmatpush1.bf16.msra.mxu0 0
      %2509 = vmatprep.subr.bf16.mxu0 0
      %2510 = vmatpush1.bf16.msra.mxu0 0
      %2511 = vmatprep.subr.bf16.mxu0 0
      %2512 = vmatpush1.bf16.msra.mxu0 0
      %2513 = vmatprep.subr.bf16.mxu0 0
      %2514 = vmatpush1.bf16.msra.mxu0 0
      %2515 = vmatprep.subr.bf16.mxu0 0
      %2516 = vmatpush1.bf16.msra.mxu0 0
      %2517 = vmatprep.subr.bf16.mxu0 0
      %2518 = vmatpush1.bf16.msra.mxu0 0
      %2519 = vmatprep.subr.bf16.mxu0 0
      %2520 = vmatpush1.bf16.msra.mxu0 0
      %2521 = vmatprep.mubr.bf16.mxu0 0
      %2522 = vmatmul.mubr.bf16.gmra.mrb[0].mxu0 %v2481
      %v2523 = vpop.f32.mrb[0].mxu0
      %v2524 = vadd.f32 0.0, %v2523
      %v2525 = vpop.f32.mrb[0].mxu0
      %v2526 = vpop.f32.mrb[0].mxu0
      %v2527 = vadd.f32 0.0, %v2526
      %v2528 = vpop.f32.mrb[0].mxu0
      %2529 = vmatprep.mubr.bf16.mxu0 0
      %2530 = vmatmul.mubr.bf16.gmra.mrb[0].mxu0 %v2484
      %v2531 = vpop.f32.mrb[0].mxu0
      %v2532 = vadd.f32 0.0, %v2531
      %v2533 = vpop.f32.mrb[0].mxu0
      %v2534 = vpop.f32.mrb[0].mxu0
      %v2535 = vadd.f32 0.0, %v2534
      %v2536 = vpop.f32.mrb[0].mxu0
      %2537 = vmatprep.mubr.bf16.mxu0 0
      %2538 = vmatmul.mubr.bf16.gmra.mrb[0].mxu0 %v2487
      %v2539 = vpop.f32.mrb[0].mxu0
      %v2540 = vadd.f32 0.0, %v2539
      %v2541 = vpop.f32.mrb[0].mxu0
      %v2542 = vpop.f32.mrb[0].mxu0
      %v2543 = vadd.f32 0.0, %v2542
      %v2544 = vpop.f32.mrb[0].mxu0
      %2545 = vdwg.mxu0
      %v2546 = vadd.f32 %v2437, %v2524
      %v2547 = vadd.f32 %v2438, %v2527
      %v2548 = vadd.f32 %v2439, %v2532
      %v2549 = vadd.f32 %v2440, %v2535
      %v2550 = vadd.f32 %v2441, %v2540
      %v2551 = vadd.f32 %v2442, %v2543
      %s2552 = scalar_lea.vmem %s3, 192
      %v2553 = vld [vmem:[%s2552] sm:$0xf]
      %v2554 = vld [vmem:[%s2552 + $0x4] sm:$0xf]
      %v2555 = vld [vmem:[%s2552 + $0x8] sm:$0xf]
      %v2556 = vld [vmem:[%s2552 + $0xc] sm:$0xf]
      %v2557 = vld [vmem:[%s2552 + $0x10] sm:$0xf]
      %v2558 = vld [vmem:[%s2552 + $0x14] sm:$0xf]
      %v2565 = vunpack.c.l.b16 %v2553
      %v2566 = vunpack.c.l.b16 %v2554
      %v2567 = vunpack.c.l.b16 %v2555
      %v2568 = vunpack.c.l.b16 %v2556
      %v2569 = vunpack.c.l.b16 %v2557
      %v2570 = vunpack.c.l.b16 %v2558
      %v2571 = vpack.c.b16 %v2566, %v2565
      %v2572 = vpack.c.b16 %v2568, %v2567
      %v2573 = vpack.c.b16 %v2570, %v2569
      %2574 = vrot.lane.b32.xlu0 %v1736, 96
      %v2575 = vpop.permute.xlu0 %2574
      %2576 = vrot.lane.b32.xlu0 %v1744, 96
      %v2577 = vpop.permute.xlu0 %2576
      %v2581 = vsel %vm1786, %v2571, 0
      %v2584 = vsel %vm1786, %v2572, 0
      %v2587 = vsel %vm1786, %v2573, 0
      %2589 = vmatprep.subr.bf16.mxu0 0
      %2590 = vmatpush1.bf16.msra.mxu0 %v2575
      %2591 = vmatprep.subr.bf16.mxu0 0
      %2592 = vmatpush1.bf16.msra.mxu0 %v2577
      %2593 = vmatprep.subr.bf16.mxu0 0
      %2594 = vmatpush1.bf16.msra.mxu0 0
      %2595 = vmatprep.subr.bf16.mxu0 0
      %2596 = vmatpush1.bf16.msra.mxu0 0
      %2597 = vmatprep.subr.bf16.mxu0 0
      %2598 = vmatpush1.bf16.msra.mxu0 0
      %2599 = vmatprep.subr.bf16.mxu0 0
      %2600 = vmatpush1.bf16.msra.mxu0 0
      %2601 = vmatprep.subr.bf16.mxu0 0
      %2602 = vmatpush1.bf16.msra.mxu0 0
      %2603 = vmatprep.subr.bf16.mxu0 0
      %2604 = vmatpush1.bf16.msra.mxu0 0
      %2605 = vmatprep.subr.bf16.mxu0 0
      %2606 = vmatpush1.bf16.msra.mxu0 0
      %2607 = vmatprep.subr.bf16.mxu0 0
      %2608 = vmatpush1.bf16.msra.mxu0 0
      %2609 = vmatprep.subr.bf16.mxu0 0
      %2610 = vmatpush1.bf16.msra.mxu0 0
      %2611 = vmatprep.subr.bf16.mxu0 0
      %2612 = vmatpush1.bf16.msra.mxu0 0
      %2613 = vmatprep.subr.bf16.mxu0 0
      %2614 = vmatpush1.bf16.msra.mxu0 0
      %2615 = vmatprep.subr.bf16.mxu0 0
      %2616 = vmatpush1.bf16.msra.mxu0 0
      %2617 = vmatprep.subr.bf16.mxu0 0
      %2618 = vmatpush1.bf16.msra.mxu0 0
      %2619 = vmatprep.subr.bf16.mxu0 0
      %2620 = vmatpush1.bf16.msra.mxu0 0
      %2621 = vmatprep.mubr.bf16.mxu0 0
      %2622 = vmatmul.mubr.bf16.gmra.mrb[0].mxu0 %v2581
      %v2623 = vpop.f32.mrb[0].mxu0
      %v2624 = vadd.f32 0.0, %v2623
      %v2625 = vpop.f32.mrb[0].mxu0
      %v2626 = vpop.f32.mrb[0].mxu0
      %v2627 = vadd.f32 0.0, %v2626
      %v2628 = vpop.f32.mrb[0].mxu0
      %2629 = vmatprep.mubr.bf16.mxu0 0
      %2630 = vmatmul.mubr.bf16.gmra.mrb[0].mxu0 %v2584
      %v2631 = vpop.f32.mrb[0].mxu0
      %v2632 = vadd.f32 0.0, %v2631
      %v2633 = vpop.f32.mrb[0].mxu0
      %v2634 = vpop.f32.mrb[0].mxu0
      %v2635 = vadd.f32 0.0, %v2634
      %v2636 = vpop.f32.mrb[0].mxu0
      %2637 = vmatprep.mubr.bf16.mxu0 0
      %2638 = vmatmul.mubr.bf16.gmra.mrb[0].mxu0 %v2587
      %v2639 = vpop.f32.mrb[0].mxu0
      %v2640 = vadd.f32 0.0, %v2639
      %v2641 = vpop.f32.mrb[0].mxu0
      %v2642 = vpop.f32.mrb[0].mxu0
      %v2643 = vadd.f32 0.0, %v2642
      %v2644 = vpop.f32.mrb[0].mxu0
      %2645 = vdwg.mxu0
      %v2646 = vadd.f32 %v2546, %v2624
      %v2647 = vadd.f32 %v2547, %v2627
      %v2648 = vadd.f32 %v2548, %v2632
      %v2649 = vadd.f32 %v2549, %v2635
      %v2650 = vadd.f32 %v2550, %v2640
      %v2651 = vadd.f32 %v2551, %v2643
      %s2652 = scalar_lea.vmem %s3, 216
      %v2653 = vld [vmem:[%s2652] sm:$0xf]
      %v2654 = vld [vmem:[%s2652 + $0x4] sm:$0xf]
      %v2655 = vld [vmem:[%s2652 + $0x8] sm:$0xf]
      %v2656 = vld [vmem:[%s2652 + $0xc] sm:$0xf]
      %v2657 = vld [vmem:[%s2652 + $0x10] sm:$0xf]
      %v2658 = vld [vmem:[%s2652 + $0x14] sm:$0xf]
      %v2665 = vunpack.c.l.b16 %v2653
      %v2666 = vunpack.c.l.b16 %v2654
      %v2667 = vunpack.c.l.b16 %v2655
      %v2668 = vunpack.c.l.b16 %v2656
      %v2669 = vunpack.c.l.b16 %v2657
      %v2670 = vunpack.c.l.b16 %v2658
      %v2671 = vpack.c.b16 %v2666, %v2665
      %v2672 = vpack.c.b16 %v2668, %v2667
      %v2673 = vpack.c.b16 %v2670, %v2669
      %2674 = vrot.lane.b32.xlu0 %v1736, 60
      %v2675 = vpop.permute.xlu0 %2674
      %2676 = vrot.lane.b32.xlu0 %v1744, 60
      %v2677 = vpop.permute.xlu0 %2676
      %v2681 = vsel %vm1786, %v2671, 0
      %v2684 = vsel %vm1786, %v2672, 0
      %v2687 = vsel %vm1786, %v2673, 0
      %2689 = vmatprep.subr.bf16.mxu0 0
      %2690 = vmatpush1.bf16.msra.mxu0 %v2675
      %2691 = vmatprep.subr.bf16.mxu0 0
      %2692 = vmatpush1.bf16.msra.mxu0 %v2677
      %2693 = vmatprep.subr.bf16.mxu0 0
      %2694 = vmatpush1.bf16.msra.mxu0 0
      %2695 = vmatprep.subr.bf16.mxu0 0
      %2696 = vmatpush1.bf16.msra.mxu0 0
      %2697 = vmatprep.subr.bf16.mxu0 0
      %2698 = vmatpush1.bf16.msra.mxu0 0
      %2699 = vmatprep.subr.bf16.mxu0 0
      %2700 = vmatpush1.bf16.msra.mxu0 0
      %2701 = vmatprep.subr.bf16.mxu0 0
      %2702 = vmatpush1.bf16.msra.mxu0 0
      %2703 = vmatprep.subr.bf16.mxu0 0
      %2704 = vmatpush1.bf16.msra.mxu0 0
      %2705 = vmatprep.subr.bf16.mxu0 0
      %2706 = vmatpush1.bf16.msra.mxu0 0
      %2707 = vmatprep.subr.bf16.mxu0 0
      %2708 = vmatpush1.bf16.msra.mxu0 0
      %2709 = vmatprep.subr.bf16.mxu0 0
      %2710 = vmatpush1.bf16.msra.mxu0 0
      %2711 = vmatprep.subr.bf16.mxu0 0
      %2712 = vmatpush1.bf16.msra.mxu0 0
      %2713 = vmatprep.subr.bf16.mxu0 0
      %2714 = vmatpush1.bf16.msra.mxu0 0
      %2715 = vmatprep.subr.bf16.mxu0 0
      %2716 = vmatpush1.bf16.msra.mxu0 0
      %2717 = vmatprep.subr.bf16.mxu0 0
      %2718 = vmatpush1.bf16.msra.mxu0 0
      %2719 = vmatprep.subr.bf16.mxu0 0
      %2720 = vmatpush1.bf16.msra.mxu0 0
      %2721 = vmatprep.mubr.bf16.mxu0 0
      %2722 = vmatmul.mubr.bf16.gmra.mrb[0].mxu0 %v2681
      %v2723 = vpop.f32.mrb[0].mxu0
      %v2724 = vadd.f32 0.0, %v2723
      %v2725 = vpop.f32.mrb[0].mxu0
      %v2726 = vpop.f32.mrb[0].mxu0
      %v2727 = vadd.f32 0.0, %v2726
      %v2728 = vpop.f32.mrb[0].mxu0
      %2729 = vmatprep.mubr.bf16.mxu0 0
      %2730 = vmatmul.mubr.bf16.gmra.mrb[0].mxu0 %v2684
      %v2731 = vpop.f32.mrb[0].mxu0
      %v2732 = vadd.f32 0.0, %v2731
      %v2733 = vpop.f32.mrb[0].mxu0
      %v2734 = vpop.f32.mrb[0].mxu0
      %v2735 = vadd.f32 0.0, %v2734
      %v2736 = vpop.f32.mrb[0].mxu0
      %2737 = vmatprep.mubr.bf16.mxu0 0
      %2738 = vmatmul.mubr.bf16.gmra.mrb[0].mxu0 %v2687
      %v2739 = vpop.f32.mrb[0].mxu0
      %v2740 = vadd.f32 0.0, %v2739
      %v2741 = vpop.f32.mrb[0].mxu0
      %v2742 = vpop.f32.mrb[0].mxu0
      %v2743 = vadd.f32 0.0, %v2742
      %v2744 = vpop.f32.mrb[0].mxu0
      %2745 = vdwg.mxu0
      %v2746 = vadd.f32 %v2646, %v2724
      %v2747 = vadd.f32 %v2647, %v2727
      %v2748 = vadd.f32 %v2648, %v2732
      %v2749 = vadd.f32 %v2649, %v2735
      %v2750 = vadd.f32 %v2650, %v2740
      %v2751 = vadd.f32 %v2651, %v2743
      %s2752 = scalar_lea.vmem %s3, 240
      %v2753 = vld [vmem:[%s2752] sm:$0xf]
      %v2754 = vld [vmem:[%s2752 + $0x4] sm:$0xf]
      %v2755 = vld [vmem:[%s2752 + $0x8] sm:$0xf]
      %v2756 = vld [vmem:[%s2752 + $0xc] sm:$0xf]
      %v2757 = vld [vmem:[%s2752 + $0x10] sm:$0xf]
      %v2758 = vld [vmem:[%s2752 + $0x14] sm:$0xf]
      %v2765 = vunpack.c.l.b16 %v2753
      %v2766 = vunpack.c.l.b16 %v2754
      %v2767 = vunpack.c.l.b16 %v2755
      %v2768 = vunpack.c.l.b16 %v2756
      %v2769 = vunpack.c.l.b16 %v2757
      %v2770 = vunpack.c.l.b16 %v2758
      %v2771 = vpack.c.b16 %v2766, %v2765
      %v2772 = vpack.c.b16 %v2768, %v2767
      %v2773 = vpack.c.b16 %v2770, %v2769
      %2776 = vrot.lane.b32.xlu0 %v1736, 24
      %v2777 = vpop.permute.xlu0 %2776
      %2778 = vrot.lane.b32.xlu0 %v1737, 24
      %v2779 = vpop.permute.xlu0 %2778
      %2780 = vrot.lane.b32.xlu0 %v1744, 24
      %v2781 = vpop.permute.xlu0 %2780
      %2782 = vrot.lane.b32.xlu0 %v1745, 24
      %v2783 = vpop.permute.xlu0 %2782
      %vm2784 = vcmask 195584
      %v2785 = vsel %vm2784, %v2777, %v2779
      %v2786 = vsel %vm2784, %v2781, %v2783
      %v2790 = vsel %vm1786, %v2771, 0
      %v2793 = vsel %vm1786, %v2772, 0
      %v2796 = vsel %vm1786, %v2773, 0
      %2798 = vmatprep.subr.bf16.mxu0 0
      %2799 = vmatpush1.bf16.msra.mxu0 %v2785
      %2800 = vmatprep.subr.bf16.mxu0 0
      %2801 = vmatpush1.bf16.msra.mxu0 %v2786
      %2802 = vmatprep.subr.bf16.mxu0 0
      %2803 = vmatpush1.bf16.msra.mxu0 0
      %2804 = vmatprep.subr.bf16.mxu0 0
      %2805 = vmatpush1.bf16.msra.mxu0 0
      %2806 = vmatprep.subr.bf16.mxu0 0
      %2807 = vmatpush1.bf16.msra.mxu0 0
      %2808 = vmatprep.subr.bf16.mxu0 0
      %2809 = vmatpush1.bf16.msra.mxu0 0
      %2810 = vmatprep.subr.bf16.mxu0 0
      %2811 = vmatpush1.bf16.msra.mxu0 0
      %2812 = vmatprep.subr.bf16.mxu0 0
      %2813 = vmatpush1.bf16.msra.mxu0 0
      %2814 = vmatprep.subr.bf16.mxu0 0
      %2815 = vmatpush1.bf16.msra.mxu0 0
      %2816 = vmatprep.subr.bf16.mxu0 0
      %2817 = vmatpush1.bf16.msra.mxu0 0
      %2818 = vmatprep.subr.bf16.mxu0 0
      %2819 = vmatpush1.bf16.msra.mxu0 0
      %2820 = vmatprep.subr.bf16.mxu0 0
      %2821 = vmatpush1.bf16.msra.mxu0 0
      %2822 = vmatprep.subr.bf16.mxu0 0
      %2823 = vmatpush1.bf16.msra.mxu0 0
      %2824 = vmatprep.subr.bf16.mxu0 0
      %2825 = vmatpush1.bf16.msra.mxu0 0
      %2826 = vmatprep.subr.bf16.mxu0 0
      %2827 = vmatpush1.bf16.msra.mxu0 0
      %2828 = vmatprep.subr.bf16.mxu0 0
      %2829 = vmatpush1.bf16.msra.mxu0 0
      %2830 = vmatprep.mubr.bf16.mxu0 0
      %2831 = vmatmul.mubr.bf16.gmra.mrb[0].mxu0 %v2790
      %v2832 = vpop.f32.mrb[0].mxu0
      %v2833 = vadd.f32 0.0, %v2832
      %v2834 = vpop.f32.mrb[0].mxu0
      %v2835 = vpop.f32.mrb[0].mxu0
      %v2836 = vadd.f32 0.0, %v2835
      %v2837 = vpop.f32.mrb[0].mxu0
      %2838 = vmatprep.mubr.bf16.mxu0 0
      %2839 = vmatmul.mubr.bf16.gmra.mrb[0].mxu0 %v2793
      %v2840 = vpop.f32.mrb[0].mxu0
      %v2841 = vadd.f32 0.0, %v2840
      %v2842 = vpop.f32.mrb[0].mxu0
      %v2843 = vpop.f32.mrb[0].mxu0
      %v2844 = vadd.f32 0.0, %v2843
      %v2845 = vpop.f32.mrb[0].mxu0
      %2846 = vmatprep.mubr.bf16.mxu0 0
      %2847 = vmatmul.mubr.bf16.gmra.mrb[0].mxu0 %v2796
      %v2848 = vpop.f32.mrb[0].mxu0
      %v2849 = vadd.f32 0.0, %v2848
      %v2850 = vpop.f32.mrb[0].mxu0
      %v2851 = vpop.f32.mrb[0].mxu0
      %v2852 = vadd.f32 0.0, %v2851
      %v2853 = vpop.f32.mrb[0].mxu0
      %2854 = vdwg.mxu0
      %v2855 = vadd.f32 %v2746, %v2833
      %v2856 = vadd.f32 %v2747, %v2836
      %v2857 = vadd.f32 %v2748, %v2841
      %v2858 = vadd.f32 %v2749, %v2844
      %v2859 = vadd.f32 %v2750, %v2849
      %v2860 = vadd.f32 %v2751, %v2852
      %s2861 = scalar_lea.vmem %s3, 264
      %v2862 = vld [vmem:[%s2861] sm:$0xf]
      %v2863 = vld [vmem:[%s2861 + $0x4] sm:$0xf]
      %v2864 = vld [vmem:[%s2861 + $0x8] sm:$0xf]
      %v2865 = vld [vmem:[%s2861 + $0xc] sm:$0xf]
      %v2866 = vld [vmem:[%s2861 + $0x10] sm:$0xf]
      %v2867 = vld [vmem:[%s2861 + $0x14] sm:$0xf]
      %v2874 = vunpack.c.l.b16 %v2862
      %v2875 = vunpack.c.l.b16 %v2863
      %v2876 = vunpack.c.l.b16 %v2864
      %v2877 = vunpack.c.l.b16 %v2865
      %v2878 = vunpack.c.l.b16 %v2866
      %v2879 = vunpack.c.l.b16 %v2867
      %v2880 = vpack.c.b16 %v2875, %v2874
      %v2881 = vpack.c.b16 %v2877, %v2876
      %v2882 = vpack.c.b16 %v2879, %v2878
      %2883 = vrot.lane.b32.xlu0 %v1737, 116
      %v2884 = vpop.permute.xlu0 %2883
      %2885 = vrot.lane.b32.xlu0 %v1745, 116
      %v2886 = vpop.permute.xlu0 %2885
      %v2890 = vsel %vm1786, %v2880, 0
      %v2893 = vsel %vm1786, %v2881, 0
      %v2896 = vsel %vm1786, %v2882, 0
      %2898 = vmatprep.subr.bf16.mxu0 0
      %2899 = vmatpush1.bf16.msra.mxu0 %v2884
      %2900 = vmatprep.subr.bf16.mxu0 0
      %2901 = vmatpush1.bf16.msra.mxu0 %v2886
      %2902 = vmatprep.subr.bf16.mxu0 0
      %2903 = vmatpush1.bf16.msra.mxu0 0
      %2904 = vmatprep.subr.bf16.mxu0 0
      %2905 = vmatpush1.bf16.msra.mxu0 0
      %2906 = vmatprep.subr.bf16.mxu0 0
      %2907 = vmatpush1.bf16.msra.mxu0 0
      %2908 = vmatprep.subr.bf16.mxu0 0
      %2909 = vmatpush1.bf16.msra.mxu0 0
      %2910 = vmatprep.subr.bf16.mxu0 0
      %2911 = vmatpush1.bf16.msra.mxu0 0
      %2912 = vmatprep.subr.bf16.mxu0 0
      %2913 = vmatpush1.bf16.msra.mxu0 0
      %2914 = vmatprep.subr.bf16.mxu0 0
      %2915 = vmatpush1.bf16.msra.mxu0 0
      %2916 = vmatprep.subr.bf16.mxu0 0
      %2917 = vmatpush1.bf16.msra.mxu0 0
      %2918 = vmatprep.subr.bf16.mxu0 0
      %2919 = vmatpush1.bf16.msra.mxu0 0
      %2920 = vmatprep.subr.bf16.mxu0 0
      %2921 = vmatpush1.bf16.msra.mxu0 0
      %2922 = vmatprep.subr.bf16.mxu0 0
      %2923 = vmatpush1.bf16.msra.mxu0 0
      %2924 = vmatprep.subr.bf16.mxu0 0
      %2925 = vmatpush1.bf16.msra.mxu0 0
      %2926 = vmatprep.subr.bf16.mxu0 0
      %2927 = vmatpush1.bf16.msra.mxu0 0
      %2928 = vmatprep.subr.bf16.mxu0 0
      %2929 = vmatpush1.bf16.msra.mxu0 0
      %2930 = vmatprep.mubr.bf16.mxu0 0
      %2931 = vmatmul.mubr.bf16.gmra.mrb[0].mxu0 %v2890
      %v2932 = vpop.f32.mrb[0].mxu0
      %v2933 = vadd.f32 0.0, %v2932
      %v2934 = vpop.f32.mrb[0].mxu0
      %v2935 = vpop.f32.mrb[0].mxu0
      %v2936 = vadd.f32 0.0, %v2935
      %v2937 = vpop.f32.mrb[0].mxu0
      %2938 = vmatprep.mubr.bf16.mxu0 0
      %2939 = vmatmul.mubr.bf16.gmra.mrb[0].mxu0 %v2893
      %v2940 = vpop.f32.mrb[0].mxu0
      %v2941 = vadd.f32 0.0, %v2940
      %v2942 = vpop.f32.mrb[0].mxu0
      %v2943 = vpop.f32.mrb[0].mxu0
      %v2944 = vadd.f32 0.0, %v2943
      %v2945 = vpop.f32.mrb[0].mxu0
      %2946 = vmatprep.mubr.bf16.mxu0 0
      %2947 = vmatmul.mubr.bf16.gmra.mrb[0].mxu0 %v2896
      %v2948 = vpop.f32.mrb[0].mxu0
      %v2949 = vadd.f32 0.0, %v2948
      %v2950 = vpop.f32.mrb[0].mxu0
      %v2951 = vpop.f32.mrb[0].mxu0
      %v2952 = vadd.f32 0.0, %v2951
      %v2953 = vpop.f32.mrb[0].mxu0
      %2954 = vdwg.mxu0
      %v2955 = vadd.f32 %v2855, %v2933
      %v2956 = vadd.f32 %v2856, %v2936
      %v2957 = vadd.f32 %v2857, %v2941
      %v2958 = vadd.f32 %v2858, %v2944
      %v2959 = vadd.f32 %v2859, %v2949
      %v2960 = vadd.f32 %v2860, %v2952
      %s2961 = scalar_lea.vmem %s3, 288
      %v2962 = vld [vmem:[%s2961] sm:$0xf]
      %v2963 = vld [vmem:[%s2961 + $0x4] sm:$0xf]
      %v2964 = vld [vmem:[%s2961 + $0x8] sm:$0xf]
      %v2965 = vld [vmem:[%s2961 + $0xc] sm:$0xf]
      %v2966 = vld [vmem:[%s2961 + $0x10] sm:$0xf]
      %v2967 = vld [vmem:[%s2961 + $0x14] sm:$0xf]
      %v2974 = vunpack.c.l.b16 %v2962
      %v2975 = vunpack.c.l.b16 %v2963
      %v2976 = vunpack.c.l.b16 %v2964
      %v2977 = vunpack.c.l.b16 %v2965
      %v2978 = vunpack.c.l.b16 %v2966
      %v2979 = vunpack.c.l.b16 %v2967
      %v2980 = vpack.c.b16 %v2975, %v2974
      %v2981 = vpack.c.b16 %v2977, %v2976
      %v2982 = vpack.c.b16 %v2979, %v2978
      %2983 = vrot.lane.b32.xlu0 %v1737, 80
      %v2984 = vpop.permute.xlu0 %2983
      %2985 = vrot.lane.b32.xlu0 %v1745, 80
      %v2986 = vpop.permute.xlu0 %2985
      %v2990 = vsel %vm1786, %v2980, 0
      %v2993 = vsel %vm1786, %v2981, 0
      %v2996 = vsel %vm1786, %v2982, 0
      %2998 = vmatprep.subr.bf16.mxu0 0
      %2999 = vmatpush1.bf16.msra.mxu0 %v2984
      %3000 = vmatprep.subr.bf16.mxu0 0
      %3001 = vmatpush1.bf16.msra.mxu0 %v2986
      %3002 = vmatprep.subr.bf16.mxu0 0
      %3003 = vmatpush1.bf16.msra.mxu0 0
      %3004 = vmatprep.subr.bf16.mxu0 0
      %3005 = vmatpush1.bf16.msra.mxu0 0
      %3006 = vmatprep.subr.bf16.mxu0 0
      %3007 = vmatpush1.bf16.msra.mxu0 0
      %3008 = vmatprep.subr.bf16.mxu0 0
      %3009 = vmatpush1.bf16.msra.mxu0 0
      %3010 = vmatprep.subr.bf16.mxu0 0
      %3011 = vmatpush1.bf16.msra.mxu0 0
      %3012 = vmatprep.subr.bf16.mxu0 0
      %3013 = vmatpush1.bf16.msra.mxu0 0
      %3014 = vmatprep.subr.bf16.mxu0 0
      %3015 = vmatpush1.bf16.msra.mxu0 0
      %3016 = vmatprep.subr.bf16.mxu0 0
      %3017 = vmatpush1.bf16.msra.mxu0 0
      %3018 = vmatprep.subr.bf16.mxu0 0
      %3019 = vmatpush1.bf16.msra.mxu0 0
      %3020 = vmatprep.subr.bf16.mxu0 0
      %3021 = vmatpush1.bf16.msra.mxu0 0
      %3022 = vmatprep.subr.bf16.mxu0 0
      %3023 = vmatpush1.bf16.msra.mxu0 0
      %3024 = vmatprep.subr.bf16.mxu0 0
      %3025 = vmatpush1.bf16.msra.mxu0 0
      %3026 = vmatprep.subr.bf16.mxu0 0
      %3027 = vmatpush1.bf16.msra.mxu0 0
      %3028 = vmatprep.subr.bf16.mxu0 0
      %3029 = vmatpush1.bf16.msra.mxu0 0
      %3030 = vmatprep.mubr.bf16.mxu0 0
      %3031 = vmatmul.mubr.bf16.gmra.mrb[0].mxu0 %v2990
      %v3032 = vpop.f32.mrb[0].mxu0
      %v3033 = vadd.f32 0.0, %v3032
      %v3034 = vpop.f32.mrb[0].mxu0
      %v3035 = vpop.f32.mrb[0].mxu0
      %v3036 = vadd.f32 0.0, %v3035
      %v3037 = vpop.f32.mrb[0].mxu0
      %3038 = vmatprep.mubr.bf16.mxu0 0
      %3039 = vmatmul.mubr.bf16.gmra.mrb[0].mxu0 %v2993
      %v3040 = vpop.f32.mrb[0].mxu0
      %v3041 = vadd.f32 0.0, %v3040
      %v3042 = vpop.f32.mrb[0].mxu0
      %v3043 = vpop.f32.mrb[0].mxu0
      %v3044 = vadd.f32 0.0, %v3043
      %v3045 = vpop.f32.mrb[0].mxu0
      %3046 = vmatprep.mubr.bf16.mxu0 0
      %3047 = vmatmul.mubr.bf16.gmra.mrb[0].mxu0 %v2996
      %v3048 = vpop.f32.mrb[0].mxu0
      %v3049 = vadd.f32 0.0, %v3048
      %v3050 = vpop.f32.mrb[0].mxu0
      %v3051 = vpop.f32.mrb[0].mxu0
      %v3052 = vadd.f32 0.0, %v3051
      %v3053 = vpop.f32.mrb[0].mxu0
      %3054 = vdwg.mxu0
      %v3055 = vadd.f32 %v2955, %v3033
      %v3056 = vadd.f32 %v2956, %v3036
      %v3057 = vadd.f32 %v2957, %v3041
      %v3058 = vadd.f32 %v2958, %v3044
      %v3059 = vadd.f32 %v2959, %v3049
      %v3060 = vadd.f32 %v2960, %v3052
      %s3061 = scalar_lea.vmem %s3, 312
      %v3062 = vld [vmem:[%s3061] sm:$0xf]
      %v3063 = vld [vmem:[%s3061 + $0x4] sm:$0xf]
      %v3064 = vld [vmem:[%s3061 + $0x8] sm:$0xf]
      %v3065 = vld [vmem:[%s3061 + $0xc] sm:$0xf]
      %v3066 = vld [vmem:[%s3061 + $0x10] sm:$0xf]
      %v3067 = vld [vmem:[%s3061 + $0x14] sm:$0xf]
      %v3074 = vunpack.c.l.b16 %v3062
      %v3075 = vunpack.c.l.b16 %v3063
      %v3076 = vunpack.c.l.b16 %v3064
      %v3077 = vunpack.c.l.b16 %v3065
      %v3078 = vunpack.c.l.b16 %v3066
      %v3079 = vunpack.c.l.b16 %v3067
      %v3080 = vpack.c.b16 %v3075, %v3074
      %v3081 = vpack.c.b16 %v3077, %v3076
      %v3082 = vpack.c.b16 %v3079, %v3078
      %3083 = vrot.lane.b32.xlu0 %v1737, 44
      %v3084 = vpop.permute.xlu0 %3083
      %3085 = vrot.lane.b32.xlu0 %v1745, 44
      %v3086 = vpop.permute.xlu0 %3085
      %v3090 = vsel %vm1786, %v3080, 0
      %v3093 = vsel %vm1786, %v3081, 0
      %v3096 = vsel %vm1786, %v3082, 0
      %3098 = vmatprep.subr.bf16.mxu0 0
      %3099 = vmatpush1.bf16.msra.mxu0 %v3084
      %3100 = vmatprep.subr.bf16.mxu0 0
      %3101 = vmatpush1.bf16.msra.mxu0 %v3086
      %3102 = vmatprep.subr.bf16.mxu0 0
      %3103 = vmatpush1.bf16.msra.mxu0 0
      %3104 = vmatprep.subr.bf16.mxu0 0
      %3105 = vmatpush1.bf16.msra.mxu0 0
      %3106 = vmatprep.subr.bf16.mxu0 0
      %3107 = vmatpush1.bf16.msra.mxu0 0
      %3108 = vmatprep.subr.bf16.mxu0 0
      %3109 = vmatpush1.bf16.msra.mxu0 0
      %3110 = vmatprep.subr.bf16.mxu0 0
      %3111 = vmatpush1.bf16.msra.mxu0 0
      %3112 = vmatprep.subr.bf16.mxu0 0
      %3113 = vmatpush1.bf16.msra.mxu0 0
      %3114 = vmatprep.subr.bf16.mxu0 0
      %3115 = vmatpush1.bf16.msra.mxu0 0
      %3116 = vmatprep.subr.bf16.mxu0 0
      %3117 = vmatpush1.bf16.msra.mxu0 0
      %3118 = vmatprep.subr.bf16.mxu0 0
      %3119 = vmatpush1.bf16.msra.mxu0 0
      %3120 = vmatprep.subr.bf16.mxu0 0
      %3121 = vmatpush1.bf16.msra.mxu0 0
      %3122 = vmatprep.subr.bf16.mxu0 0
      %3123 = vmatpush1.bf16.msra.mxu0 0
      %3124 = vmatprep.subr.bf16.mxu0 0
      %3125 = vmatpush1.bf16.msra.mxu0 0
      %3126 = vmatprep.subr.bf16.mxu0 0
      %3127 = vmatpush1.bf16.msra.mxu0 0
      %3128 = vmatprep.subr.bf16.mxu0 0
      %3129 = vmatpush1.bf16.msra.mxu0 0
      %3130 = vmatprep.mubr.bf16.mxu0 0
      %3131 = vmatmul.mubr.bf16.gmra.mrb[0].mxu0 %v3090
      %v3132 = vpop.f32.mrb[0].mxu0
      %v3133 = vadd.f32 0.0, %v3132
      %v3134 = vpop.f32.mrb[0].mxu0
      %v3135 = vpop.f32.mrb[0].mxu0
      %v3136 = vadd.f32 0.0, %v3135
      %v3137 = vpop.f32.mrb[0].mxu0
      %3138 = vmatprep.mubr.bf16.mxu0 0
      %3139 = vmatmul.mubr.bf16.gmra.mrb[0].mxu0 %v3093
      %v3140 = vpop.f32.mrb[0].mxu0
      %v3141 = vadd.f32 0.0, %v3140
      %v3142 = vpop.f32.mrb[0].mxu0
      %v3143 = vpop.f32.mrb[0].mxu0
      %v3144 = vadd.f32 0.0, %v3143
      %v3145 = vpop.f32.mrb[0].mxu0
      %3146 = vmatprep.mubr.bf16.mxu0 0
      %3147 = vmatmul.mubr.bf16.gmra.mrb[0].mxu0 %v3096
      %v3148 = vpop.f32.mrb[0].mxu0
      %v3149 = vadd.f32 0.0, %v3148
      %v3150 = vpop.f32.mrb[0].mxu0
      %v3151 = vpop.f32.mrb[0].mxu0
      %v3152 = vadd.f32 0.0, %v3151
      %v3153 = vpop.f32.mrb[0].mxu0
      %3154 = vdwg.mxu0
      %v3155 = vadd.f32 %v3055, %v3133
      %v3156 = vadd.f32 %v3056, %v3136
      %v3157 = vadd.f32 %v3057, %v3141
      %v3158 = vadd.f32 %v3058, %v3144
      %v3159 = vadd.f32 %v3059, %v3149
      %v3160 = vadd.f32 %v3060, %v3152
      %s3161 = scalar_lea.vmem %s3, 336
      %v3162 = vld [vmem:[%s3161] sm:$0xf]
      %v3163 = vld [vmem:[%s3161 + $0x4] sm:$0xf]
      %v3164 = vld [vmem:[%s3161 + $0x8] sm:$0xf]
      %v3165 = vld [vmem:[%s3161 + $0xc] sm:$0xf]
      %v3166 = vld [vmem:[%s3161 + $0x10] sm:$0xf]
      %v3167 = vld [vmem:[%s3161 + $0x14] sm:$0xf]
      %v3174 = vunpack.c.l.b16 %v3162
      %v3175 = vunpack.c.l.b16 %v3163
      %v3176 = vunpack.c.l.b16 %v3164
      %v3177 = vunpack.c.l.b16 %v3165
      %v3178 = vunpack.c.l.b16 %v3166
      %v3179 = vunpack.c.l.b16 %v3167
      %v3180 = vpack.c.b16 %v3175, %v3174
      %v3181 = vpack.c.b16 %v3177, %v3176
      %v3182 = vpack.c.b16 %v3179, %v3178
      %3185 = vrot.lane.b32.xlu0 %v1737, 8
      %v3186 = vpop.permute.xlu0 %3185
      %3187 = vrot.lane.b32.xlu0 %v1738, 8
      %v3188 = vpop.permute.xlu0 %3187
      %3189 = vrot.lane.b32.xlu0 %v1745, 8
      %v3190 = vpop.permute.xlu0 %3189
      %3191 = vrot.lane.b32.xlu0 %v1746, 8
      %v3192 = vpop.permute.xlu0 %3191
      %vm3193 = vcmask 64512
      %v3194 = vsel %vm3193, %v3186, %v3188
      %v3195 = vsel %vm3193, %v3190, %v3192
      %v3199 = vsel %vm1786, %v3180, 0
      %v3202 = vsel %vm1786, %v3181, 0
      %v3205 = vsel %vm1786, %v3182, 0
      %3207 = vmatprep.subr.bf16.mxu0 0
      %3208 = vmatpush1.bf16.msra.mxu0 %v3194
      %3209 = vmatprep.subr.bf16.mxu0 0
      %3210 = vmatpush1.bf16.msra.mxu0 %v3195
      %3211 = vmatprep.subr.bf16.mxu0 0
      %3212 = vmatpush1.bf16.msra.mxu0 0
      %3213 = vmatprep.subr.bf16.mxu0 0
      %3214 = vmatpush1.bf16.msra.mxu0 0
      %3215 = vmatprep.subr.bf16.mxu0 0
      %3216 = vmatpush1.bf16.msra.mxu0 0
      %3217 = vmatprep.subr.bf16.mxu0 0
      %3218 = vmatpush1.bf16.msra.mxu0 0
      %3219 = vmatprep.subr.bf16.mxu0 0
      %3220 = vmatpush1.bf16.msra.mxu0 0
      %3221 = vmatprep.subr.bf16.mxu0 0
      %3222 = vmatpush1.bf16.msra.mxu0 0
      %3223 = vmatprep.subr.bf16.mxu0 0
      %3224 = vmatpush1.bf16.msra.mxu0 0
      %3225 = vmatprep.subr.bf16.mxu0 0
      %3226 = vmatpush1.bf16.msra.mxu0 0
      %3227 = vmatprep.subr.bf16.mxu0 0
      %3228 = vmatpush1.bf16.msra.mxu0 0
      %3229 = vmatprep.subr.bf16.mxu0 0
      %3230 = vmatpush1.bf16.msra.mxu0 0
      %3231 = vmatprep.subr.bf16.mxu0 0
      %3232 = vmatpush1.bf16.msra.mxu0 0
      %3233 = vmatprep.subr.bf16.mxu0 0
      %3234 = vmatpush1.bf16.msra.mxu0 0
      %3235 = vmatprep.subr.bf16.mxu0 0
      %3236 = vmatpush1.bf16.msra.mxu0 0
      %3237 = vmatprep.subr.bf16.mxu0 0
      %3238 = vmatpush1.bf16.msra.mxu0 0
      %3239 = vmatprep.mubr.bf16.mxu0 0
      %3240 = vmatmul.mubr.bf16.gmra.mrb[0].mxu0 %v3199
      %v3241 = vpop.f32.mrb[0].mxu0
      %v3242 = vadd.f32 0.0, %v3241
      %v3243 = vpop.f32.mrb[0].mxu0
      %v3244 = vpop.f32.mrb[0].mxu0
      %v3245 = vadd.f32 0.0, %v3244
      %v3246 = vpop.f32.mrb[0].mxu0
      %3247 = vmatprep.mubr.bf16.mxu0 0
      %3248 = vmatmul.mubr.bf16.gmra.mrb[0].mxu0 %v3202
      %v3249 = vpop.f32.mrb[0].mxu0
      %v3250 = vadd.f32 0.0, %v3249
      %v3251 = vpop.f32.mrb[0].mxu0
      %v3252 = vpop.f32.mrb[0].mxu0
      %v3253 = vadd.f32 0.0, %v3252
      %v3254 = vpop.f32.mrb[0].mxu0
      %3255 = vmatprep.mubr.bf16.mxu0 0
      %3256 = vmatmul.mubr.bf16.gmra.mrb[0].mxu0 %v3205
      %v3257 = vpop.f32.mrb[0].mxu0
      %v3258 = vadd.f32 0.0, %v3257
      %v3259 = vpop.f32.mrb[0].mxu0
      %v3260 = vpop.f32.mrb[0].mxu0
      %v3261 = vadd.f32 0.0, %v3260
      %v3262 = vpop.f32.mrb[0].mxu0
      %3263 = vdwg.mxu0
      %v3264 = vadd.f32 %v3155, %v3242
      %v3265 = vadd.f32 %v3156, %v3245
      %v3266 = vadd.f32 %v3157, %v3250
      %v3267 = vadd.f32 %v3158, %v3253
      %v3268 = vadd.f32 %v3159, %v3258
      %v3269 = vadd.f32 %v3160, %v3261
      %s3270 = scalar_lea.vmem %s3, 360
      %v3271 = vld [vmem:[%s3270] sm:$0xf]
      %v3272 = vld [vmem:[%s3270 + $0x4] sm:$0xf]
      %v3273 = vld [vmem:[%s3270 + $0x8] sm:$0xf]
      %v3274 = vld [vmem:[%s3270 + $0xc] sm:$0xf]
      %v3275 = vld [vmem:[%s3270 + $0x10] sm:$0xf]
      %v3276 = vld [vmem:[%s3270 + $0x14] sm:$0xf]
      %v3283 = vunpack.c.l.b16 %v3271
      %v3284 = vunpack.c.l.b16 %v3272
      %v3285 = vunpack.c.l.b16 %v3273
      %v3286 = vunpack.c.l.b16 %v3274
      %v3287 = vunpack.c.l.b16 %v3275
      %v3288 = vunpack.c.l.b16 %v3276
      %v3289 = vpack.c.b16 %v3284, %v3283
      %v3290 = vpack.c.b16 %v3286, %v3285
      %v3291 = vpack.c.b16 %v3288, %v3287
      %3292 = vrot.lane.b32.xlu0 %v1738, 100
      %v3293 = vpop.permute.xlu0 %3292
      %3294 = vrot.lane.b32.xlu0 %v1746, 100
      %v3295 = vpop.permute.xlu0 %3294
      %v3299 = vsel %vm1786, %v3289, 0
      %v3302 = vsel %vm1786, %v3290, 0
      %v3305 = vsel %vm1786, %v3291, 0
      %3307 = vmatprep.subr.bf16.mxu0 0
      %3308 = vmatpush1.bf16.msra.mxu0 %v3293
      %3309 = vmatprep.subr.bf16.mxu0 0
      %3310 = vmatpush1.bf16.msra.mxu0 %v3295
      %3311 = vmatprep.subr.bf16.mxu0 0
      %3312 = vmatpush1.bf16.msra.mxu0 0
      %3313 = vmatprep.subr.bf16.mxu0 0
      %3314 = vmatpush1.bf16.msra.mxu0 0
      %3315 = vmatprep.subr.bf16.mxu0 0
      %3316 = vmatpush1.bf16.msra.mxu0 0
      %3317 = vmatprep.subr.bf16.mxu0 0
      %3318 = vmatpush1.bf16.msra.mxu0 0
      %3319 = vmatprep.subr.bf16.mxu0 0
      %3320 = vmatpush1.bf16.msra.mxu0 0
      %3321 = vmatprep.subr.bf16.mxu0 0
      %3322 = vmatpush1.bf16.msra.mxu0 0
      %3323 = vmatprep.subr.bf16.mxu0 0
      %3324 = vmatpush1.bf16.msra.mxu0 0
      %3325 = vmatprep.subr.bf16.mxu0 0
      %3326 = vmatpush1.bf16.msra.mxu0 0
      %3327 = vmatprep.subr.bf16.mxu0 0
      %3328 = vmatpush1.bf16.msra.mxu0 0
      %3329 = vmatprep.subr.bf16.mxu0 0
      %3330 = vmatpush1.bf16.msra.mxu0 0
      %3331 = vmatprep.subr.bf16.mxu0 0
      %3332 = vmatpush1.bf16.msra.mxu0 0
      %3333 = vmatprep.subr.bf16.mxu0 0
      %3334 = vmatpush1.bf16.msra.mxu0 0
      %3335 = vmatprep.subr.bf16.mxu0 0
      %3336 = vmatpush1.bf16.msra.mxu0 0
      %3337 = vmatprep.subr.bf16.mxu0 0
      %3338 = vmatpush1.bf16.msra.mxu0 0
      %3339 = vmatprep.mubr.bf16.mxu0 0
      %3340 = vmatmul.mubr.bf16.gmra.mrb[0].mxu0 %v3299
      %v3341 = vpop.f32.mrb[0].mxu0
      %v3342 = vadd.f32 0.0, %v3341
      %v3343 = vpop.f32.mrb[0].mxu0
      %v3344 = vpop.f32.mrb[0].mxu0
      %v3345 = vadd.f32 0.0, %v3344
      %v3346 = vpop.f32.mrb[0].mxu0
      %3347 = vmatprep.mubr.bf16.mxu0 0
      %3348 = vmatmul.mubr.bf16.gmra.mrb[0].mxu0 %v3302
      %v3349 = vpop.f32.mrb[0].mxu0
      %v3350 = vadd.f32 0.0, %v3349
      %v3351 = vpop.f32.mrb[0].mxu0
      %v3352 = vpop.f32.mrb[0].mxu0
      %v3353 = vadd.f32 0.0, %v3352
      %v3354 = vpop.f32.mrb[0].mxu0
      %3355 = vmatprep.mubr.bf16.mxu0 0
      %3356 = vmatmul.mubr.bf16.gmra.mrb[0].mxu0 %v3305
      %v3357 = vpop.f32.mrb[0].mxu0
      %v3358 = vadd.f32 0.0, %v3357
      %v3359 = vpop.f32.mrb[0].mxu0
      %v3360 = vpop.f32.mrb[0].mxu0
      %v3361 = vadd.f32 0.0, %v3360
      %v3362 = vpop.f32.mrb[0].mxu0
      %3363 = vdwg.mxu0
      %v3364 = vadd.f32 %v3264, %v3342
      %v3365 = vadd.f32 %v3265, %v3345
      %v3366 = vadd.f32 %v3266, %v3350
      %v3367 = vadd.f32 %v3267, %v3353
      %v3368 = vadd.f32 %v3268, %v3358
      %v3369 = vadd.f32 %v3269, %v3361
      %s3370 = scalar_lea.vmem %s3, 384
      %v3371 = vld [vmem:[%s3370] sm:$0xf]
      %v3372 = vld [vmem:[%s3370 + $0x4] sm:$0xf]
      %v3373 = vld [vmem:[%s3370 + $0x8] sm:$0xf]
      %v3374 = vld [vmem:[%s3370 + $0xc] sm:$0xf]
      %v3375 = vld [vmem:[%s3370 + $0x10] sm:$0xf]
      %v3376 = vld [vmem:[%s3370 + $0x14] sm:$0xf]
      %v3383 = vunpack.c.l.b16 %v3371
      %v3384 = vunpack.c.l.b16 %v3372
      %v3385 = vunpack.c.l.b16 %v3373
      %v3386 = vunpack.c.l.b16 %v3374
      %v3387 = vunpack.c.l.b16 %v3375
      %v3388 = vunpack.c.l.b16 %v3376
      %v3389 = vpack.c.b16 %v3384, %v3383
      %v3390 = vpack.c.b16 %v3386, %v3385
      %v3391 = vpack.c.b16 %v3388, %v3387
      %3392 = vrot.lane.b32.xlu0 %v1738, 64
      %v3393 = vpop.permute.xlu0 %3392
      %3394 = vrot.lane.b32.xlu0 %v1746, 64
      %v3395 = vpop.permute.xlu0 %3394
      %v3399 = vsel %vm1786, %v3389, 0
      %v3402 = vsel %vm1786, %v3390, 0
      %v3405 = vsel %vm1786, %v3391, 0
      %3407 = vmatprep.subr.bf16.mxu0 0
      %3408 = vmatpush1.bf16.msra.mxu0 %v3393
      %3409 = vmatprep.subr.bf16.mxu0 0
      %3410 = vmatpush1.bf16.msra.mxu0 %v3395
      %3411 = vmatprep.subr.bf16.mxu0 0
      %3412 = vmatpush1.bf16.msra.mxu0 0
      %3413 = vmatprep.subr.bf16.mxu0 0
      %3414 = vmatpush1.bf16.msra.mxu0 0
      %3415 = vmatprep.subr.bf16.mxu0 0
      %3416 = vmatpush1.bf16.msra.mxu0 0
      %3417 = vmatprep.subr.bf16.mxu0 0
      %3418 = vmatpush1.bf16.msra.mxu0 0
      %3419 = vmatprep.subr.bf16.mxu0 0
      %3420 = vmatpush1.bf16.msra.mxu0 0
      %3421 = vmatprep.subr.bf16.mxu0 0
      %3422 = vmatpush1.bf16.msra.mxu0 0
      %3423 = vmatprep.subr.bf16.mxu0 0
      %3424 = vmatpush1.bf16.msra.mxu0 0
      %3425 = vmatprep.subr.bf16.mxu0 0
      %3426 = vmatpush1.bf16.msra.mxu0 0
      %3427 = vmatprep.subr.bf16.mxu0 0
      %3428 = vmatpush1.bf16.msra.mxu0 0
      %3429 = vmatprep.subr.bf16.mxu0 0
      %3430 = vmatpush1.bf16.msra.mxu0 0
      %3431 = vmatprep.subr.bf16.mxu0 0
      %3432 = vmatpush1.bf16.msra.mxu0 0
      %3433 = vmatprep.subr.bf16.mxu0 0
      %3434 = vmatpush1.bf16.msra.mxu0 0
      %3435 = vmatprep.subr.bf16.mxu0 0
      %3436 = vmatpush1.bf16.msra.mxu0 0
      %3437 = vmatprep.subr.bf16.mxu0 0
      %3438 = vmatpush1.bf16.msra.mxu0 0
      %3439 = vmatprep.mubr.bf16.mxu0 0
      %3440 = vmatmul.mubr.bf16.gmra.mrb[0].mxu0 %v3399
      %v3441 = vpop.f32.mrb[0].mxu0
      %v3442 = vadd.f32 0.0, %v3441
      %v3443 = vpop.f32.mrb[0].mxu0
      %v3444 = vpop.f32.mrb[0].mxu0
      %v3445 = vadd.f32 0.0, %v3444
      %v3446 = vpop.f32.mrb[0].mxu0
      %3447 = vmatprep.mubr.bf16.mxu0 0
      %3448 = vmatmul.mubr.bf16.gmra.mrb[0].mxu0 %v3402
      %v3449 = vpop.f32.mrb[0].mxu0
      %v3450 = vadd.f32 0.0, %v3449
      %v3451 = vpop.f32.mrb[0].mxu0
      %v3452 = vpop.f32.mrb[0].mxu0
      %v3453 = vadd.f32 0.0, %v3452
      %v3454 = vpop.f32.mrb[0].mxu0
      %3455 = vmatprep.mubr.bf16.mxu0 0
      %3456 = vmatmul.mubr.bf16.gmra.mrb[0].mxu0 %v3405
      %v3457 = vpop.f32.mrb[0].mxu0
      %v3458 = vadd.f32 0.0, %v3457
      %v3459 = vpop.f32.mrb[0].mxu0
      %v3460 = vpop.f32.mrb[0].mxu0
      %v3461 = vadd.f32 0.0, %v3460
      %v3462 = vpop.f32.mrb[0].mxu0
      %3463 = vdwg.mxu0
      %v3464 = vadd.f32 %v3364, %v3442
      %v3465 = vadd.f32 %v3365, %v3445
      %v3466 = vadd.f32 %v3366, %v3450
      %v3467 = vadd.f32 %v3367, %v3453
      %v3468 = vadd.f32 %v3368, %v3458
      %v3469 = vadd.f32 %v3369, %v3461
      %s3470 = scalar_lea.vmem %s3, 408
      %v3471 = vld [vmem:[%s3470] sm:$0xf]
      %v3472 = vld [vmem:[%s3470 + $0x4] sm:$0xf]
      %v3473 = vld [vmem:[%s3470 + $0x8] sm:$0xf]
      %v3474 = vld [vmem:[%s3470 + $0xc] sm:$0xf]
      %v3475 = vld [vmem:[%s3470 + $0x10] sm:$0xf]
      %v3476 = vld [vmem:[%s3470 + $0x14] sm:$0xf]
      %v3483 = vunpack.c.l.b16 %v3471
      %v3484 = vunpack.c.l.b16 %v3472
      %v3485 = vunpack.c.l.b16 %v3473
      %v3486 = vunpack.c.l.b16 %v3474
      %v3487 = vunpack.c.l.b16 %v3475
      %v3488 = vunpack.c.l.b16 %v3476
      %v3489 = vpack.c.b16 %v3484, %v3483
      %v3490 = vpack.c.b16 %v3486, %v3485
      %v3491 = vpack.c.b16 %v3488, %v3487
      %3494 = vrot.lane.b32.xlu0 %v1738, 28
      %v3495 = vpop.permute.xlu0 %3494
      %3496 = vrot.lane.b32.xlu0 %v1739, 28
      %v3497 = vpop.permute.xlu0 %3496
      %3498 = vrot.lane.b32.xlu0 %v1746, 28
      %v3499 = vpop.permute.xlu0 %3498
      %3500 = vrot.lane.b32.xlu0 %v1747, 28
      %v3501 = vpop.permute.xlu0 %3500
      %vm3502 = vcmask 228352
      %v3503 = vsel %vm3502, %v3495, %v3497
      %v3504 = vsel %vm3502, %v3499, %v3501
      %v3508 = vsel %vm1786, %v3489, 0
      %v3511 = vsel %vm1786, %v3490, 0
      %v3514 = vsel %vm1786, %v3491, 0
      %3516 = vmatprep.subr.bf16.mxu0 0
      %3517 = vmatpush1.bf16.msra.mxu0 %v3503
      %3518 = vmatprep.subr.bf16.mxu0 0
      %3519 = vmatpush1.bf16.msra.mxu0 %v3504
      %3520 = vmatprep.subr.bf16.mxu0 0
      %3521 = vmatpush1.bf16.msra.mxu0 0
      %3522 = vmatprep.subr.bf16.mxu0 0
      %3523 = vmatpush1.bf16.msra.mxu0 0
      %3524 = vmatprep.subr.bf16.mxu0 0
      %3525 = vmatpush1.bf16.msra.mxu0 0
      %3526 = vmatprep.subr.bf16.mxu0 0
      %3527 = vmatpush1.bf16.msra.mxu0 0
      %3528 = vmatprep.subr.bf16.mxu0 0
      %3529 = vmatpush1.bf16.msra.mxu0 0
      %3530 = vmatprep.subr.bf16.mxu0 0
      %3531 = vmatpush1.bf16.msra.mxu0 0
      %3532 = vmatprep.subr.bf16.mxu0 0
      %3533 = vmatpush1.bf16.msra.mxu0 0
      %3534 = vmatprep.subr.bf16.mxu0 0
      %3535 = vmatpush1.bf16.msra.mxu0 0
      %3536 = vmatprep.subr.bf16.mxu0 0
      %3537 = vmatpush1.bf16.msra.mxu0 0
      %3538 = vmatprep.subr.bf16.mxu0 0
      %3539 = vmatpush1.bf16.msra.mxu0 0
      %3540 = vmatprep.subr.bf16.mxu0 0
      %3541 = vmatpush1.bf16.msra.mxu0 0
      %3542 = vmatprep.subr.bf16.mxu0 0
      %3543 = vmatpush1.bf16.msra.mxu0 0
      %3544 = vmatprep.subr.bf16.mxu0 0
      %3545 = vmatpush1.bf16.msra.mxu0 0
      %3546 = vmatprep.subr.bf16.mxu0 0
      %3547 = vmatpush1.bf16.msra.mxu0 0
      %3548 = vmatprep.mubr.bf16.mxu0 0
      %3549 = vmatmul.mubr.bf16.gmra.mrb[0].mxu0 %v3508
      %v3550 = vpop.f32.mrb[0].mxu0
      %v3551 = vadd.f32 0.0, %v3550
      %v3552 = vpop.f32.mrb[0].mxu0
      %v3553 = vpop.f32.mrb[0].mxu0
      %v3554 = vadd.f32 0.0, %v3553
      %v3555 = vpop.f32.mrb[0].mxu0
      %3556 = vmatprep.mubr.bf16.mxu0 0
      %3557 = vmatmul.mubr.bf16.gmra.mrb[0].mxu0 %v3511
      %v3558 = vpop.f32.mrb[0].mxu0
      %v3559 = vadd.f32 0.0, %v3558
      %v3560 = vpop.f32.mrb[0].mxu0
      %v3561 = vpop.f32.mrb[0].mxu0
      %v3562 = vadd.f32 0.0, %v3561
      %v3563 = vpop.f32.mrb[0].mxu0
      %3564 = vmatprep.mubr.bf16.mxu0 0
      %3565 = vmatmul.mubr.bf16.gmra.mrb[0].mxu0 %v3514
      %v3566 = vpop.f32.mrb[0].mxu0
      %v3567 = vadd.f32 0.0, %v3566
      %v3568 = vpop.f32.mrb[0].mxu0
      %v3569 = vpop.f32.mrb[0].mxu0
      %v3570 = vadd.f32 0.0, %v3569
      %v3571 = vpop.f32.mrb[0].mxu0
      %3572 = vdwg.mxu0
      %v3573 = vadd.f32 %v3464, %v3551
      %v3574 = vadd.f32 %v3465, %v3554
      %v3575 = vadd.f32 %v3466, %v3559
      %v3576 = vadd.f32 %v3467, %v3562
      %v3577 = vadd.f32 %v3468, %v3567
      %v3578 = vadd.f32 %v3469, %v3570
      %s3579 = scalar_lea.vmem %s3, 432
      %v3580 = vld [vmem:[%s3579] sm:$0xf]
      %v3581 = vld [vmem:[%s3579 + $0x4] sm:$0xf]
      %v3582 = vld [vmem:[%s3579 + $0x8] sm:$0xf]
      %v3583 = vld [vmem:[%s3579 + $0xc] sm:$0xf]
      %v3584 = vld [vmem:[%s3579 + $0x10] sm:$0xf]
      %v3585 = vld [vmem:[%s3579 + $0x14] sm:$0xf]
      %v3592 = vunpack.c.l.b16 %v3580
      %v3593 = vunpack.c.l.b16 %v3581
      %v3594 = vunpack.c.l.b16 %v3582
      %v3595 = vunpack.c.l.b16 %v3583
      %v3596 = vunpack.c.l.b16 %v3584
      %v3597 = vunpack.c.l.b16 %v3585
      %v3598 = vpack.c.b16 %v3593, %v3592
      %v3599 = vpack.c.b16 %v3595, %v3594
      %v3600 = vpack.c.b16 %v3597, %v3596
      %3601 = vrot.lane.b32.xlu0 %v1739, 120
      %v3602 = vpop.permute.xlu0 %3601
      %3603 = vrot.lane.b32.xlu0 %v1747, 120
      %v3604 = vpop.permute.xlu0 %3603
      %v3608 = vsel %vm1786, %v3598, 0
      %v3611 = vsel %vm1786, %v3599, 0
      %v3614 = vsel %vm1786, %v3600, 0
      %3616 = vmatprep.subr.bf16.mxu0 0
      %3617 = vmatpush1.bf16.msra.mxu0 %v3602
      %3618 = vmatprep.subr.bf16.mxu0 0
      %3619 = vmatpush1.bf16.msra.mxu0 %v3604
      %3620 = vmatprep.subr.bf16.mxu0 0
      %3621 = vmatpush1.bf16.msra.mxu0 0
      %3622 = vmatprep.subr.bf16.mxu0 0
      %3623 = vmatpush1.bf16.msra.mxu0 0
      %3624 = vmatprep.subr.bf16.mxu0 0
      %3625 = vmatpush1.bf16.msra.mxu0 0
      %3626 = vmatprep.subr.bf16.mxu0 0
      %3627 = vmatpush1.bf16.msra.mxu0 0
      %3628 = vmatprep.subr.bf16.mxu0 0
      %3629 = vmatpush1.bf16.msra.mxu0 0
      %3630 = vmatprep.subr.bf16.mxu0 0
      %3631 = vmatpush1.bf16.msra.mxu0 0
      %3632 = vmatprep.subr.bf16.mxu0 0
      %3633 = vmatpush1.bf16.msra.mxu0 0
      %3634 = vmatprep.subr.bf16.mxu0 0
      %3635 = vmatpush1.bf16.msra.mxu0 0
      %3636 = vmatprep.subr.bf16.mxu0 0
      %3637 = vmatpush1.bf16.msra.mxu0 0
      %3638 = vmatprep.subr.bf16.mxu0 0
      %3639 = vmatpush1.bf16.msra.mxu0 0
      %3640 = vmatprep.subr.bf16.mxu0 0
      %3641 = vmatpush1.bf16.msra.mxu0 0
      %3642 = vmatprep.subr.bf16.mxu0 0
      %3643 = vmatpush1.bf16.msra.mxu0 0
      %3644 = vmatprep.subr.bf16.mxu0 0
      %3645 = vmatpush1.bf16.msra.mxu0 0
      %3646 = vmatprep.subr.bf16.mxu0 0
      %3647 = vmatpush1.bf16.msra.mxu0 0
      %3648 = vmatprep.mubr.bf16.mxu0 0
      %3649 = vmatmul.mubr.bf16.gmra.mrb[0].mxu0 %v3608
      %v3650 = vpop.f32.mrb[0].mxu0
      %v3651 = vadd.f32 0.0, %v3650
      %v3652 = vpop.f32.mrb[0].mxu0
      %v3653 = vpop.f32.mrb[0].mxu0
      %v3654 = vadd.f32 0.0, %v3653
      %v3655 = vpop.f32.mrb[0].mxu0
      %3656 = vmatprep.mubr.bf16.mxu0 0
      %3657 = vmatmul.mubr.bf16.gmra.mrb[0].mxu0 %v3611
      %v3658 = vpop.f32.mrb[0].mxu0
      %v3659 = vadd.f32 0.0, %v3658
      %v3660 = vpop.f32.mrb[0].mxu0
      %v3661 = vpop.f32.mrb[0].mxu0
      %v3662 = vadd.f32 0.0, %v3661
      %v3663 = vpop.f32.mrb[0].mxu0
      %3664 = vmatprep.mubr.bf16.mxu0 0
      %3665 = vmatmul.mubr.bf16.gmra.mrb[0].mxu0 %v3614
      %v3666 = vpop.f32.mrb[0].mxu0
      %v3667 = vadd.f32 0.0, %v3666
      %v3668 = vpop.f32.mrb[0].mxu0
      %v3669 = vpop.f32.mrb[0].mxu0
      %v3670 = vadd.f32 0.0, %v3669
      %v3671 = vpop.f32.mrb[0].mxu0
      %3672 = vdwg.mxu0
      %v3673 = vadd.f32 %v3573, %v3651
      %v3674 = vadd.f32 %v3574, %v3654
      %v3675 = vadd.f32 %v3575, %v3659
      %v3676 = vadd.f32 %v3576, %v3662
      %v3677 = vadd.f32 %v3577, %v3667
      %v3678 = vadd.f32 %v3578, %v3670
      %s3679 = scalar_lea.vmem %s3, 456
      %v3680 = vld [vmem:[%s3679] sm:$0xf]
      %v3681 = vld [vmem:[%s3679 + $0x4] sm:$0xf]
      %v3682 = vld [vmem:[%s3679 + $0x8] sm:$0xf]
      %v3683 = vld [vmem:[%s3679 + $0xc] sm:$0xf]
      %v3684 = vld [vmem:[%s3679 + $0x10] sm:$0xf]
      %v3685 = vld [vmem:[%s3679 + $0x14] sm:$0xf]
      %v3692 = vunpack.c.l.b16 %v3680
      %v3693 = vunpack.c.l.b16 %v3681
      %v3694 = vunpack.c.l.b16 %v3682
      %v3695 = vunpack.c.l.b16 %v3683
      %v3696 = vunpack.c.l.b16 %v3684
      %v3697 = vunpack.c.l.b16 %v3685
      %v3698 = vpack.c.b16 %v3693, %v3692
      %v3699 = vpack.c.b16 %v3695, %v3694
      %v3700 = vpack.c.b16 %v3697, %v3696
      %3701 = vrot.lane.b32.xlu0 %v1739, 84
      %v3702 = vpop.permute.xlu0 %3701
      %3703 = vrot.lane.b32.xlu0 %v1747, 84
      %v3704 = vpop.permute.xlu0 %3703
      %v3708 = vsel %vm1786, %v3698, 0
      %v3711 = vsel %vm1786, %v3699, 0
      %v3714 = vsel %vm1786, %v3700, 0
      %3716 = vmatprep.subr.bf16.mxu0 0
      %3717 = vmatpush1.bf16.msra.mxu0 %v3702
      %3718 = vmatprep.subr.bf16.mxu0 0
      %3719 = vmatpush1.bf16.msra.mxu0 %v3704
      %3720 = vmatprep.subr.bf16.mxu0 0
      %3721 = vmatpush1.bf16.msra.mxu0 0
      %3722 = vmatprep.subr.bf16.mxu0 0
      %3723 = vmatpush1.bf16.msra.mxu0 0
      %3724 = vmatprep.subr.bf16.mxu0 0
      %3725 = vmatpush1.bf16.msra.mxu0 0
      %3726 = vmatprep.subr.bf16.mxu0 0
      %3727 = vmatpush1.bf16.msra.mxu0 0
      %3728 = vmatprep.subr.bf16.mxu0 0
      %3729 = vmatpush1.bf16.msra.mxu0 0
      %3730 = vmatprep.subr.bf16.mxu0 0
      %3731 = vmatpush1.bf16.msra.mxu0 0
      %3732 = vmatprep.subr.bf16.mxu0 0
      %3733 = vmatpush1.bf16.msra.mxu0 0
      %3734 = vmatprep.subr.bf16.mxu0 0
      %3735 = vmatpush1.bf16.msra.mxu0 0
      %3736 = vmatprep.subr.bf16.mxu0 0
      %3737 = vmatpush1.bf16.msra.mxu0 0
      %3738 = vmatprep.subr.bf16.mxu0 0
      %3739 = vmatpush1.bf16.msra.mxu0 0
      %3740 = vmatprep.subr.bf16.mxu0 0
      %3741 = vmatpush1.bf16.msra.mxu0 0
      %3742 = vmatprep.subr.bf16.mxu0 0
      %3743 = vmatpush1.bf16.msra.mxu0 0
      %3744 = vmatprep.subr.bf16.mxu0 0
      %3745 = vmatpush1.bf16.msra.mxu0 0
      %3746 = vmatprep.subr.bf16.mxu0 0
      %3747 = vmatpush1.bf16.msra.mxu0 0
      %3748 = vmatprep.mubr.bf16.mxu0 0
      %3749 = vmatmul.mubr.bf16.gmra.mrb[0].mxu0 %v3708
      %v3750 = vpop.f32.mrb[0].mxu0
      %v3751 = vadd.f32 0.0, %v3750
      %v3752 = vpop.f32.mrb[0].mxu0
      %v3753 = vpop.f32.mrb[0].mxu0
      %v3754 = vadd.f32 0.0, %v3753
      %v3755 = vpop.f32.mrb[0].mxu0
      %3756 = vmatprep.mubr.bf16.mxu0 0
      %3757 = vmatmul.mubr.bf16.gmra.mrb[0].mxu0 %v3711
      %v3758 = vpop.f32.mrb[0].mxu0
      %v3759 = vadd.f32 0.0, %v3758
      %v3760 = vpop.f32.mrb[0].mxu0
      %v3761 = vpop.f32.mrb[0].mxu0
      %v3762 = vadd.f32 0.0, %v3761
      %v3763 = vpop.f32.mrb[0].mxu0
      %3764 = vmatprep.mubr.bf16.mxu0 0
      %3765 = vmatmul.mubr.bf16.gmra.mrb[0].mxu0 %v3714
      %v3766 = vpop.f32.mrb[0].mxu0
      %v3767 = vadd.f32 0.0, %v3766
      %v3768 = vpop.f32.mrb[0].mxu0
      %v3769 = vpop.f32.mrb[0].mxu0
      %v3770 = vadd.f32 0.0, %v3769
      %v3771 = vpop.f32.mrb[0].mxu0
      %3772 = vdwg.mxu0
      %v3773 = vadd.f32 %v3673, %v3751
      %v3774 = vadd.f32 %v3674, %v3754
      %v3775 = vadd.f32 %v3675, %v3759
      %v3776 = vadd.f32 %v3676, %v3762
      %v3777 = vadd.f32 %v3677, %v3767
      %v3778 = vadd.f32 %v3678, %v3770
      %s3779 = scalar_lea.vmem %s3, 480
      %v3780 = vld [vmem:[%s3779] sm:$0xf]
      %v3781 = vld [vmem:[%s3779 + $0x4] sm:$0xf]
      %v3782 = vld [vmem:[%s3779 + $0x8] sm:$0xf]
      %v3783 = vld [vmem:[%s3779 + $0xc] sm:$0xf]
      %v3784 = vld [vmem:[%s3779 + $0x10] sm:$0xf]
      %v3785 = vld [vmem:[%s3779 + $0x14] sm:$0xf]
      %v3792 = vunpack.c.l.b16 %v3780
      %v3793 = vunpack.c.l.b16 %v3781
      %v3794 = vunpack.c.l.b16 %v3782
      %v3795 = vunpack.c.l.b16 %v3783
      %v3796 = vunpack.c.l.b16 %v3784
      %v3797 = vunpack.c.l.b16 %v3785
      %v3798 = vpack.c.b16 %v3793, %v3792
      %v3799 = vpack.c.b16 %v3795, %v3794
      %v3800 = vpack.c.b16 %v3797, %v3796
      %3801 = vrot.lane.b32.xlu0 %v1739, 48
      %v3802 = vpop.permute.xlu0 %3801
      %3803 = vrot.lane.b32.xlu0 %v1747, 48
      %v3804 = vpop.permute.xlu0 %3803
      %v3808 = vsel %vm1786, %v3798, 0
      %v3811 = vsel %vm1786, %v3799, 0
      %v3814 = vsel %vm1786, %v3800, 0
      %3816 = vmatprep.subr.bf16.mxu0 0
      %3817 = vmatpush1.bf16.msra.mxu0 %v3802
      %3818 = vmatprep.subr.bf16.mxu0 0
      %3819 = vmatpush1.bf16.msra.mxu0 %v3804
      %3820 = vmatprep.subr.bf16.mxu0 0
      %3821 = vmatpush1.bf16.msra.mxu0 0
      %3822 = vmatprep.subr.bf16.mxu0 0
      %3823 = vmatpush1.bf16.msra.mxu0 0
      %3824 = vmatprep.subr.bf16.mxu0 0
      %3825 = vmatpush1.bf16.msra.mxu0 0
      %3826 = vmatprep.subr.bf16.mxu0 0
      %3827 = vmatpush1.bf16.msra.mxu0 0
      %3828 = vmatprep.subr.bf16.mxu0 0
      %3829 = vmatpush1.bf16.msra.mxu0 0
      %3830 = vmatprep.subr.bf16.mxu0 0
      %3831 = vmatpush1.bf16.msra.mxu0 0
      %3832 = vmatprep.subr.bf16.mxu0 0
      %3833 = vmatpush1.bf16.msra.mxu0 0
      %3834 = vmatprep.subr.bf16.mxu0 0
      %3835 = vmatpush1.bf16.msra.mxu0 0
      %3836 = vmatprep.subr.bf16.mxu0 0
      %3837 = vmatpush1.bf16.msra.mxu0 0
      %3838 = vmatprep.subr.bf16.mxu0 0
      %3839 = vmatpush1.bf16.msra.mxu0 0
      %3840 = vmatprep.subr.bf16.mxu0 0
      %3841 = vmatpush1.bf16.msra.mxu0 0
      %3842 = vmatprep.subr.bf16.mxu0 0
      %3843 = vmatpush1.bf16.msra.mxu0 0
      %3844 = vmatprep.subr.bf16.mxu0 0
      %3845 = vmatpush1.bf16.msra.mxu0 0
      %3846 = vmatprep.subr.bf16.mxu0 0
      %3847 = vmatpush1.bf16.msra.mxu0 0
      %3848 = vmatprep.mubr.bf16.mxu0 0
      %3849 = vmatmul.mubr.bf16.gmra.mrb[0].mxu0 %v3808
      %v3850 = vpop.f32.mrb[0].mxu0
      %v3851 = vadd.f32 0.0, %v3850
      %v3852 = vpop.f32.mrb[0].mxu0
      %v3853 = vpop.f32.mrb[0].mxu0
      %v3854 = vadd.f32 0.0, %v3853
      %v3855 = vpop.f32.mrb[0].mxu0
      %3856 = vmatprep.mubr.bf16.mxu0 0
      %3857 = vmatmul.mubr.bf16.gmra.mrb[0].mxu0 %v3811
      %v3858 = vpop.f32.mrb[0].mxu0
      %v3859 = vadd.f32 0.0, %v3858
      %v3860 = vpop.f32.mrb[0].mxu0
      %v3861 = vpop.f32.mrb[0].mxu0
      %v3862 = vadd.f32 0.0, %v3861
      %v3863 = vpop.f32.mrb[0].mxu0
      %3864 = vmatprep.mubr.bf16.mxu0 0
      %3865 = vmatmul.mubr.bf16.gmra.mrb[0].mxu0 %v3814
      %v3866 = vpop.f32.mrb[0].mxu0
      %v3867 = vadd.f32 0.0, %v3866
      %v3868 = vpop.f32.mrb[0].mxu0
      %v3869 = vpop.f32.mrb[0].mxu0
      %v3870 = vadd.f32 0.0, %v3869
      %v3871 = vpop.f32.mrb[0].mxu0
      %3872 = vdwg.mxu0
      %v3873 = vadd.f32 %v3773, %v3851
      %v3874 = vadd.f32 %v3774, %v3854
      %v3875 = vadd.f32 %v3775, %v3859
      %v3876 = vadd.f32 %v3776, %v3862
      %v3877 = vadd.f32 %v3777, %v3867
      %v3878 = vadd.f32 %v3778, %v3870
      %s3879 = scalar_lea.vmem %s3, 504
      %v3880 = vld [vmem:[%s3879] sm:$0xf]
      %v3881 = vld [vmem:[%s3879 + $0x4] sm:$0xf]
      %v3882 = vld [vmem:[%s3879 + $0x8] sm:$0xf]
      %v3883 = vld [vmem:[%s3879 + $0xc] sm:$0xf]
      %v3884 = vld [vmem:[%s3879 + $0x10] sm:$0xf]
      %v3885 = vld [vmem:[%s3879 + $0x14] sm:$0xf]
      %v3892 = vunpack.c.l.b16 %v3880
      %v3893 = vunpack.c.l.b16 %v3881
      %v3894 = vunpack.c.l.b16 %v3882
      %v3895 = vunpack.c.l.b16 %v3883
      %v3896 = vunpack.c.l.b16 %v3884
      %v3897 = vunpack.c.l.b16 %v3885
      %v3898 = vpack.c.b16 %v3893, %v3892
      %v3899 = vpack.c.b16 %v3895, %v3894
      %v3900 = vpack.c.b16 %v3897, %v3896
      %3903 = vrot.lane.b32.xlu0 %v1739, 12
      %v3904 = vpop.permute.xlu0 %3903
      %3905 = vrot.lane.b32.xlu0 %v1740, 12
      %v3906 = vpop.permute.xlu0 %3905
      %3907 = vrot.lane.b32.xlu0 %v1747, 12
      %v3908 = vpop.permute.xlu0 %3907
      %3909 = vrot.lane.b32.xlu0 %v1748, 12
      %v3910 = vpop.permute.xlu0 %3909
      %vm3911 = vcmask 97280
      %v3912 = vsel %vm3911, %v3904, %v3906
      %v3913 = vsel %vm3911, %v3908, %v3910
      %v3917 = vsel %vm1786, %v3898, 0
      %v3920 = vsel %vm1786, %v3899, 0
      %v3923 = vsel %vm1786, %v3900, 0
      %3925 = vmatprep.subr.bf16.mxu0 0
      %3926 = vmatpush1.bf16.msra.mxu0 %v3912
      %3927 = vmatprep.subr.bf16.mxu0 0
      %3928 = vmatpush1.bf16.msra.mxu0 %v3913
      %3929 = vmatprep.subr.bf16.mxu0 0
      %3930 = vmatpush1.bf16.msra.mxu0 0
      %3931 = vmatprep.subr.bf16.mxu0 0
      %3932 = vmatpush1.bf16.msra.mxu0 0
      %3933 = vmatprep.subr.bf16.mxu0 0
      %3934 = vmatpush1.bf16.msra.mxu0 0
      %3935 = vmatprep.subr.bf16.mxu0 0
      %3936 = vmatpush1.bf16.msra.mxu0 0
      %3937 = vmatprep.subr.bf16.mxu0 0
      %3938 = vmatpush1.bf16.msra.mxu0 0
      %3939 = vmatprep.subr.bf16.mxu0 0
      %3940 = vmatpush1.bf16.msra.mxu0 0
      %3941 = vmatprep.subr.bf16.mxu0 0
      %3942 = vmatpush1.bf16.msra.mxu0 0
      %3943 = vmatprep.subr.bf16.mxu0 0
      %3944 = vmatpush1.bf16.msra.mxu0 0
      %3945 = vmatprep.subr.bf16.mxu0 0
      %3946 = vmatpush1.bf16.msra.mxu0 0
      %3947 = vmatprep.subr.bf16.mxu0 0
      %3948 = vmatpush1.bf16.msra.mxu0 0
      %3949 = vmatprep.subr.bf16.mxu0 0
      %3950 = vmatpush1.bf16.msra.mxu0 0
      %3951 = vmatprep.subr.bf16.mxu0 0
      %3952 = vmatpush1.bf16.msra.mxu0 0
      %3953 = vmatprep.subr.bf16.mxu0 0
      %3954 = vmatpush1.bf16.msra.mxu0 0
      %3955 = vmatprep.subr.bf16.mxu0 0
      %3956 = vmatpush1.bf16.msra.mxu0 0
      %3957 = vmatprep.mubr.bf16.mxu0 0
      %3958 = vmatmul.mubr.bf16.gmra.mrb[0].mxu0 %v3917
      %v3959 = vpop.f32.mrb[0].mxu0
      %v3960 = vadd.f32 0.0, %v3959
      %v3961 = vpop.f32.mrb[0].mxu0
      %v3962 = vpop.f32.mrb[0].mxu0
      %v3963 = vadd.f32 0.0, %v3962
      %v3964 = vpop.f32.mrb[0].mxu0
      %3965 = vmatprep.mubr.bf16.mxu0 0
      %3966 = vmatmul.mubr.bf16.gmra.mrb[0].mxu0 %v3920
      %v3967 = vpop.f32.mrb[0].mxu0
      %v3968 = vadd.f32 0.0, %v3967
      %v3969 = vpop.f32.mrb[0].mxu0
      %v3970 = vpop.f32.mrb[0].mxu0
      %v3971 = vadd.f32 0.0, %v3970
      %v3972 = vpop.f32.mrb[0].mxu0
      %3973 = vmatprep.mubr.bf16.mxu0 0
      %3974 = vmatmul.mubr.bf16.gmra.mrb[0].mxu0 %v3923
      %v3975 = vpop.f32.mrb[0].mxu0
      %v3976 = vadd.f32 0.0, %v3975
      %v3977 = vpop.f32.mrb[0].mxu0
      %v3978 = vpop.f32.mrb[0].mxu0
      %v3979 = vadd.f32 0.0, %v3978
      %v3980 = vpop.f32.mrb[0].mxu0
      %3981 = vdwg.mxu0
      %v3982 = vadd.f32 %v3873, %v3960
      %v3983 = vadd.f32 %v3874, %v3963
      %v3984 = vadd.f32 %v3875, %v3968
      %v3985 = vadd.f32 %v3876, %v3971
      %v3986 = vadd.f32 %v3877, %v3976
      %v3987 = vadd.f32 %v3878, %v3979
      %s3988 = scalar_lea.vmem %s3, 528
      %v3989 = vld [vmem:[%s3988] sm:$0xf]
      %v3990 = vld [vmem:[%s3988 + $0x4] sm:$0xf]
      %v3991 = vld [vmem:[%s3988 + $0x8] sm:$0xf]
      %v3992 = vld [vmem:[%s3988 + $0xc] sm:$0xf]
      %v3993 = vld [vmem:[%s3988 + $0x10] sm:$0xf]
      %v3994 = vld [vmem:[%s3988 + $0x14] sm:$0xf]
      %v4001 = vunpack.c.l.b16 %v3989
      %v4002 = vunpack.c.l.b16 %v3990
      %v4003 = vunpack.c.l.b16 %v3991
      %v4004 = vunpack.c.l.b16 %v3992
      %v4005 = vunpack.c.l.b16 %v3993
      %v4006 = vunpack.c.l.b16 %v3994
      %v4007 = vpack.c.b16 %v4002, %v4001
      %v4008 = vpack.c.b16 %v4004, %v4003
      %v4009 = vpack.c.b16 %v4006, %v4005
      %4010 = vrot.lane.b32.xlu0 %v1740, 104
      %v4011 = vpop.permute.xlu0 %4010
      %4012 = vrot.lane.b32.xlu0 %v1748, 104
      %v4013 = vpop.permute.xlu0 %4012
      %v4017 = vsel %vm1786, %v4007, 0
      %v4020 = vsel %vm1786, %v4008, 0
      %v4023 = vsel %vm1786, %v4009, 0
      %4025 = vmatprep.subr.bf16.mxu0 0
      %4026 = vmatpush1.bf16.msra.mxu0 %v4011
      %4027 = vmatprep.subr.bf16.mxu0 0
      %4028 = vmatpush1.bf16.msra.mxu0 %v4013
      %4029 = vmatprep.subr.bf16.mxu0 0
      %4030 = vmatpush1.bf16.msra.mxu0 0
      %4031 = vmatprep.subr.bf16.mxu0 0
      %4032 = vmatpush1.bf16.msra.mxu0 0
      %4033 = vmatprep.subr.bf16.mxu0 0
      %4034 = vmatpush1.bf16.msra.mxu0 0
      %4035 = vmatprep.subr.bf16.mxu0 0
      %4036 = vmatpush1.bf16.msra.mxu0 0
      %4037 = vmatprep.subr.bf16.mxu0 0
      %4038 = vmatpush1.bf16.msra.mxu0 0
      %4039 = vmatprep.subr.bf16.mxu0 0
      %4040 = vmatpush1.bf16.msra.mxu0 0
      %4041 = vmatprep.subr.bf16.mxu0 0
      %4042 = vmatpush1.bf16.msra.mxu0 0
      %4043 = vmatprep.subr.bf16.mxu0 0
      %4044 = vmatpush1.bf16.msra.mxu0 0
      %4045 = vmatprep.subr.bf16.mxu0 0
      %4046 = vmatpush1.bf16.msra.mxu0 0
      %4047 = vmatprep.subr.bf16.mxu0 0
      %4048 = vmatpush1.bf16.msra.mxu0 0
      %4049 = vmatprep.subr.bf16.mxu0 0
      %4050 = vmatpush1.bf16.msra.mxu0 0
      %4051 = vmatprep.subr.bf16.mxu0 0
      %4052 = vmatpush1.bf16.msra.mxu0 0
      %4053 = vmatprep.subr.bf16.mxu0 0
      %4054 = vmatpush1.bf16.msra.mxu0 0
      %4055 = vmatprep.subr.bf16.mxu0 0
      %4056 = vmatpush1.bf16.msra.mxu0 0
      %4057 = vmatprep.mubr.bf16.mxu0 0
      %4058 = vmatmul.mubr.bf16.gmra.mrb[0].mxu0 %v4017
      %v4059 = vpop.f32.mrb[0].mxu0
      %v4060 = vadd.f32 0.0, %v4059
      %v4061 = vpop.f32.mrb[0].mxu0
      %v4062 = vpop.f32.mrb[0].mxu0
      %v4063 = vadd.f32 0.0, %v4062
      %v4064 = vpop.f32.mrb[0].mxu0
      %4065 = vmatprep.mubr.bf16.mxu0 0
      %4066 = vmatmul.mubr.bf16.gmra.mrb[0].mxu0 %v4020
      %v4067 = vpop.f32.mrb[0].mxu0
      %v4068 = vadd.f32 0.0, %v4067
      %v4069 = vpop.f32.mrb[0].mxu0
      %v4070 = vpop.f32.mrb[0].mxu0
      %v4071 = vadd.f32 0.0, %v4070
      %v4072 = vpop.f32.mrb[0].mxu0
      %4073 = vmatprep.mubr.bf16.mxu0 0
      %4074 = vmatmul.mubr.bf16.gmra.mrb[0].mxu0 %v4023
      %v4075 = vpop.f32.mrb[0].mxu0
      %v4076 = vadd.f32 0.0, %v4075
      %v4077 = vpop.f32.mrb[0].mxu0
      %v4078 = vpop.f32.mrb[0].mxu0
      %v4079 = vadd.f32 0.0, %v4078
      %v4080 = vpop.f32.mrb[0].mxu0
      %4081 = vdwg.mxu0
      %v4082 = vadd.f32 %v3982, %v4060
      %v4083 = vadd.f32 %v3983, %v4063
      %v4084 = vadd.f32 %v3984, %v4068
      %v4085 = vadd.f32 %v3985, %v4071
      %v4086 = vadd.f32 %v3986, %v4076
      %v4087 = vadd.f32 %v3987, %v4079
      %s4088 = scalar_lea.vmem %s3, 552
      %v4089 = vld [vmem:[%s4088] sm:$0xf]
      %v4090 = vld [vmem:[%s4088 + $0x4] sm:$0xf]
      %v4091 = vld [vmem:[%s4088 + $0x8] sm:$0xf]
      %v4092 = vld [vmem:[%s4088 + $0xc] sm:$0xf]
      %v4093 = vld [vmem:[%s4088 + $0x10] sm:$0xf]
      %v4094 = vld [vmem:[%s4088 + $0x14] sm:$0xf]
      %v4101 = vunpack.c.l.b16 %v4089
      %v4102 = vunpack.c.l.b16 %v4090
      %v4103 = vunpack.c.l.b16 %v4091
      %v4104 = vunpack.c.l.b16 %v4092
      %v4105 = vunpack.c.l.b16 %v4093
      %v4106 = vunpack.c.l.b16 %v4094
      %v4107 = vpack.c.b16 %v4102, %v4101
      %v4108 = vpack.c.b16 %v4104, %v4103
      %v4109 = vpack.c.b16 %v4106, %v4105
      %4110 = vrot.lane.b32.xlu0 %v1740, 68
      %v4111 = vpop.permute.xlu0 %4110
      %4112 = vrot.lane.b32.xlu0 %v1748, 68
      %v4113 = vpop.permute.xlu0 %4112
      %v4117 = vsel %vm1786, %v4107, 0
      %v4120 = vsel %vm1786, %v4108, 0
      %v4123 = vsel %vm1786, %v4109, 0
      %4125 = vmatprep.subr.bf16.mxu0 0
      %4126 = vmatpush1.bf16.msra.mxu0 %v4111
      %4127 = vmatprep.subr.bf16.mxu0 0
      %4128 = vmatpush1.bf16.msra.mxu0 %v4113
      %4129 = vmatprep.subr.bf16.mxu0 0
      %4130 = vmatpush1.bf16.msra.mxu0 0
      %4131 = vmatprep.subr.bf16.mxu0 0
      %4132 = vmatpush1.bf16.msra.mxu0 0
      %4133 = vmatprep.subr.bf16.mxu0 0
      %4134 = vmatpush1.bf16.msra.mxu0 0
      %4135 = vmatprep.subr.bf16.mxu0 0
      %4136 = vmatpush1.bf16.msra.mxu0 0
      %4137 = vmatprep.subr.bf16.mxu0 0
      %4138 = vmatpush1.bf16.msra.mxu0 0
      %4139 = vmatprep.subr.bf16.mxu0 0
      %4140 = vmatpush1.bf16.msra.mxu0 0
      %4141 = vmatprep.subr.bf16.mxu0 0
      %4142 = vmatpush1.bf16.msra.mxu0 0
      %4143 = vmatprep.subr.bf16.mxu0 0
      %4144 = vmatpush1.bf16.msra.mxu0 0
      %4145 = vmatprep.subr.bf16.mxu0 0
      %4146 = vmatpush1.bf16.msra.mxu0 0
      %4147 = vmatprep.subr.bf16.mxu0 0
      %4148 = vmatpush1.bf16.msra.mxu0 0
      %4149 = vmatprep.subr.bf16.mxu0 0
      %4150 = vmatpush1.bf16.msra.mxu0 0
      %4151 = vmatprep.subr.bf16.mxu0 0
      %4152 = vmatpush1.bf16.msra.mxu0 0
      %4153 = vmatprep.subr.bf16.mxu0 0
      %4154 = vmatpush1.bf16.msra.mxu0 0
      %4155 = vmatprep.subr.bf16.mxu0 0
      %4156 = vmatpush1.bf16.msra.mxu0 0
      %4157 = vmatprep.mubr.bf16.mxu0 0
      %4158 = vmatmul.mubr.bf16.gmra.mrb[0].mxu0 %v4117
      %v4159 = vpop.f32.mrb[0].mxu0
      %v4160 = vadd.f32 0.0, %v4159
      %v4161 = vpop.f32.mrb[0].mxu0
      %v4162 = vpop.f32.mrb[0].mxu0
      %v4163 = vadd.f32 0.0, %v4162
      %v4164 = vpop.f32.mrb[0].mxu0
      %4165 = vmatprep.mubr.bf16.mxu0 0
      %4166 = vmatmul.mubr.bf16.gmra.mrb[0].mxu0 %v4120
      %v4167 = vpop.f32.mrb[0].mxu0
      %v4168 = vadd.f32 0.0, %v4167
      %v4169 = vpop.f32.mrb[0].mxu0
      %v4170 = vpop.f32.mrb[0].mxu0
      %v4171 = vadd.f32 0.0, %v4170
      %v4172 = vpop.f32.mrb[0].mxu0
      %4173 = vmatprep.mubr.bf16.mxu0 0
      %4174 = vmatmul.mubr.bf16.gmra.mrb[0].mxu0 %v4123
      %v4175 = vpop.f32.mrb[0].mxu0
      %v4176 = vadd.f32 0.0, %v4175
      %v4177 = vpop.f32.mrb[0].mxu0
      %v4178 = vpop.f32.mrb[0].mxu0
      %v4179 = vadd.f32 0.0, %v4178
      %v4180 = vpop.f32.mrb[0].mxu0
      %4181 = vdwg.mxu0
      %v4182 = vadd.f32 %v4082, %v4160
      %v4183 = vadd.f32 %v4083, %v4163
      %v4184 = vadd.f32 %v4084, %v4168
      %v4185 = vadd.f32 %v4085, %v4171
      %v4186 = vadd.f32 %v4086, %v4176
      %v4187 = vadd.f32 %v4087, %v4179
      %s4188 = scalar_lea.vmem %s3, 576
      %v4189 = vld [vmem:[%s4188] sm:$0xf]
      %v4190 = vld [vmem:[%s4188 + $0x4] sm:$0xf]
      %v4191 = vld [vmem:[%s4188 + $0x8] sm:$0xf]
      %v4192 = vld [vmem:[%s4188 + $0xc] sm:$0xf]
      %v4193 = vld [vmem:[%s4188 + $0x10] sm:$0xf]
      %v4194 = vld [vmem:[%s4188 + $0x14] sm:$0xf]
      %v4201 = vunpack.c.l.b16 %v4189
      %v4202 = vunpack.c.l.b16 %v4190
      %v4203 = vunpack.c.l.b16 %v4191
      %v4204 = vunpack.c.l.b16 %v4192
      %v4205 = vunpack.c.l.b16 %v4193
      %v4206 = vunpack.c.l.b16 %v4194
      %v4207 = vpack.c.b16 %v4202, %v4201
      %v4208 = vpack.c.b16 %v4204, %v4203
      %v4209 = vpack.c.b16 %v4206, %v4205
      %4212 = vrot.lane.b32.xlu0 %v1740, 32
      %v4213 = vpop.permute.xlu0 %4212
      %4214 = vrot.lane.b32.xlu0 %v1741, 32
      %v4215 = vpop.permute.xlu0 %4214
      %4216 = vrot.lane.b32.xlu0 %v1748, 32
      %v4217 = vpop.permute.xlu0 %4216
      %4218 = vrot.lane.b32.xlu0 %v1749, 32
      %v4219 = vpop.permute.xlu0 %4218
      %vm4220 = vcmask 261120
      %v4221 = vsel %vm4220, %v4213, %v4215
      %v4222 = vsel %vm4220, %v4217, %v4219
      %v4226 = vsel %vm1786, %v4207, 0
      %v4229 = vsel %vm1786, %v4208, 0
      %v4232 = vsel %vm1786, %v4209, 0
      %4234 = vmatprep.subr.bf16.mxu0 0
      %4235 = vmatpush1.bf16.msra.mxu0 %v4221
      %4236 = vmatprep.subr.bf16.mxu0 0
      %4237 = vmatpush1.bf16.msra.mxu0 %v4222
      %4238 = vmatprep.subr.bf16.mxu0 0
      %4239 = vmatpush1.bf16.msra.mxu0 0
      %4240 = vmatprep.subr.bf16.mxu0 0
      %4241 = vmatpush1.bf16.msra.mxu0 0
      %4242 = vmatprep.subr.bf16.mxu0 0
      %4243 = vmatpush1.bf16.msra.mxu0 0
      %4244 = vmatprep.subr.bf16.mxu0 0
      %4245 = vmatpush1.bf16.msra.mxu0 0
      %4246 = vmatprep.subr.bf16.mxu0 0
      %4247 = vmatpush1.bf16.msra.mxu0 0
      %4248 = vmatprep.subr.bf16.mxu0 0
      %4249 = vmatpush1.bf16.msra.mxu0 0
      %4250 = vmatprep.subr.bf16.mxu0 0
      %4251 = vmatpush1.bf16.msra.mxu0 0
      %4252 = vmatprep.subr.bf16.mxu0 0
      %4253 = vmatpush1.bf16.msra.mxu0 0
      %4254 = vmatprep.subr.bf16.mxu0 0
      %4255 = vmatpush1.bf16.msra.mxu0 0
      %4256 = vmatprep.subr.bf16.mxu0 0
      %4257 = vmatpush1.bf16.msra.mxu0 0
      %4258 = vmatprep.subr.bf16.mxu0 0
      %4259 = vmatpush1.bf16.msra.mxu0 0
      %4260 = vmatprep.subr.bf16.mxu0 0
      %4261 = vmatpush1.bf16.msra.mxu0 0
      %4262 = vmatprep.subr.bf16.mxu0 0
      %4263 = vmatpush1.bf16.msra.mxu0 0
      %4264 = vmatprep.subr.bf16.mxu0 0
      %4265 = vmatpush1.bf16.msra.mxu0 0
      %4266 = vmatprep.mubr.bf16.mxu0 0
      %4267 = vmatmul.mubr.bf16.gmra.mrb[0].mxu0 %v4226
      %v4268 = vpop.f32.mrb[0].mxu0
      %v4269 = vadd.f32 0.0, %v4268
      %v4270 = vpop.f32.mrb[0].mxu0
      %v4271 = vpop.f32.mrb[0].mxu0
      %v4272 = vadd.f32 0.0, %v4271
      %v4273 = vpop.f32.mrb[0].mxu0
      %4274 = vmatprep.mubr.bf16.mxu0 0
      %4275 = vmatmul.mubr.bf16.gmra.mrb[0].mxu0 %v4229
      %v4276 = vpop.f32.mrb[0].mxu0
      %v4277 = vadd.f32 0.0, %v4276
      %v4278 = vpop.f32.mrb[0].mxu0
      %v4279 = vpop.f32.mrb[0].mxu0
      %v4280 = vadd.f32 0.0, %v4279
      %v4281 = vpop.f32.mrb[0].mxu0
      %4282 = vmatprep.mubr.bf16.mxu0 0
      %4283 = vmatmul.mubr.bf16.gmra.mrb[0].mxu0 %v4232
      %v4284 = vpop.f32.mrb[0].mxu0
      %v4285 = vadd.f32 0.0, %v4284
      %v4286 = vpop.f32.mrb[0].mxu0
      %v4287 = vpop.f32.mrb[0].mxu0
      %v4288 = vadd.f32 0.0, %v4287
      %v4289 = vpop.f32.mrb[0].mxu0
      %4290 = vdwg.mxu0
      %v4291 = vadd.f32 %v4182, %v4269
      %v4292 = vadd.f32 %v4183, %v4272
      %v4293 = vadd.f32 %v4184, %v4277
      %v4294 = vadd.f32 %v4185, %v4280
      %v4295 = vadd.f32 %v4186, %v4285
      %v4296 = vadd.f32 %v4187, %v4288
      %4303 = vrot.lane.b32.xlu0 %v4291, 119
      %v4304 = vpop.permute.xlu0 %4303
      %4305 = vrot.lane.b32.xlu0 %v4292, 119
      %v4306 = vpop.permute.xlu0 %4305
      %4307 = vrot.lane.b32.xlu0 %v4293, 119
      %v4308 = vpop.permute.xlu0 %4307
      %4309 = vrot.lane.b32.xlu0 %v4294, 119
      %v4310 = vpop.permute.xlu0 %4309
      %4311 = vrot.lane.b32.xlu0 %v4295, 119
      %v4312 = vpop.permute.xlu0 %4311
      %4313 = vrot.lane.b32.xlu0 %v4296, 119
      %v4314 = vpop.permute.xlu0 %4313
      %v4321 = vmax.f32 %v4291, %v4304
      %v4322 = vmax.f32 %v4292, %v4306
      %v4323 = vmax.f32 %v4293, %v4308
      %v4324 = vmax.f32 %v4294, %v4310
      %v4325 = vmax.f32 %v4295, %v4312
      %v4326 = vmax.f32 %v4296, %v4314
      %4333 = vrot.lane.b32.xlu0 %v4321, 110
      %v4334 = vpop.permute.xlu0 %4333
      %4335 = vrot.lane.b32.xlu0 %v4322, 110
      %v4336 = vpop.permute.xlu0 %4335
      %4337 = vrot.lane.b32.xlu0 %v4323, 110
      %v4338 = vpop.permute.xlu0 %4337
      %4339 = vrot.lane.b32.xlu0 %v4324, 110
      %v4340 = vpop.permute.xlu0 %4339
      %4341 = vrot.lane.b32.xlu0 %v4325, 110
      %v4342 = vpop.permute.xlu0 %4341
      %4343 = vrot.lane.b32.xlu0 %v4326, 110
      %v4344 = vpop.permute.xlu0 %4343
      %v4351 = vmax.f32 %v4321, %v4334
      %v4352 = vmax.f32 %v4322, %v4336
      %v4353 = vmax.f32 %v4323, %v4338
      %v4354 = vmax.f32 %v4324, %v4340
      %v4355 = vmax.f32 %v4325, %v4342
      %v4356 = vmax.f32 %v4326, %v4344
      %v4357 = vld [vmem:[%s4] sm:$0xff]
      %v4358 = vld [vmem:[%s4 + $0x8] sm:$0xff]
      %v4359 = vld [vmem:[%s4 + $0x10] sm:$0xff]
      %v4360 = vld [vmem:[%s4 + $0x18] sm:$0xff]
      %v4361 = vld [vmem:[%s4 + $0x20] sm:$0xff]
      %v4362 = vld [vmem:[%s4 + $0x28] sm:$0xff]
      %4364 = vset.pattern.permute.xlu0 0
      %4365 = vperm.xlu0 %4364, %v4357
      %v4366 = vpop.permute.xlu0 %4365
      %4369 = vset.pattern.permute.xlu0 0
      %4370 = vperm.xlu0 %4369, %v4358
      %v4371 = vpop.permute.xlu0 %4370
      %4374 = vset.pattern.permute.xlu0 0
      %4375 = vperm.xlu0 %4374, %v4359
      %v4376 = vpop.permute.xlu0 %4375
      %4379 = vset.pattern.permute.xlu0 0
      %4380 = vperm.xlu0 %4379, %v4360
      %v4381 = vpop.permute.xlu0 %4380
      %4384 = vset.pattern.permute.xlu0 0
      %4385 = vperm.xlu0 %4384, %v4361
      %v4386 = vpop.permute.xlu0 %4385
      %4389 = vset.pattern.permute.xlu0 0
      %4390 = vperm.xlu0 %4389, %v4362
      %v4391 = vpop.permute.xlu0 %4390
      %v4393 = vadd.f32 %v4351, %v4366
      %v4394 = vadd.f32 %v4352, %v4371
      %v4395 = vadd.f32 %v4353, %v4376
      %v4396 = vadd.f32 %v4354, %v4381
      %v4397 = vadd.f32 %v4355, %v4386
      %v4398 = vadd.f32 %v4356, %v4391
      %v4399 = vmax.f32 %v4393, 0.0
      %v4400 = vmax.f32 %v4394, 0.0
      %v4401 = vmax.f32 %v4395, 0.0
      %v4402 = vmax.f32 %v4396, 0.0
      %v4403 = vmax.f32 %v4397, 0.0
      %v4404 = vmax.f32 %v4398, 0.0
      %vm4405 = vcmask 72704
      %4406 = vst.msk [vmem:[%s224] sm:$0xff] %vm4405, %v4399
      %4407 = vst.msk [vmem:[%s224 + $0x8] sm:$0xff] %vm4405, %v4400
      %4408 = vst.msk [vmem:[%s224 + $0x10] sm:$0xff] %vm4405, %v4401
      %4409 = vst.msk [vmem:[%s224 + $0x18] sm:$0xff] %vm4405, %v4402
      %4410 = vst.msk [vmem:[%s224 + $0x20] sm:$0xff] %vm4405, %v4403
      %4411 = vst.msk [vmem:[%s224 + $0x28] sm:$0xff] %vm4405, %v4404
      %p4412 = scmp.lt.s32.totalorder %s16, 1
      %s4413 = scalar_select %p4412, %s16, 1
      %s4414 = smul.addr %s4413, 6
      %s4415 = smul.addr %s4414, 8
      %s4416 = scalar_lea.vmem %s5, %s4415
      // Predicated region
      $region41: #{feature_extract_net.1} parent=39 // pred_check
        %p4417 = pneg %p144
      $region42: #{feature_extract_net.1} parent=39 // pred_check_branch
        %4419 = sbr.rel (%p4417) target = $region44
      $region43: #{feature_extract_net.1} parent=39 // pred_region
        _
      $region44: #{feature_extract_net.1} parent=39 // pred_fallthru
        _
    $region40: #{feature_extract_net.1} parent=5 // pred_fallthru
      _
    %p4420 = scmp.le.s32.totalorder 2, %s11
    // Predicated region
    $region45: #{feature_extract_net.1} parent=5 // pred_check
      %p4421 = pneg %p4420
    $region46: #{feature_extract_net.1} parent=5 // pred_check_branch
      %4423 = sbr.rel (%p4421) target = $region48
    $region47: #{feature_extract_net.1} parent=5 // pred_region
      %s4424 = ssub.s32 %s11, 2
      // Predicated region
      $region49: #{feature_extract_net.1} parent=47 // pred_check
        %p4425 = pneg %p150
      $region50: #{feature_extract_net.1} parent=47 // pred_check_branch
        %4427 = sbr.rel (%p4425) target = $region52
      $region51: #{feature_extract_net.1} parent=47 // pred_region
        %p4428 = scmp.lt.s32.totalorder %s17, 1
        %s4429 = scalar_select %p4428, %s17, 1
        %s4430 = smul.addr %s4429, 6
        %s4431 = smul.addr %s4430, 8
        %s4432 = scalar_lea.vmem %s5, %s4431
      $region52: #{feature_extract_net.1} parent=47 // pred_fallthru
        _
    $region48: #{feature_extract_net.1} parent=5 // pred_fallthru
      _
  $region6: #{feature_extract_net.1} parent=0 // loop_footer
    %s15 = sadd.s32 1, %s11
  $region7: #{feature_extract_net.1} parent=0 // loop_footer_branch
    %10 = sbr.rel target = $region3
  $region8: #{feature_extract_net.1} parent=0 // loop_exit
    _

</llo_original>
